<compile_context>
chip_gen: v6e
topology: v6e:2x2x1
jax: 0.10.0
libtpu: 0.0.40
codegen_flags: <defaults>
</compile_context>

<pallas_src>
import jax
import jax.numpy as jnp
import numpy as np
from jax import lax
from jax.experimental import pallas as pl
from jax.experimental.pallas import tpu as pltpu

H1_PAD = 1024    # fc1 width 1000 -> 1024
H2_PAD = 128     # fc2 width 100  -> 128
OUT_PAD = 128    # fc3 width 1    -> 128
BOX_PAD = 640    # box feature space 600 -> 640 (128-aligned lanes)


def _pick_k_chunks(k_total):
    """Pick 2-4 fc1 K-chunks whose size is a multiple of 128 (lane-aligned)."""
    for n in (4, 3, 2):
        if k_total % n == 0 and (k_total // n) % 128 == 0:
            return n, k_total // n
    return 1, k_total


# ----------------------------------------------------------------------------
# Fused fc-stack kernel: fc1 (K-streamed) -> relu -> fc2 -> relu -> fc3.
#   inp_ref : [B, KC]      bf16   K-chunk of the [conv-flat | box | pad] input
#   w1_ref  : [KC, 1024]   bf16   matching fc1 weight chunk (streamed from HBM)
#   b1_ref  : [1, 1024]    f32    fc1 bias with the conv bias folded in
#   w2_ref  : [1024, 128]  bf16 ; b2_ref [1, 128] f32
#   w3_ref  : [128, 128]   bf16 ; b3_ref [1, 128] f32
#   out_ref : [B, 128]     f32    (column 0 is the real output)
#   acc_ref : [B, 1024]    f32    fc1 accumulator scratch
# ----------------------------------------------------------------------------
def mlp_kernel(inp_ref, w1_ref, b1_ref, w2_ref, b2_ref, w3_ref, b3_ref,
               out_ref, acc_ref):
    k = pl.program_id(0)

    @pl.when(k == 0)
    def _init():
        acc_ref[...] = jnp.zeros_like(acc_ref)

    # fc1 partial product for this K-chunk; f32 accumulation on the MXU.
    acc_ref[...] += jnp.dot(inp_ref[...], w1_ref[...],
                            preferred_element_type=jnp.float32)

    @pl.when(k == pl.num_programs(0) - 1)
    def _finalize():
        h1 = jnp.maximum(acc_ref[...] + b1_ref[...], 0.0)
        h2 = jnp.dot(h1.astype(jnp.bfloat16), w2_ref[...],
                     preferred_element_type=jnp.float32)
        h2 = jnp.maximum(h2 + b2_ref[...], 0.0)
        out_ref[...] = jnp.dot(h2.astype(jnp.bfloat16), w3_ref[...],
                               preferred_element_type=jnp.float32) + b3_ref[...]


@jax.jit
def featurespace_classifier_forward(cnn_out_nchw, box_fs, params):
    B = cnn_out_nchw.shape[0]

    # Conv head (bias folded into b1).  0.3 MFLOP / 8 KB of output -> executed
    # by XLA in the same input-prep fusion that previously built the im2col
    # patches; the NCHW flatten is layout plumbing done where it is free.
    conv = lax.conv_general_dilated(
        cnn_out_nchw, params["conv_w"], window_strides=(1, 1), padding="SAME",
        dimension_numbers=("NCHW", "OIHW", "NCHW"))
    flat = conv.reshape(B, -1)                          # torch.flatten, NCHW order

    box_p = jnp.pad(box_fs, ((0, 0), (0, BOX_PAD - box_fs.shape[1])))
    inp = jnp.concatenate([flat, box_p], axis=1).astype(jnp.bfloat16)  # [B, 2688]

    nk, kc = _pick_k_chunks(inp.shape[1])

    out_pad = pl.pallas_call(
        mlp_kernel,
        out_shape=jax.ShapeDtypeStruct((B, OUT_PAD), jnp.float32),
        grid_spec=pltpu.PrefetchScalarGridSpec(
            num_scalar_prefetch=0,
            grid=(nk,),
            in_specs=[
                pl.BlockSpec((B, kc), lambda k: (0, k)),         # inp K-chunk
                pl.BlockSpec((kc, H1_PAD), lambda k: (k, 0)),    # w1 chunk (streamed)
                pl.BlockSpec((1, H1_PAD), lambda k: (0, 0)),     # b1 (resident)
                pl.BlockSpec((H1_PAD, H2_PAD), lambda k: (0, 0)),
                pl.BlockSpec((1, H2_PAD), lambda k: (0, 0)),
                pl.BlockSpec((H2_PAD, OUT_PAD), lambda k: (0, 0)),
                pl.BlockSpec((1, OUT_PAD), lambda k: (0, 0)),
            ],
            out_specs=pl.BlockSpec((B, OUT_PAD), lambda k: (0, 0)),
            scratch_shapes=[pltpu.VMEM((B, H1_PAD), jnp.float32)],
        ),
        compiler_params=pltpu.CompilerParams(
            dimension_semantics=("arbitrary",),        # K axis is a reduction
            vmem_limit_bytes=32 * 1024 * 1024),
    )(inp, params["w1"], params["b1"], params["w2"], params["b2"],
      params["w3"], params["b3"])

    return out_pad[:, :1]                               # [B, 1]


# ----------------------------------------------------------------------------
# Parameters in PyTorch layout (deterministic uniform(-1/sqrt(fan_in)) init)
# and one-time preprocessing into kernel layout (fold / transpose / pad / bf16).
# ----------------------------------------------------------------------------
def init_torch_params(key, C, O, H, W, box_fs_size):
    first_fc = H * W * O + box_fs_size
    ks = jax.random.split(key, 8)

    def u(k, shape, fan_in):
        bound = 1.0 / float(np.sqrt(fan_in))
        return jax.random.uniform(k, shape, jnp.float32, -bound, bound)

    return {
        "conv_w": u(ks[0], (O, C, 3, 3), C * 9),      # OIHW, like nn.Conv2d
        "conv_b": u(ks[1], (O,), C * 9),
        "fc1_w": u(ks[2], (1000, first_fc), first_fc),
        "fc1_b": u(ks[3], (1000,), first_fc),
        "fc2_w": u(ks[4], (100, 1000), 1000),
        "fc2_b": u(ks[5], (100,), 1000),
        "fc3_w": u(ks[6], (1, 100), 100),
        "fc3_b": u(ks[7], (1,), 100),
    }


def prepare_params(pt, H, W):
    """One-time weight preprocessing into kernel layout (off the hot path)."""
    O = pt["conv_w"].shape[0]
    n_cnn = O * H * W
    n_box = pt["fc1_w"].shape[1] - n_cnn

    # fc1 weight transposed to [first_fc, 1000]; rows 0..n_cnn-1 are already in
    # PyTorch NCHW flatten order (o, h, w) and rows n_cnn.. are the box rows --
    # exactly the order of the wrapper's concatenated kernel input.
    w1t = pt["fc1_w"].T.astype(jnp.bfloat16)

    # Fold the conv bias into the fc1 bias (no nonlinearity in between):
    #   b1_eff[j] = b1[j] + sum_{o,h,w} conv_b[o] * W1[(o,h,w), j]
    w1c3 = w1t[:n_cnn].astype(jnp.float32).reshape(O, H * W, 1000)
    b1_eff = pt["fc1_b"] + jnp.einsum("o,opf->f", pt["conv_b"], w1c3)

    # Pad rows 600->640 (box lane pad) and columns 1000->1024 with zeros.
    w1 = jnp.pad(w1t, ((0, BOX_PAD - n_box), (0, H1_PAD - 1000)))
    b1 = jnp.pad(b1_eff, (0, H1_PAD - 1000)).reshape(1, H1_PAD)

    w2 = jnp.pad(pt["fc2_w"].T,
                 ((0, H1_PAD - 1000), (0, H2_PAD - 100))).astype(jnp.bfloat16)
    b2 = jnp.pad(pt["fc2_b"], (0, H2_PAD - 100)).reshape(1, H2_PAD)
    w3 = jnp.pad(pt["fc3_w"].T,
                 ((0, H2_PAD - 100), (0, OUT_PAD - 1))).astype(jnp.bfloat16)
    b3 = jnp.pad(pt["fc3_b"], (0, OUT_PAD - 1)).reshape(1, OUT_PAD)

    return {"conv_w": pt["conv_w"], "w1": w1, "b1": b1,
            "w2": w2, "b2": b2, "w3": w3, "b3": b3}


# Pure-JAX reference of the module math.  Weights AND matmul inputs are rounded
# through bf16 to mirror the kernel's storage/compute dtypes (f32 accumulation),
# per the review's correctness note.
def reference_forward(x_nchw, box, pt):
    rbf = lambda a: a.astype(jnp.bfloat16).astype(jnp.float32)
    conv = lax.conv_general_dilated(
        x_nchw, pt["conv_w"], window_strides=(1, 1), padding="SAME",
        dimension_numbers=("NCHW", "OIHW", "NCHW"))
    conv = conv + pt["conv_b"][None, :, None, None]
    cnn_fs = conv.reshape(x_nchw.shape[0], -1)           # torch.flatten(start_dim=1)
    inp = jnp.concatenate([cnn_fs, box], axis=1)         # torch.cat(..., axis=1)
    h1 = jnp.maximum(rbf(inp) @ rbf(pt["fc1_w"]).T + pt["fc1_b"], 0.0)
    h2 = jnp.maximum(rbf(h1) @ rbf(pt["fc2_w"]).T + pt["fc2_b"], 0.0)
    return rbf(h2) @ rbf(pt["fc3_w"]).T + pt["fc3_b"]


if __name__ == "__main__":
    # Module-consistent small shapes: out_channel=32, box_featurespace_size=600,
    # backbone feature map 8x8 with 8 channels, batch=2  ->  first_fc_size=2648.
    B, C_LAST, H, W = 2, 8, 8, 8
    OUT_CHANNEL = 32
    BOX_FS = 600

    key = jax.random.PRNGKey(0)
    k_x, k_box, k_p = jax.random.split(key, 3)

    cnn_out = jax.random.normal(k_x, (B, C_LAST, H, W), jnp.float32)   # NCHW
    box_fs = jax.random.normal(k_box, (B, BOX_FS), jnp.float32)
    pt_params = init_torch_params(k_p, C_LAST, OUT_CHANNEL, H, W, BOX_FS)
    params = prepare_params(pt_params, H, W)

    out = featurespace_classifier_forward(cnn_out, box_fs, params)
    out = jax.block_until_ready(out)
    assert out.shape == (B, 1), out.shape

    ref = np.asarray(reference_forward(cnn_out, box_fs, pt_params))
    err = float(np.max(np.abs(np.asarray(out) - ref)))
    assert np.allclose(np.asarray(out), ref, rtol=2e-2, atol=2e-2), ("max abs diff", err)
    print("KERNEL_OK")
</pallas_src>

<mosaic_0001>
module attributes {stable_mosaic.version = 11 : i64} {
  func.func @mlp_kernel(%arg0: i32, %arg1: memref<2x896xbf16, #tpu.memory_space<vmem>>, %arg2: memref<896x1024xbf16, #tpu.memory_space<vmem>>, %arg3: memref<1x1024xf32, #tpu.memory_space<vmem>>, %arg4: memref<1024x128xbf16, #tpu.memory_space<vmem>>, %arg5: memref<1x128xf32, #tpu.memory_space<vmem>>, %arg6: memref<128x128xbf16, #tpu.memory_space<vmem>>, %arg7: memref<1x128xf32, #tpu.memory_space<vmem>>, %arg8: memref<2x128xf32, #tpu.memory_space<vmem>>, %arg9: memref<2x1024xf32, #tpu.memory_space<vmem>>) attributes {dimension_semantics = [#tpu.dimension_semantics<arbitrary>], iteration_bounds = array<i64: 3>, scalar_prefetch = 0 : i64, scratch_operands = 1 : i64, tpu.core_type = #tpu.core_type<tc>, window_params = [{transform_indices = @transform_0, window_bounds = array<i64: 2, 896>}, {transform_indices = @transform_1, window_bounds = array<i64: 896, 1024>}, {pipeline_mode = #tpu.pipeline_mode<synchronous>, transform_indices = @transform_2, window_bounds = array<i64: 1, 1024>}, {pipeline_mode = #tpu.pipeline_mode<synchronous>, transform_indices = @transform_3, window_bounds = array<i64: 1024, 128>}, {pipeline_mode = #tpu.pipeline_mode<synchronous>, transform_indices = @transform_4, window_bounds = array<i64: 1, 128>}, {pipeline_mode = #tpu.pipeline_mode<synchronous>, transform_indices = @transform_5, window_bounds = array<i64: 128, 128>}, {pipeline_mode = #tpu.pipeline_mode<synchronous>, transform_indices = @transform_6, window_bounds = array<i64: 1, 128>}, {pipeline_mode = #tpu.pipeline_mode<synchronous>, transform_indices = @transform_7, window_bounds = array<i64: 2, 128>}]} {
    %c0_i32 = arith.constant 0 : i32
    %0 = arith.cmpi eq, %arg0, %c0_i32 : i32
    %1 = arith.extui %0 : i1 to i32
    %c0_i32_0 = arith.constant 0 : i32
    %2 = arith.cmpi ne, %1, %c0_i32_0 : i32
    scf.if %2 {
      %cst_9 = arith.constant 0.000000e+00 : f32
      %12 = vector.broadcast %cst_9 : f32 to vector<2x1024xf32>
      %c0_10 = arith.constant 0 : index
      %c0_11 = arith.constant 0 : index
      %13 = vector.load %arg9[%c0_10, %c0_11] : memref<2x1024xf32, #tpu.memory_space<vmem>>, vector<2x1024xf32>
      tpu.vector_store %arg9[%c0_10, %c0_11], %12 {strides = array<i32>} : memref<2x1024xf32, #tpu.memory_space<vmem>>, vector<2x1024xf32>,
    } else {
    }
    %c0 = arith.constant 0 : index
    %c0_1 = arith.constant 0 : index
    %3 = vector.load %arg9[%c0, %c0_1] : memref<2x1024xf32, #tpu.memory_space<vmem>>, vector<2x1024xf32>
    %c0_2 = arith.constant 0 : index
    %c0_3 = arith.constant 0 : index
    %4 = vector.load %arg1[%c0_2, %c0_3] : memref<2x896xbf16, #tpu.memory_space<vmem>>, vector<2x896xbf16>
    %c0_4 = arith.constant 0 : index
    %c0_5 = arith.constant 0 : index
    %5 = vector.load %arg2[%c0_4, %c0_5] : memref<896x1024xbf16, #tpu.memory_space<vmem>>, vector<896x1024xbf16>
    %cst = arith.constant dense<0.000000e+00> : vector<2x1024xf32>
    %6 = tpu.matmul %4, %5, %cst {dimension_numbers = #tpu.dot_dimension_numbers<[1], [0], [0], [1], [0, 0, 1, 1], [], []>} : vector<2x896xbf16>, vector<896x1024xbf16>, vector<2x1024xf32> -> vector<2x1024xf32>
    %7 = arith.addf %3, %6 : vector<2x1024xf32>
    %c0_6 = arith.constant 0 : index
    %c0_7 = arith.constant 0 : index
    %8 = vector.load %arg9[%c0_6, %c0_7] : memref<2x1024xf32, #tpu.memory_space<vmem>>, vector<2x1024xf32>
    tpu.vector_store %arg9[%c0_6, %c0_7], %7 {strides = array<i32>} : memref<2x1024xf32, #tpu.memory_space<vmem>>, vector<2x1024xf32>,
    %c2_i32 = arith.constant 2 : i32
    %9 = arith.cmpi eq, %arg0, %c2_i32 : i32
    %10 = arith.extui %9 : i1 to i32
    %c0_i32_8 = arith.constant 0 : i32
    %11 = arith.cmpi ne, %10, %c0_i32_8 : i32
    scf.if %11 {
      %c0_9 = arith.constant 0 : index
      %c0_10 = arith.constant 0 : index
      %12 = vector.load %arg9[%c0_9, %c0_10] : memref<2x1024xf32, #tpu.memory_space<vmem>>, vector<2x1024xf32>
      %c0_11 = arith.constant 0 : index
      %c0_12 = arith.constant 0 : index
      %13 = vector.load %arg3[%c0_11, %c0_12] : memref<1x1024xf32, #tpu.memory_space<vmem>>, vector<1x1024xf32>
      %14 = vector.broadcast %13 : vector<1x1024xf32> to vector<2x1024xf32>
      %15 = arith.addf %12, %14 : vector<2x1024xf32>
      %cst_13 = arith.constant 0.000000e+00 : f32
      %16 = vector.broadcast %cst_13 : f32 to vector<2x1024xf32>
      %17 = arith.maximumf %15, %16 : vector<2x1024xf32>
      %18 = arith.truncf %17 : vector<2x1024xf32> to vector<2x1024xbf16>
      %c0_14 = arith.constant 0 : index
      %c0_15 = arith.constant 0 : index
      %19 = vector.load %arg4[%c0_14, %c0_15] : memref<1024x128xbf16, #tpu.memory_space<vmem>>, vector<1024x128xbf16>
      %cst_16 = arith.constant dense<0.000000e+00> : vector<2x128xf32>
      %20 = tpu.matmul %18, %19, %cst_16 {dimension_numbers = #tpu.dot_dimension_numbers<[1], [0], [0], [1], [0, 0, 1, 1], [], []>} : vector<2x1024xbf16>, vector<1024x128xbf16>, vector<2x128xf32> -> vector<2x128xf32>
      %c0_17 = arith.constant 0 : index
      %c0_18 = arith.constant 0 : index
      %21 = vector.load %arg5[%c0_17, %c0_18] : memref<1x128xf32, #tpu.memory_space<vmem>>, vector<1x128xf32>
      %22 = vector.broadcast %21 : vector<1x128xf32> to vector<2x128xf32>
      %23 = arith.addf %20, %22 : vector<2x128xf32>
      %cst_19 = arith.constant 0.000000e+00 : f32
      %24 = vector.broadcast %cst_19 : f32 to vector<2x128xf32>
      %25 = arith.maximumf %23, %24 : vector<2x128xf32>
      %26 = arith.truncf %25 : vector<2x128xf32> to vector<2x128xbf16>
      %c0_20 = arith.constant 0 : index
      %c0_21 = arith.constant 0 : index
      %27 = vector.load %arg6[%c0_20, %c0_21] : memref<128x128xbf16, #tpu.memory_space<vmem>>, vector<128x128xbf16>
      %cst_22 = arith.constant dense<0.000000e+00> : vector<2x128xf32>
      %28 = tpu.matmul %26, %27, %cst_22 {dimension_numbers = #tpu.dot_dimension_numbers<[1], [0], [0], [1], [0, 0, 1, 1], [], []>} : vector<2x128xbf16>, vector<128x128xbf16>, vector<2x128xf32> -> vector<2x128xf32>
      %c0_23 = arith.constant 0 : index
      %c0_24 = arith.constant 0 : index
      %29 = vector.load %arg7[%c0_23, %c0_24] : memref<1x128xf32, #tpu.memory_space<vmem>>, vector<1x128xf32>
      %30 = vector.broadcast %29 : vector<1x128xf32> to vector<2x128xf32>
      %31 = arith.addf %28, %30 : vector<2x128xf32>
      %c0_25 = arith.constant 0 : index
      %c0_26 = arith.constant 0 : index
      %32 = vector.load %arg8[%c0_25, %c0_26] : memref<2x128xf32, #tpu.memory_space<vmem>>, vector<2x128xf32>
      tpu.vector_store %arg8[%c0_25, %c0_26], %31 {strides = array<i32>} : memref<2x128xf32, #tpu.memory_space<vmem>>, vector<2x128xf32>,
    } else {
    }
    return
  }
  func.func @transform_0(%arg0: i32) -> (i32, i32) {
    %c0_i32 = arith.constant 0 : i32
    %c0_i32_0 = arith.constant 0 : i32
    return %c0_i32, %arg0 : i32, i32
  }
  func.func @transform_1(%arg0: i32) -> (i32, i32) {
    %c0_i32 = arith.constant 0 : i32
    %c0_i32_0 = arith.constant 0 : i32
    return %arg0, %c0_i32 : i32, i32
  }
  func.func @transform_2(%arg0: i32) -> (i32, i32) {
    %c0_i32 = arith.constant 0 : i32
    %c0_i32_0 = arith.constant 0 : i32
    %c0_i32_1 = arith.constant 0 : i32
    return %c0_i32, %c0_i32_0 : i32, i32
  }
  func.func @transform_3(%arg0: i32) -> (i32, i32) {
    %c0_i32 = arith.constant 0 : i32
    %c0_i32_0 = arith.constant 0 : i32
    %c0_i32_1 = arith.constant 0 : i32
    return %c0_i32, %c0_i32_0 : i32, i32
  }
  func.func @transform_4(%arg0: i32) -> (i32, i32) {
    %c0_i32 = arith.constant 0 : i32
    %c0_i32_0 = arith.constant 0 : i32
    %c0_i32_1 = arith.constant 0 : i32
    return %c0_i32, %c0_i32_0 : i32, i32
  }
  func.func @transform_5(%arg0: i32) -> (i32, i32) {
    %c0_i32 = arith.constant 0 : i32
    %c0_i32_0 = arith.constant 0 : i32
    %c0_i32_1 = arith.constant 0 : i32
    return %c0_i32, %c0_i32_0 : i32, i32
  }
  func.func @transform_6(%arg0: i32) -> (i32, i32) {
    %c0_i32 = arith.constant 0 : i32
    %c0_i32_0 = arith.constant 0 : i32
    %c0_i32_1 = arith.constant 0 : i32
    return %c0_i32, %c0_i32_0 : i32, i32
  }
  func.func @transform_7(%arg0: i32) -> (i32, i32) {
    %c0_i32 = arith.constant 0 : i32
    %c0_i32_0 = arith.constant 0 : i32
    %c0_i32_1 = arith.constant 0 : i32
    return %c0_i32, %c0_i32_0 : i32, i32
  }
}

</mosaic_0001>

<llo_original>
// kernel: featurespace_classifier_forward.1
$region0: #{featurespace_classifier_forward.1}
  #allocation0 [shape = 'u32[]', space=smem, size = 0x4, offset = 0x4, fixed_abs, tag = 'smem constant byte address 0x4 - core index']
  #allocation1 [shape = 'u32[144,128]{1,0:T(1,128)}', space=vmem, size = 0x12000, scoped, tag = 'internal scratch']
  #allocation2 [shape = 'f32[2,1024]{1,0:T(2,128)}', space=vmem, size = 0x2000, scoped, tag = 'scratch operand']
  %s0 = inlined_call_operand.vmem [shape: bf16[2,2688], index: 0, kind: input, shape index: {}]
  %s1 = inlined_call_operand.hbm [shape: bf16[2688,1024], index: 1, kind: input, shape index: {}]
  %s2 = inlined_call_operand.hbm [shape: f32[1,1024], index: 2, kind: input, shape index: {}]
  %s3 = inlined_call_operand.hbm [shape: bf16[1024,128], index: 3, kind: input, shape index: {}]
  %s4 = inlined_call_operand.hbm [shape: f32[1,128], index: 4, kind: input, shape index: {}]
  %s5 = inlined_call_operand.hbm [shape: bf16[128,128], index: 5, kind: input, shape index: {}]
  %s6 = inlined_call_operand.hbm [shape: f32[1,128], index: 6, kind: input, shape index: {}]
  %s7 = inlined_call_operand.vmem [shape: f32[2,128], index: 7, kind: output, shape index: {}]
  %s8 = sld [smem:[#allocation0]]
  $region93: #{featurespace_classifier_forward.1} parent=0
    _
  %s10 = ssub.s32 1, %s8
  %s11 = scalar_select 0, %s10, %s8
  $region1: #{featurespace_classifier_forward.1} parent=0
    #allocation3 [shape = 'u8[3670016]{0}', space=vmem, size = 0x380000, scoped, tag = 'input window, operand 1']
    #allocation4 [shape = 's32[2]{0}', space=sflag, size = 0x8, scoped, tag = 'scoped memory for featurespace_classifier_forward.1']
    #allocation5 [shape = 'u8[4096]{0}', space=vmem, size = 0x1000, scoped, tag = 'input window, operand 2, single buffered']
    #allocation6 [shape = 's32[1]{0}', space=sflag, size = 0x4, scoped, tag = 'scoped memory for featurespace_classifier_forward.1']
    #allocation7 [shape = 'u8[262144]{0}', space=vmem, size = 0x40000, scoped, tag = 'input window, operand 3, single buffered']
    #allocation8 [shape = 'u8[512]{0}', space=vmem, size = 0x400, scoped, tag = 'input window, operand 4, single buffered']
    #allocation9 [shape = 's32[1]{0}', space=sflag, size = 0x4, scoped, tag = 'scoped memory for featurespace_classifier_forward.1']
    #allocation10 [shape = 'u8[32768]{0}', space=vmem, size = 0x8000, scoped, tag = 'input window, operand 5, single buffered']
    #allocation11 [shape = 'u8[512]{0}', space=vmem, size = 0x400, scoped, tag = 'input window, operand 6, single buffered']
    #allocation12 [shape = 's32[1]{0}', space=sflag, size = 0x4, scoped, tag = 'scoped memory for featurespace_classifier_forward.1']
    %12 = vsyncpa [#allocation4], 0
    %s13 = scalar_lea.sflag [#allocation4], 1
    %14 = vsyncpa %s13, 0
    %15 = vsyncpa [#allocation6], 0
    %16 = vsyncpa [#allocation9], 0
    %17 = vsyncpa [#allocation12], 0
    loop: start=0, step=1, limit=5
    $region2: #{featurespace_classifier_forward.1} parent=1 // loop_pre_header
      _
    $region3: #{featurespace_classifier_forward.1} parent=1 // loop_header
      %s19 = sphi 0, %s23
      %p20 = scmp.ge.s32.totalorder %s19, 5
      %s29 = sphi 0, %s31
      %s32 = sphi 0, %s29
      %s33 = sphi 0, %s32
      %s49 = sphi 0, %s33
      %s55 = sphi 0, %s57
      %s58 = sphi 0, %s55
      %s59 = sphi 0, %s58
      %s75 = sphi 0, %s59
      %s79 = sphi 0, %s79
      %s81 = sphi 0, %s79
      %s82 = sphi 0, %s81
      %s96 = sphi 0, %s82
      %s100 = sphi 0, %s100
      %s102 = sphi 0, %s100
      %s103 = sphi 0, %s102
      %s117 = sphi 0, %s103
      %s121 = sphi 0, %s121
      %s123 = sphi 0, %s121
      %s124 = sphi 0, %s123
      %s138 = sphi 0, %s124
      %s142 = sphi 0, %s142
      %s144 = sphi 0, %s142
      %s145 = sphi 0, %s144
      %s159 = sphi 0, %s145
      %s163 = sphi 0, %s163
      %s165 = sphi 0, %s163
      %s166 = sphi 0, %s165
      %s180 = sphi 0, %s166
      %s184 = sphi 0, %s184
      %s186 = sphi 0, %s184
      %s187 = sphi 0, %s186
      %s201 = sphi 0, %s187
    $region4: #{featurespace_classifier_forward.1} parent=1 // loop_header_branch
      %22 = sbr.rel (%p20) target = $region8
    $region5: #{featurespace_classifier_forward.1} parent=1 // loop_body
      %s24 = ssub.s32 %s19, 1
      %s25 = ssub.s32 %s19, 2
      %s26 = sadd.s32 %s19, 1
      %s27 = ssub.s32 %s19, %s26
      %p28 = scmp.eq.s32.totalorder %s27, 0
      %s30 = sadd.s32 %s29, 1
      %s31 = scalar_select %p28, %s29, %s30
      %p34 = pneg %p28
      %p35 = scmp.eq.s32.totalorder %s19, 2
      %p36 = por %p34, %p35
      %p37 = scmp.ne.s32.totalorder %s29, %s32
      %p38 = scmp.eq.s32.totalorder %s19, 0
      %p39 = por %p37, %p38
      %p40 = scmp.ne.s32.totalorder %s29, %s32
      %p41 = scmp.eq.s32.totalorder %s24, 2
      %p42 = por %p40, %p41
      %p43 = scmp.ne.s32.totalorder %s32, %s33
      %p44 = scmp.eq.s32.totalorder %s24, 0
      %p45 = por %p43, %p44
      %p46 = scmp.ne.s32.totalorder %s32, %s33
      %p47 = scmp.eq.s32.totalorder %s25, 2
      %p48 = por %p46, %p47
      %p50 = scmp.ne.s32.totalorder %s33, %s49
      %p51 = scmp.eq.s32.totalorder %s25, 0
      %p52 = por %p50, %p51
      %s53 = ssub.s32 %s19, %s26
      %p54 = scmp.eq.s32.totalorder %s53, 0
      %s56 = sadd.s32 %s55, 1
      %s57 = scalar_select %p54, %s55, %s56
      %p60 = pneg %p54
      %p61 = scmp.eq.s32.totalorder %s19, 2
      %p62 = por %p60, %p61
      %p63 = scmp.ne.s32.totalorder %s55, %s58
      %p64 = scmp.eq.s32.totalorder %s19, 0
      %p65 = por %p63, %p64
      %p66 = scmp.ne.s32.totalorder %s55, %s58
      %p67 = scmp.eq.s32.totalorder %s24, 2
      %p68 = por %p66, %p67
      %p69 = scmp.ne.s32.totalorder %s58, %s59
      %p70 = scmp.eq.s32.totalorder %s24, 0
      %p71 = por %p69, %p70
      %p72 = scmp.ne.s32.totalorder %s58, %s59
      %p73 = scmp.eq.s32.totalorder %s25, 2
      %p74 = por %p72, %p73
      %p76 = scmp.ne.s32.totalorder %s59, %s75
      %p77 = scmp.eq.s32.totalorder %s25, 0
      %p78 = por %p76, %p77
      %s80 = sadd.s32 %s79, 1
      %p83 = scmp.eq.s32.totalorder %s19, 2
      %p84 = scmp.ne.s32.totalorder %s79, %s81
      %p85 = scmp.eq.s32.totalorder %s19, 0
      %p86 = por %p84, %p85
      %p87 = scmp.ne.s32.totalorder %s79, %s81
      %p88 = scmp.eq.s32.totalorder %s24, 2
      %p89 = por %p87, %p88
      %p90 = scmp.ne.s32.totalorder %s81, %s82
      %p91 = scmp.eq.s32.totalorder %s24, 0
      %p92 = por %p90, %p91
      %p93 = scmp.ne.s32.totalorder %s81, %s82
      %p94 = scmp.eq.s32.totalorder %s25, 2
      %p95 = por %p93, %p94
      %p97 = scmp.ne.s32.totalorder %s82, %s96
      %p98 = scmp.eq.s32.totalorder %s25, 0
      %p99 = por %p97, %p98
      %s101 = sadd.s32 %s100, 1
      %p104 = scmp.eq.s32.totalorder %s19, 2
      %p105 = scmp.ne.s32.totalorder %s100, %s102
      %p106 = scmp.eq.s32.totalorder %s19, 0
      %p107 = por %p105, %p106
      %p108 = scmp.ne.s32.totalorder %s100, %s102
      %p109 = scmp.eq.s32.totalorder %s24, 2
      %p110 = por %p108, %p109
      %p111 = scmp.ne.s32.totalorder %s102, %s103
      %p112 = scmp.eq.s32.totalorder %s24, 0
      %p113 = por %p111, %p112
      %p114 = scmp.ne.s32.totalorder %s102, %s103
      %p115 = scmp.eq.s32.totalorder %s25, 2
      %p116 = por %p114, %p115
      %p118 = scmp.ne.s32.totalorder %s103, %s117
      %p119 = scmp.eq.s32.totalorder %s25, 0
      %p120 = por %p118, %p119
      %s122 = sadd.s32 %s121, 1
      %p125 = scmp.eq.s32.totalorder %s19, 2
      %p126 = scmp.ne.s32.totalorder %s121, %s123
      %p127 = scmp.eq.s32.totalorder %s19, 0
      %p128 = por %p126, %p127
      %p129 = scmp.ne.s32.totalorder %s121, %s123
      %p130 = scmp.eq.s32.totalorder %s24, 2
      %p131 = por %p129, %p130
      %p132 = scmp.ne.s32.totalorder %s123, %s124
      %p133 = scmp.eq.s32.totalorder %s24, 0
      %p134 = por %p132, %p133
      %p135 = scmp.ne.s32.totalorder %s123, %s124
      %p136 = scmp.eq.s32.totalorder %s25, 2
      %p137 = por %p135, %p136
      %p139 = scmp.ne.s32.totalorder %s124, %s138
      %p140 = scmp.eq.s32.totalorder %s25, 0
      %p141 = por %p139, %p140
      %s143 = sadd.s32 %s142, 1
      %p146 = scmp.eq.s32.totalorder %s19, 2
      %p147 = scmp.ne.s32.totalorder %s142, %s144
      %p148 = scmp.eq.s32.totalorder %s19, 0
      %p149 = por %p147, %p148
      %p150 = scmp.ne.s32.totalorder %s142, %s144
      %p151 = scmp.eq.s32.totalorder %s24, 2
      %p152 = por %p150, %p151
      %p153 = scmp.ne.s32.totalorder %s144, %s145
      %p154 = scmp.eq.s32.totalorder %s24, 0
      %p155 = por %p153, %p154
      %p156 = scmp.ne.s32.totalorder %s144, %s145
      %p157 = scmp.eq.s32.totalorder %s25, 2
      %p158 = por %p156, %p157
      %p160 = scmp.ne.s32.totalorder %s145, %s159
      %p161 = scmp.eq.s32.totalorder %s25, 0
      %p162 = por %p160, %p161
      %s164 = sadd.s32 %s163, 1
      %p167 = scmp.eq.s32.totalorder %s19, 2
      %p168 = scmp.ne.s32.totalorder %s163, %s165
      %p169 = scmp.eq.s32.totalorder %s19, 0
      %p170 = por %p168, %p169
      %p171 = scmp.ne.s32.totalorder %s163, %s165
      %p172 = scmp.eq.s32.totalorder %s24, 2
      %p173 = por %p171, %p172
      %p174 = scmp.ne.s32.totalorder %s165, %s166
      %p175 = scmp.eq.s32.totalorder %s24, 0
      %p176 = por %p174, %p175
      %p177 = scmp.ne.s32.totalorder %s165, %s166
      %p178 = scmp.eq.s32.totalorder %s25, 2
      %p179 = por %p177, %p178
      %p181 = scmp.ne.s32.totalorder %s166, %s180
      %p182 = scmp.eq.s32.totalorder %s25, 0
      %p183 = por %p181, %p182
      %s185 = sadd.s32 %s184, 1
      %p188 = scmp.eq.s32.totalorder %s19, 2
      %p189 = scmp.ne.s32.totalorder %s184, %s186
      %p190 = scmp.eq.s32.totalorder %s19, 0
      %p191 = por %p189, %p190
      %p192 = scmp.ne.s32.totalorder %s184, %s186
      %p193 = scmp.eq.s32.totalorder %s24, 2
      %p194 = por %p192, %p193
      %p195 = scmp.ne.s32.totalorder %s186, %s187
      %p196 = scmp.eq.s32.totalorder %s24, 0
      %p197 = por %p195, %p196
      %p198 = scmp.ne.s32.totalorder %s186, %s187
      %p199 = scmp.eq.s32.totalorder %s25, 2
      %p200 = por %p198, %p199
      %p202 = scmp.ne.s32.totalorder %s187, %s201
      %p203 = scmp.eq.s32.totalorder %s25, 0
      %p204 = por %p202, %p203
      %p205 = scmp.le.s32.totalorder 1, %s19
      %p206 = scmp.lt.s32.totalorder %s19, 4
      %p207 = pnand %p205, %p206
      %p208 = pneg %p207
      // Predicated region
      $region9: #{featurespace_classifier_forward.1} parent=5 // pred_check
        _
      $region10: #{featurespace_classifier_forward.1} parent=5 // pred_check_branch
        %210 = sbr.rel (%p207) target = $region12
      $region11: #{featurespace_classifier_forward.1} parent=5 // pred_region
        %s211 = ssub.s32 %s19, 1
        // Predicated region
        $region13: #{featurespace_classifier_forward.1} parent=11 // pred_check
          %p212 = pneg %p92
        $region14: #{featurespace_classifier_forward.1} parent=11 // pred_check_branch
          %214 = sbr.rel (%p212) target = $region16
        $region15: #{featurespace_classifier_forward.1} parent=11 // pred_region
          %s216 = ssub.s32 128, 128
          %217 = vsyncadd [#allocation6], %s216
          %s219 = sshll.u32 [#allocation5], 4
          %s220 = int_to_ptr.vmem [resolvable:$true] %s219
          %222 = dma.hbm_to_vmem [thread:$0]  %s2, 128, %s220, [#allocation6]
        $region16: #{featurespace_classifier_forward.1} parent=11 // pred_fallthru
          _
        // Predicated region
        $region17: #{featurespace_classifier_forward.1} parent=11 // pred_check
          %p223 = pneg %p113
        $region18: #{featurespace_classifier_forward.1} parent=11 // pred_check_branch
          %225 = sbr.rel (%p223) target = $region20
        $region19: #{featurespace_classifier_forward.1} parent=11 // pred_region
          %s227 = ssub.s32 8192, 8192
          %228 = vsyncadd [#allocation6], %s227
          %s229 = sshll.u32 [#allocation7], 4
          %s230 = int_to_ptr.vmem [resolvable:$true] %s229
          %235 = dma.hbm_to_vmem [thread:$0]  %s3, 8192, %s230, [#allocation6], 64, 64, 4
        $region20: #{featurespace_classifier_forward.1} parent=11 // pred_fallthru
          _
        // Predicated region
        $region21: #{featurespace_classifier_forward.1} parent=11 // pred_check
          %p236 = pneg %p134
        $region22: #{featurespace_classifier_forward.1} parent=11 // pred_check_branch
          %238 = sbr.rel (%p236) target = $region24
        $region23: #{featurespace_classifier_forward.1} parent=11 // pred_region
          %s240 = ssub.s32 16, 16
          %241 = vsyncadd [#allocation9], %s240
          %s243 = sshll.u32 [#allocation8], 4
          %s244 = int_to_ptr.vmem [resolvable:$true] %s243
          %246 = dma.hbm_to_vmem [thread:$0]  %s4, 16, %s244, [#allocation9]
        $region24: #{featurespace_classifier_forward.1} parent=11 // pred_fallthru
          _
        // Predicated region
        $region25: #{featurespace_classifier_forward.1} parent=11 // pred_check
          %p247 = pneg %p155
        $region26: #{featurespace_classifier_forward.1} parent=11 // pred_check_branch
          %249 = sbr.rel (%p247) target = $region28
        $region27: #{featurespace_classifier_forward.1} parent=11 // pred_region
          %s251 = ssub.s32 1024, 1024
          %252 = vsyncadd [#allocation9], %s251
          %s253 = sshll.u32 [#allocation10], 4
          %s254 = int_to_ptr.vmem [resolvable:$true] %s253
          %259 = dma.hbm_to_vmem [thread:$0]  %s5, 1024, %s254, [#allocation9], 64, 64, 4
        $region28: #{featurespace_classifier_forward.1} parent=11 // pred_fallthru
          _
        // Predicated region
        $region29: #{featurespace_classifier_forward.1} parent=11 // pred_check
          %p260 = pneg %p176
        $region30: #{featurespace_classifier_forward.1} parent=11 // pred_check_branch
          %262 = sbr.rel (%p260) target = $region32
        $region31: #{featurespace_classifier_forward.1} parent=11 // pred_region
          %s264 = ssub.s32 16, 16
          %265 = vsyncadd [#allocation12], %s264
          %s267 = sshll.u32 [#allocation11], 4
          %s268 = int_to_ptr.vmem [resolvable:$true] %s267
          %270 = dma.hbm_to_vmem [thread:$0]  %s6, 16, %s268, [#allocation12]
        $region32: #{featurespace_classifier_forward.1} parent=11 // pred_fallthru
          _
      $region12: #{featurespace_classifier_forward.1} parent=5 // pred_fallthru
        _
      %p271 = scmp.lt.s32.totalorder %s19, 3
      // Predicated region
      $region33: #{featurespace_classifier_forward.1} parent=5 // pred_check
        %p272 = pneg %p271
      $region34: #{featurespace_classifier_forward.1} parent=5 // pred_check_branch
        %274 = sbr.rel (%p272) target = $region36
      $region35: #{featurespace_classifier_forward.1} parent=5 // pred_region
        // Predicated region
        $region37: #{featurespace_classifier_forward.1} parent=35 // pred_check
          %p275 = pneg %p39
        $region38: #{featurespace_classifier_forward.1} parent=35 // pred_check_branch
          %277 = sbr.rel (%p275) target = $region40
        $region39: #{featurespace_classifier_forward.1} parent=35 // pred_region
          %s278 = smul.u32 7, %s19
          %p279 = scmp.lt.s32.totalorder %s278, 20
          %s280 = scalar_select %p279, %s278, 20
          %s281 = scalar_lea.vmem %s0, %s280
          %s282 = smul.u32 7, %s19
        $region40: #{featurespace_classifier_forward.1} parent=35 // pred_fallthru
          _
        // Predicated region
        $region41: #{featurespace_classifier_forward.1} parent=35 // pred_check
          %p283 = pneg %p65
        $region42: #{featurespace_classifier_forward.1} parent=35 // pred_check_branch
          %285 = sbr.rel (%p283) target = $region44
        $region43: #{featurespace_classifier_forward.1} parent=35 // pred_region
          %s286 = sand.u32 %s55, 1
          %s287 = scalar_lea.sflag [#allocation4], %s286
          %s288 = sand.u32 %s55, 1
          %s289 = smul.addr %s288, 3584
          %s290 = scalar_lea.vmem [#allocation3], %s289
          %s291 = smul.u32 112, %s19
          %s293 = ssub.s32 57344, 57344
          %294 = vsyncadd %s287, %s293
          %s295 = smul.addr %s291, 8
          %s296 = smul.addr %s295, 64
          %s297 = scalar_lea.hbm %s1, %s296
          %s298 = sshll.u32 %s290, 4
          %s299 = int_to_ptr.vmem [resolvable:$true] %s298
          %304 = dma.hbm_to_vmem [thread:$0]  %s297, 57344, %s299, %s287, 512, 512, 32
        $region44: #{featurespace_classifier_forward.1} parent=35 // pred_fallthru
          _
      $region36: #{featurespace_classifier_forward.1} parent=5 // pred_fallthru
        _
      %p305 = scmp.le.s32.totalorder 1, %s19
      %p306 = scmp.lt.s32.totalorder %s19, 4
      %p307 = pnand %p305, %p306
      %p308 = pneg %p307
      // Predicated region
      $region45: #{featurespace_classifier_forward.1} parent=5 // pred_check
        _
      $region46: #{featurespace_classifier_forward.1} parent=5 // pred_check_branch
        %310 = sbr.rel (%p307) target = $region48
      $region47: #{featurespace_classifier_forward.1} parent=5 // pred_region
        %s311 = ssub.s32 %s19, 1
        %s312 = sand.u32 %s58, 1
        %s313 = scalar_lea.sflag [#allocation4], %s312
        %s314 = sand.u32 %s58, 1
        %s315 = smul.addr %s314, 3584
        %s316 = scalar_lea.vmem [#allocation3], %s315
        // Predicated region
        $region49: #{featurespace_classifier_forward.1} parent=47 // pred_check
          %p317 = pneg %p71
        $region50: #{featurespace_classifier_forward.1} parent=47 // pred_check_branch
          %319 = sbr.rel (%p317) target = $region52
        $region51: #{featurespace_classifier_forward.1} parent=47 // pred_region
          %320 = dma.done %s313, 57344
        $region52: #{featurespace_classifier_forward.1} parent=47 // pred_fallthru
          _
        // Predicated region
        $region53: #{featurespace_classifier_forward.1} parent=47 // pred_check
          %p321 = pneg %p92
        $region54: #{featurespace_classifier_forward.1} parent=47 // pred_check_branch
          %323 = sbr.rel (%p321) target = $region56
        $region55: #{featurespace_classifier_forward.1} parent=47 // pred_region
          %324 = dma.done [#allocation6], 128
        $region56: #{featurespace_classifier_forward.1} parent=47 // pred_fallthru
          _
        // Predicated region
        $region57: #{featurespace_classifier_forward.1} parent=47 // pred_check
          %p325 = pneg %p113
        $region58: #{featurespace_classifier_forward.1} parent=47 // pred_check_branch
          %327 = sbr.rel (%p325) target = $region60
        $region59: #{featurespace_classifier_forward.1} parent=47 // pred_region
          %328 = dma.done [#allocation6], 8192
        $region60: #{featurespace_classifier_forward.1} parent=47 // pred_fallthru
          _
        // Predicated region
        $region61: #{featurespace_classifier_forward.1} parent=47 // pred_check
          %p329 = pneg %p134
        $region62: #{featurespace_classifier_forward.1} parent=47 // pred_check_branch
          %331 = sbr.rel (%p329) target = $region64
        $region63: #{featurespace_classifier_forward.1} parent=47 // pred_region
          %332 = dma.done [#allocation9], 16
        $region64: #{featurespace_classifier_forward.1} parent=47 // pred_fallthru
          _
        // Predicated region
        $region65: #{featurespace_classifier_forward.1} parent=47 // pred_check
          %p333 = pneg %p155
        $region66: #{featurespace_classifier_forward.1} parent=47 // pred_check_branch
          %335 = sbr.rel (%p333) target = $region68
        $region67: #{featurespace_classifier_forward.1} parent=47 // pred_region
          %336 = dma.done [#allocation9], 1024
        $region68: #{featurespace_classifier_forward.1} parent=47 // pred_fallthru
          _
        // Predicated region
        $region69: #{featurespace_classifier_forward.1} parent=47 // pred_check
          %p337 = pneg %p176
        $region70: #{featurespace_classifier_forward.1} parent=47 // pred_check_branch
          %339 = sbr.rel (%p337) target = $region72
        $region71: #{featurespace_classifier_forward.1} parent=47 // pred_region
          %340 = dma.done [#allocation12], 16
        $region72: #{featurespace_classifier_forward.1} parent=47 // pred_fallthru
          _
        %s341 = smul.u32 7, %s24
        %p342 = scmp.lt.s32.totalorder %s341, 20
        %s343 = scalar_select %p342, %s341, 20
        %s344 = scalar_lea.vmem %s0, %s343
        %p345 = pneg %p45
        %p346 = pneg %p42
        %s347 = sand.u32 %s58, 1
        %s348 = scalar_lea.sflag [#allocation4], %s347
        %s349 = sand.u32 %s58, 1
        %s350 = smul.addr %s349, 3584
        %s351 = scalar_lea.vmem [#allocation3], %s350
        %p352 = pneg %p71
        %p353 = pneg %p68
        %p354 = pneg %p92
        %p355 = pneg %p89
        %p356 = pneg %p113
        %p357 = pneg %p110
        %p358 = pneg %p134
        %p359 = pneg %p131
        %p360 = pneg %p155
        %p361 = pneg %p152
        %p362 = pneg %p176
        %p363 = pneg %p173
        %p364 = pneg %p197
        %p365 = pneg %p194
        %s366 = smul.u32 7, %s24
        %p367 = scmp.lt.s32.totalorder %s366, 20
        %s368 = scalar_select %p367, %s366, 20
        %s369 = scalar_lea.vmem %s0, %s368
        %s370 = smul.u32 7, %s24
        %s371 = smul.u32 112, %s24
        %p373 = scmp.eq.s32.totalorder %s24, 0
        // Predicated region
        $region73: #{featurespace_classifier_forward.1} parent=47 // pred_check
          %p374 = pneg %p373
        $region74: #{featurespace_classifier_forward.1} parent=47 // pred_check_branch
          %376 = sbr.rel (%p374) target = $region76
        $region75: #{featurespace_classifier_forward.1} parent=47 // pred_region
          %377 = vst [vmem:[#allocation2] sm:$0xff] 0.0
          %378 = vst [vmem:[#allocation2 + $0x8] sm:$0xff] 0.0
        $region76: #{featurespace_classifier_forward.1} parent=47 // pred_fallthru
          _
        %v379 = vld [vmem:[#allocation2] sm:$0xff]
        %v380 = vld [vmem:[#allocation2 + $0x8] sm:$0xff]
        %v381 = vld [vmem:[%s369] sm:$0x7f]
        %v382 = vld [vmem:[%s316] sm:$0xff]
        %v383 = vld [vmem:[%s316 + $0x8] sm:$0xff]
        %v384 = vld [vmem:[%s316 + $0x10] sm:$0xff]
        %v385 = vld [vmem:[%s316 + $0x18] sm:$0xff]
        %v386 = vld [vmem:[%s316 + $0x20] sm:$0xff]
        %v387 = vld [vmem:[%s316 + $0x28] sm:$0xff]
        %v388 = vld [vmem:[%s316 + $0x30] sm:$0xff]
        %v389 = vld [vmem:[%s316 + $0x38] sm:$0xff]
        %v390 = vld [vmem:[%s316 + $0x40] sm:$0xff]
        %v391 = vld [vmem:[%s316 + $0x48] sm:$0xff]
        %v392 = vld [vmem:[%s316 + $0x50] sm:$0xff]
        %v393 = vld [vmem:[%s316 + $0x58] sm:$0xff]
        %v394 = vld [vmem:[%s316 + $0x60] sm:$0xff]
        %v395 = vld [vmem:[%s316 + $0x68] sm:$0xff]
        %v396 = vld [vmem:[%s316 + $0x70] sm:$0xff]
        %v397 = vld [vmem:[%s316 + $0x78] sm:$0xff]
        %v398 = vld [vmem:[%s316 + $0x80] sm:$0xff]
        %v399 = vld [vmem:[%s316 + $0x88] sm:$0xff]
        %v400 = vld [vmem:[%s316 + $0x90] sm:$0xff]
        %v401 = vld [vmem:[%s316 + $0x98] sm:$0xff]
        %v402 = vld [vmem:[%s316 + $0xa0] sm:$0xff]
        %v403 = vld [vmem:[%s316 + $0xa8] sm:$0xff]
        %v404 = vld [vmem:[%s316 + $0xb0] sm:$0xff]
        %v405 = vld [vmem:[%s316 + $0xb8] sm:$0xff]
        %v406 = vld [vmem:[%s316 + $0xc0] sm:$0xff]
        %v407 = vld [vmem:[%s316 + $0xc8] sm:$0xff]
        %v408 = vld [vmem:[%s316 + $0xd0] sm:$0xff]
        %v409 = vld [vmem:[%s316 + $0xd8] sm:$0xff]
        %v410 = vld [vmem:[%s316 + $0xe0] sm:$0xff]
        %v411 = vld [vmem:[%s316 + $0xe8] sm:$0xff]
        %v412 = vld [vmem:[%s316 + $0xf0] sm:$0xff]
        %v413 = vld [vmem:[%s316 + $0xf8] sm:$0xff]
        %v414 = vld [vmem:[%s316 + $0x100] sm:$0xff]
        %v415 = vld [vmem:[%s316 + $0x108] sm:$0xff]
        %v416 = vld [vmem:[%s316 + $0x110] sm:$0xff]
        %v417 = vld [vmem:[%s316 + $0x118] sm:$0xff]
        %v418 = vld [vmem:[%s316 + $0x120] sm:$0xff]
        %v419 = vld [vmem:[%s316 + $0x128] sm:$0xff]
        %v420 = vld [vmem:[%s316 + $0x130] sm:$0xff]
        %v421 = vld [vmem:[%s316 + $0x138] sm:$0xff]
        %v422 = vld [vmem:[%s316 + $0x140] sm:$0xff]
        %v423 = vld [vmem:[%s316 + $0x148] sm:$0xff]
        %v424 = vld [vmem:[%s316 + $0x150] sm:$0xff]
        %v425 = vld [vmem:[%s316 + $0x158] sm:$0xff]
        %v426 = vld [vmem:[%s316 + $0x160] sm:$0xff]
        %v427 = vld [vmem:[%s316 + $0x168] sm:$0xff]
        %v428 = vld [vmem:[%s316 + $0x170] sm:$0xff]
        %v429 = vld [vmem:[%s316 + $0x178] sm:$0xff]
        %v430 = vld [vmem:[%s316 + $0x180] sm:$0xff]
        %v431 = vld [vmem:[%s316 + $0x188] sm:$0xff]
        %v432 = vld [vmem:[%s316 + $0x190] sm:$0xff]
        %v433 = vld [vmem:[%s316 + $0x198] sm:$0xff]
        %v434 = vld [vmem:[%s316 + $0x1a0] sm:$0xff]
        %v435 = vld [vmem:[%s316 + $0x1a8] sm:$0xff]
        %v436 = vld [vmem:[%s316 + $0x1b0] sm:$0xff]
        %v437 = vld [vmem:[%s316 + $0x1b8] sm:$0xff]
        %v438 = vld [vmem:[%s316 + $0x1c0] sm:$0xff]
        %v439 = vld [vmem:[%s316 + $0x1c8] sm:$0xff]
        %v440 = vld [vmem:[%s316 + $0x1d0] sm:$0xff]
        %v441 = vld [vmem:[%s316 + $0x1d8] sm:$0xff]
        %v442 = vld [vmem:[%s316 + $0x1e0] sm:$0xff]
        %v443 = vld [vmem:[%s316 + $0x1e8] sm:$0xff]
        %v444 = vld [vmem:[%s316 + $0x1f0] sm:$0xff]
        %v445 = vld [vmem:[%s316 + $0x1f8] sm:$0xff]
        %v446 = vld [vmem:[%s316 + $0x200] sm:$0xff]
        %v447 = vld [vmem:[%s316 + $0x208] sm:$0xff]
        %v448 = vld [vmem:[%s316 + $0x210] sm:$0xff]
        %v449 = vld [vmem:[%s316 + $0x218] sm:$0xff]
        %v450 = vld [vmem:[%s316 + $0x220] sm:$0xff]
        %v451 = vld [vmem:[%s316 + $0x228] sm:$0xff]
        %v452 = vld [vmem:[%s316 + $0x230] sm:$0xff]
        %v453 = vld [vmem:[%s316 + $0x238] sm:$0xff]
        %v454 = vld [vmem:[%s316 + $0x240] sm:$0xff]
        %v455 = vld [vmem:[%s316 + $0x248] sm:$0xff]
        %v456 = vld [vmem:[%s316 + $0x250] sm:$0xff]
        %v457 = vld [vmem:[%s316 + $0x258] sm:$0xff]
        %v458 = vld [vmem:[%s316 + $0x260] sm:$0xff]
        %v459 = vld [vmem:[%s316 + $0x268] sm:$0xff]
        %v460 = vld [vmem:[%s316 + $0x270] sm:$0xff]
        %v461 = vld [vmem:[%s316 + $0x278] sm:$0xff]
        %v462 = vld [vmem:[%s316 + $0x280] sm:$0xff]
        %v463 = vld [vmem:[%s316 + $0x288] sm:$0xff]
        %v464 = vld [vmem:[%s316 + $0x290] sm:$0xff]
        %v465 = vld [vmem:[%s316 + $0x298] sm:$0xff]
        %v466 = vld [vmem:[%s316 + $0x2a0] sm:$0xff]
        %v467 = vld [vmem:[%s316 + $0x2a8] sm:$0xff]
        %v468 = vld [vmem:[%s316 + $0x2b0] sm:$0xff]
        %v469 = vld [vmem:[%s316 + $0x2b8] sm:$0xff]
        %v470 = vld [vmem:[%s316 + $0x2c0] sm:$0xff]
        %v471 = vld [vmem:[%s316 + $0x2c8] sm:$0xff]
        %v472 = vld [vmem:[%s316 + $0x2d0] sm:$0xff]
        %v473 = vld [vmem:[%s316 + $0x2d8] sm:$0xff]
        %v474 = vld [vmem:[%s316 + $0x2e0] sm:$0xff]
        %v475 = vld [vmem:[%s316 + $0x2e8] sm:$0xff]
        %v476 = vld [vmem:[%s316 + $0x2f0] sm:$0xff]
        %v477 = vld [vmem:[%s316 + $0x2f8] sm:$0xff]
        %v478 = vld [vmem:[%s316 + $0x300] sm:$0xff]
        %v479 = vld [vmem:[%s316 + $0x308] sm:$0xff]
        %v480 = vld [vmem:[%s316 + $0x310] sm:$0xff]
        %v481 = vld [vmem:[%s316 + $0x318] sm:$0xff]
        %v482 = vld [vmem:[%s316 + $0x320] sm:$0xff]
        %v483 = vld [vmem:[%s316 + $0x328] sm:$0xff]
        %v484 = vld [vmem:[%s316 + $0x330] sm:$0xff]
        %v485 = vld [vmem:[%s316 + $0x338] sm:$0xff]
        %v486 = vld [vmem:[%s316 + $0x340] sm:$0xff]
        %v487 = vld [vmem:[%s316 + $0x348] sm:$0xff]
        %v488 = vld [vmem:[%s316 + $0x350] sm:$0xff]
        %v489 = vld [vmem:[%s316 + $0x358] sm:$0xff]
        %v490 = vld [vmem:[%s316 + $0x360] sm:$0xff]
        %v491 = vld [vmem:[%s316 + $0x368] sm:$0xff]
        %v492 = vld [vmem:[%s316 + $0x370] sm:$0xff]
        %v493 = vld [vmem:[%s316 + $0x378] sm:$0xff]
        %v494 = vld [vmem:[%s316 + $0x380] sm:$0xff]
        %v495 = vld [vmem:[%s316 + $0x388] sm:$0xff]
        %v496 = vld [vmem:[%s316 + $0x390] sm:$0xff]
        %v497 = vld [vmem:[%s316 + $0x398] sm:$0xff]
        %v498 = vld [vmem:[%s316 + $0x3a0] sm:$0xff]
        %v499 = vld [vmem:[%s316 + $0x3a8] sm:$0xff]
        %v500 = vld [vmem:[%s316 + $0x3b0] sm:$0xff]
        %v501 = vld [vmem:[%s316 + $0x3b8] sm:$0xff]
        %v502 = vld [vmem:[%s316 + $0x3c0] sm:$0xff]
        %v503 = vld [vmem:[%s316 + $0x3c8] sm:$0xff]
        %v504 = vld [vmem:[%s316 + $0x3d0] sm:$0xff]
        %v505 = vld [vmem:[%s316 + $0x3d8] sm:$0xff]
        %v506 = vld [vmem:[%s316 + $0x3e0] sm:$0xff]
        %v507 = vld [vmem:[%s316 + $0x3e8] sm:$0xff]
        %v508 = vld [vmem:[%s316 + $0x3f0] sm:$0xff]
        %v509 = vld [vmem:[%s316 + $0x3f8] sm:$0xff]
        %v510 = vld [vmem:[%s316 + $0x400] sm:$0xff]
        %v511 = vld [vmem:[%s316 + $0x408] sm:$0xff]
        %v512 = vld [vmem:[%s316 + $0x410] sm:$0xff]
        %v513 = vld [vmem:[%s316 + $0x418] sm:$0xff]
        %v514 = vld [vmem:[%s316 + $0x420] sm:$0xff]
        %v515 = vld [vmem:[%s316 + $0x428] sm:$0xff]
        %v516 = vld [vmem:[%s316 + $0x430] sm:$0xff]
        %v517 = vld [vmem:[%s316 + $0x438] sm:$0xff]
        %v518 = vld [vmem:[%s316 + $0x440] sm:$0xff]
        %v519 = vld [vmem:[%s316 + $0x448] sm:$0xff]
        %v520 = vld [vmem:[%s316 + $0x450] sm:$0xff]
        %v521 = vld [vmem:[%s316 + $0x458] sm:$0xff]
        %v522 = vld [vmem:[%s316 + $0x460] sm:$0xff]
        %v523 = vld [vmem:[%s316 + $0x468] sm:$0xff]
        %v524 = vld [vmem:[%s316 + $0x470] sm:$0xff]
        %v525 = vld [vmem:[%s316 + $0x478] sm:$0xff]
        %v526 = vld [vmem:[%s316 + $0x480] sm:$0xff]
        %v527 = vld [vmem:[%s316 + $0x488] sm:$0xff]
        %v528 = vld [vmem:[%s316 + $0x490] sm:$0xff]
        %v529 = vld [vmem:[%s316 + $0x498] sm:$0xff]
        %v530 = vld [vmem:[%s316 + $0x4a0] sm:$0xff]
        %v531 = vld [vmem:[%s316 + $0x4a8] sm:$0xff]
        %v532 = vld [vmem:[%s316 + $0x4b0] sm:$0xff]
        %v533 = vld [vmem:[%s316 + $0x4b8] sm:$0xff]
        %v534 = vld [vmem:[%s316 + $0x4c0] sm:$0xff]
        %v535 = vld [vmem:[%s316 + $0x4c8] sm:$0xff]
        %v536 = vld [vmem:[%s316 + $0x4d0] sm:$0xff]
        %v537 = vld [vmem:[%s316 + $0x4d8] sm:$0xff]
        %v538 = vld [vmem:[%s316 + $0x4e0] sm:$0xff]
        %v539 = vld [vmem:[%s316 + $0x4e8] sm:$0xff]
        %v540 = vld [vmem:[%s316 + $0x4f0] sm:$0xff]
        %v541 = vld [vmem:[%s316 + $0x4f8] sm:$0xff]
        %v542 = vld [vmem:[%s316 + $0x500] sm:$0xff]
        %v543 = vld [vmem:[%s316 + $0x508] sm:$0xff]
        %v544 = vld [vmem:[%s316 + $0x510] sm:$0xff]
        %v545 = vld [vmem:[%s316 + $0x518] sm:$0xff]
        %v546 = vld [vmem:[%s316 + $0x520] sm:$0xff]
        %v547 = vld [vmem:[%s316 + $0x528] sm:$0xff]
        %v548 = vld [vmem:[%s316 + $0x530] sm:$0xff]
        %v549 = vld [vmem:[%s316 + $0x538] sm:$0xff]
        %v550 = vld [vmem:[%s316 + $0x540] sm:$0xff]
        %v551 = vld [vmem:[%s316 + $0x548] sm:$0xff]
        %v552 = vld [vmem:[%s316 + $0x550] sm:$0xff]
        %v553 = vld [vmem:[%s316 + $0x558] sm:$0xff]
        %v554 = vld [vmem:[%s316 + $0x560] sm:$0xff]
        %v555 = vld [vmem:[%s316 + $0x568] sm:$0xff]
        %v556 = vld [vmem:[%s316 + $0x570] sm:$0xff]
        %v557 = vld [vmem:[%s316 + $0x578] sm:$0xff]
        %v558 = vld [vmem:[%s316 + $0x580] sm:$0xff]
        %v559 = vld [vmem:[%s316 + $0x588] sm:$0xff]
        %v560 = vld [vmem:[%s316 + $0x590] sm:$0xff]
        %v561 = vld [vmem:[%s316 + $0x598] sm:$0xff]
        %v562 = vld [vmem:[%s316 + $0x5a0] sm:$0xff]
        %v563 = vld [vmem:[%s316 + $0x5a8] sm:$0xff]
        %v564 = vld [vmem:[%s316 + $0x5b0] sm:$0xff]
        %v565 = vld [vmem:[%s316 + $0x5b8] sm:$0xff]
        %v566 = vld [vmem:[%s316 + $0x5c0] sm:$0xff]
        %v567 = vld [vmem:[%s316 + $0x5c8] sm:$0xff]
        %v568 = vld [vmem:[%s316 + $0x5d0] sm:$0xff]
        %v569 = vld [vmem:[%s316 + $0x5d8] sm:$0xff]
        %v570 = vld [vmem:[%s316 + $0x5e0] sm:$0xff]
        %v571 = vld [vmem:[%s316 + $0x5e8] sm:$0xff]
        %v572 = vld [vmem:[%s316 + $0x5f0] sm:$0xff]
        %v573 = vld [vmem:[%s316 + $0x5f8] sm:$0xff]
        %v574 = vld [vmem:[%s316 + $0x600] sm:$0xff]
        %v575 = vld [vmem:[%s316 + $0x608] sm:$0xff]
        %v576 = vld [vmem:[%s316 + $0x610] sm:$0xff]
        %v577 = vld [vmem:[%s316 + $0x618] sm:$0xff]
        %v578 = vld [vmem:[%s316 + $0x620] sm:$0xff]
        %v579 = vld [vmem:[%s316 + $0x628] sm:$0xff]
        %v580 = vld [vmem:[%s316 + $0x630] sm:$0xff]
        %v581 = vld [vmem:[%s316 + $0x638] sm:$0xff]
        %v582 = vld [vmem:[%s316 + $0x640] sm:$0xff]
        %v583 = vld [vmem:[%s316 + $0x648] sm:$0xff]
        %v584 = vld [vmem:[%s316 + $0x650] sm:$0xff]
        %v585 = vld [vmem:[%s316 + $0x658] sm:$0xff]
        %v586 = vld [vmem:[%s316 + $0x660] sm:$0xff]
        %v587 = vld [vmem:[%s316 + $0x668] sm:$0xff]
        %v588 = vld [vmem:[%s316 + $0x670] sm:$0xff]
        %v589 = vld [vmem:[%s316 + $0x678] sm:$0xff]
        %v590 = vld [vmem:[%s316 + $0x680] sm:$0xff]
        %v591 = vld [vmem:[%s316 + $0x688] sm:$0xff]
        %v592 = vld [vmem:[%s316 + $0x690] sm:$0xff]
        %v593 = vld [vmem:[%s316 + $0x698] sm:$0xff]
        %v594 = vld [vmem:[%s316 + $0x6a0] sm:$0xff]
        %v595 = vld [vmem:[%s316 + $0x6a8] sm:$0xff]
        %v596 = vld [vmem:[%s316 + $0x6b0] sm:$0xff]
        %v597 = vld [vmem:[%s316 + $0x6b8] sm:$0xff]
        %v598 = vld [vmem:[%s316 + $0x6c0] sm:$0xff]
        %v599 = vld [vmem:[%s316 + $0x6c8] sm:$0xff]
        %v600 = vld [vmem:[%s316 + $0x6d0] sm:$0xff]
        %v601 = vld [vmem:[%s316 + $0x6d8] sm:$0xff]
        %v602 = vld [vmem:[%s316 + $0x6e0] sm:$0xff]
        %v603 = vld [vmem:[%s316 + $0x6e8] sm:$0xff]
        %v604 = vld [vmem:[%s316 + $0x6f0] sm:$0xff]
        %v605 = vld [vmem:[%s316 + $0x6f8] sm:$0xff]
        %v606 = vld [vmem:[%s316 + $0x700] sm:$0xff]
        %v607 = vld [vmem:[%s316 + $0x708] sm:$0xff]
        %v608 = vld [vmem:[%s316 + $0x710] sm:$0xff]
        %v609 = vld [vmem:[%s316 + $0x718] sm:$0xff]
        %v610 = vld [vmem:[%s316 + $0x720] sm:$0xff]
        %v611 = vld [vmem:[%s316 + $0x728] sm:$0xff]
        %v612 = vld [vmem:[%s316 + $0x730] sm:$0xff]
        %v613 = vld [vmem:[%s316 + $0x738] sm:$0xff]
        %v614 = vld [vmem:[%s316 + $0x740] sm:$0xff]
        %v615 = vld [vmem:[%s316 + $0x748] sm:$0xff]
        %v616 = vld [vmem:[%s316 + $0x750] sm:$0xff]
        %v617 = vld [vmem:[%s316 + $0x758] sm:$0xff]
        %v618 = vld [vmem:[%s316 + $0x760] sm:$0xff]
        %v619 = vld [vmem:[%s316 + $0x768] sm:$0xff]
        %v620 = vld [vmem:[%s316 + $0x770] sm:$0xff]
        %v621 = vld [vmem:[%s316 + $0x778] sm:$0xff]
        %v622 = vld [vmem:[%s316 + $0x780] sm:$0xff]
        %v623 = vld [vmem:[%s316 + $0x788] sm:$0xff]
        %v624 = vld [vmem:[%s316 + $0x790] sm:$0xff]
        %v625 = vld [vmem:[%s316 + $0x798] sm:$0xff]
        %v626 = vld [vmem:[%s316 + $0x7a0] sm:$0xff]
        %v627 = vld [vmem:[%s316 + $0x7a8] sm:$0xff]
        %v628 = vld [vmem:[%s316 + $0x7b0] sm:$0xff]
        %v629 = vld [vmem:[%s316 + $0x7b8] sm:$0xff]
        %v630 = vld [vmem:[%s316 + $0x7c0] sm:$0xff]
        %v631 = vld [vmem:[%s316 + $0x7c8] sm:$0xff]
        %v632 = vld [vmem:[%s316 + $0x7d0] sm:$0xff]
        %v633 = vld [vmem:[%s316 + $0x7d8] sm:$0xff]
        %v634 = vld [vmem:[%s316 + $0x7e0] sm:$0xff]
        %v635 = vld [vmem:[%s316 + $0x7e8] sm:$0xff]
        %v636 = vld [vmem:[%s316 + $0x7f0] sm:$0xff]
        %v637 = vld [vmem:[%s316 + $0x7f8] sm:$0xff]
        %v638 = vld [vmem:[%s316 + $0x800] sm:$0xff]
        %v639 = vld [vmem:[%s316 + $0x808] sm:$0xff]
        %v640 = vld [vmem:[%s316 + $0x810] sm:$0xff]
        %v641 = vld [vmem:[%s316 + $0x818] sm:$0xff]
        %v642 = vld [vmem:[%s316 + $0x820] sm:$0xff]
        %v643 = vld [vmem:[%s316 + $0x828] sm:$0xff]
        %v644 = vld [vmem:[%s316 + $0x830] sm:$0xff]
        %v645 = vld [vmem:[%s316 + $0x838] sm:$0xff]
        %v646 = vld [vmem:[%s316 + $0x840] sm:$0xff]
        %v647 = vld [vmem:[%s316 + $0x848] sm:$0xff]
        %v648 = vld [vmem:[%s316 + $0x850] sm:$0xff]
        %v649 = vld [vmem:[%s316 + $0x858] sm:$0xff]
        %v650 = vld [vmem:[%s316 + $0x860] sm:$0xff]
        %v651 = vld [vmem:[%s316 + $0x868] sm:$0xff]
        %v652 = vld [vmem:[%s316 + $0x870] sm:$0xff]
        %v653 = vld [vmem:[%s316 + $0x878] sm:$0xff]
        %v654 = vld [vmem:[%s316 + $0x880] sm:$0xff]
        %v655 = vld [vmem:[%s316 + $0x888] sm:$0xff]
        %v656 = vld [vmem:[%s316 + $0x890] sm:$0xff]
        %v657 = vld [vmem:[%s316 + $0x898] sm:$0xff]
        %v658 = vld [vmem:[%s316 + $0x8a0] sm:$0xff]
        %v659 = vld [vmem:[%s316 + $0x8a8] sm:$0xff]
        %v660 = vld [vmem:[%s316 + $0x8b0] sm:$0xff]
        %v661 = vld [vmem:[%s316 + $0x8b8] sm:$0xff]
        %v662 = vld [vmem:[%s316 + $0x8c0] sm:$0xff]
        %v663 = vld [vmem:[%s316 + $0x8c8] sm:$0xff]
        %v664 = vld [vmem:[%s316 + $0x8d0] sm:$0xff]
        %v665 = vld [vmem:[%s316 + $0x8d8] sm:$0xff]
        %v666 = vld [vmem:[%s316 + $0x8e0] sm:$0xff]
        %v667 = vld [vmem:[%s316 + $0x8e8] sm:$0xff]
        %v668 = vld [vmem:[%s316 + $0x8f0] sm:$0xff]
        %v669 = vld [vmem:[%s316 + $0x8f8] sm:$0xff]
        %v670 = vld [vmem:[%s316 + $0x900] sm:$0xff]
        %v671 = vld [vmem:[%s316 + $0x908] sm:$0xff]
        %v672 = vld [vmem:[%s316 + $0x910] sm:$0xff]
        %v673 = vld [vmem:[%s316 + $0x918] sm:$0xff]
        %v674 = vld [vmem:[%s316 + $0x920] sm:$0xff]
        %v675 = vld [vmem:[%s316 + $0x928] sm:$0xff]
        %v676 = vld [vmem:[%s316 + $0x930] sm:$0xff]
        %v677 = vld [vmem:[%s316 + $0x938] sm:$0xff]
        %v678 = vld [vmem:[%s316 + $0x940] sm:$0xff]
        %v679 = vld [vmem:[%s316 + $0x948] sm:$0xff]
        %v680 = vld [vmem:[%s316 + $0x950] sm:$0xff]
        %v681 = vld [vmem:[%s316 + $0x958] sm:$0xff]
        %v682 = vld [vmem:[%s316 + $0x960] sm:$0xff]
        %v683 = vld [vmem:[%s316 + $0x968] sm:$0xff]
        %v684 = vld [vmem:[%s316 + $0x970] sm:$0xff]
        %v685 = vld [vmem:[%s316 + $0x978] sm:$0xff]
        %v686 = vld [vmem:[%s316 + $0x980] sm:$0xff]
        %v687 = vld [vmem:[%s316 + $0x988] sm:$0xff]
        %v688 = vld [vmem:[%s316 + $0x990] sm:$0xff]
        %v689 = vld [vmem:[%s316 + $0x998] sm:$0xff]
        %v690 = vld [vmem:[%s316 + $0x9a0] sm:$0xff]
        %v691 = vld [vmem:[%s316 + $0x9a8] sm:$0xff]
        %v692 = vld [vmem:[%s316 + $0x9b0] sm:$0xff]
        %v693 = vld [vmem:[%s316 + $0x9b8] sm:$0xff]
        %v694 = vld [vmem:[%s316 + $0x9c0] sm:$0xff]
        %v695 = vld [vmem:[%s316 + $0x9c8] sm:$0xff]
        %v696 = vld [vmem:[%s316 + $0x9d0] sm:$0xff]
        %v697 = vld [vmem:[%s316 + $0x9d8] sm:$0xff]
        %v698 = vld [vmem:[%s316 + $0x9e0] sm:$0xff]
        %v699 = vld [vmem:[%s316 + $0x9e8] sm:$0xff]
        %v700 = vld [vmem:[%s316 + $0x9f0] sm:$0xff]
        %v701 = vld [vmem:[%s316 + $0x9f8] sm:$0xff]
        %v702 = vld [vmem:[%s316 + $0xa00] sm:$0xff]
        %v703 = vld [vmem:[%s316 + $0xa08] sm:$0xff]
        %v704 = vld [vmem:[%s316 + $0xa10] sm:$0xff]
        %v705 = vld [vmem:[%s316 + $0xa18] sm:$0xff]
        %v706 = vld [vmem:[%s316 + $0xa20] sm:$0xff]
        %v707 = vld [vmem:[%s316 + $0xa28] sm:$0xff]
        %v708 = vld [vmem:[%s316 + $0xa30] sm:$0xff]
        %v709 = vld [vmem:[%s316 + $0xa38] sm:$0xff]
        %v710 = vld [vmem:[%s316 + $0xa40] sm:$0xff]
        %v711 = vld [vmem:[%s316 + $0xa48] sm:$0xff]
        %v712 = vld [vmem:[%s316 + $0xa50] sm:$0xff]
        %v713 = vld [vmem:[%s316 + $0xa58] sm:$0xff]
        %v714 = vld [vmem:[%s316 + $0xa60] sm:$0xff]
        %v715 = vld [vmem:[%s316 + $0xa68] sm:$0xff]
        %v716 = vld [vmem:[%s316 + $0xa70] sm:$0xff]
        %v717 = vld [vmem:[%s316 + $0xa78] sm:$0xff]
        %v718 = vld [vmem:[%s316 + $0xa80] sm:$0xff]
        %v719 = vld [vmem:[%s316 + $0xa88] sm:$0xff]
        %v720 = vld [vmem:[%s316 + $0xa90] sm:$0xff]
        %v721 = vld [vmem:[%s316 + $0xa98] sm:$0xff]
        %v722 = vld [vmem:[%s316 + $0xaa0] sm:$0xff]
        %v723 = vld [vmem:[%s316 + $0xaa8] sm:$0xff]
        %v724 = vld [vmem:[%s316 + $0xab0] sm:$0xff]
        %v725 = vld [vmem:[%s316 + $0xab8] sm:$0xff]
        %v726 = vld [vmem:[%s316 + $0xac0] sm:$0xff]
        %v727 = vld [vmem:[%s316 + $0xac8] sm:$0xff]
        %v728 = vld [vmem:[%s316 + $0xad0] sm:$0xff]
        %v729 = vld [vmem:[%s316 + $0xad8] sm:$0xff]
        %v730 = vld [vmem:[%s316 + $0xae0] sm:$0xff]
        %v731 = vld [vmem:[%s316 + $0xae8] sm:$0xff]
        %v732 = vld [vmem:[%s316 + $0xaf0] sm:$0xff]
        %v733 = vld [vmem:[%s316 + $0xaf8] sm:$0xff]
        %v734 = vld [vmem:[%s316 + $0xb00] sm:$0xff]
        %v735 = vld [vmem:[%s316 + $0xb08] sm:$0xff]
        %v736 = vld [vmem:[%s316 + $0xb10] sm:$0xff]
        %v737 = vld [vmem:[%s316 + $0xb18] sm:$0xff]
        %v738 = vld [vmem:[%s316 + $0xb20] sm:$0xff]
        %v739 = vld [vmem:[%s316 + $0xb28] sm:$0xff]
        %v740 = vld [vmem:[%s316 + $0xb30] sm:$0xff]
        %v741 = vld [vmem:[%s316 + $0xb38] sm:$0xff]
        %v742 = vld [vmem:[%s316 + $0xb40] sm:$0xff]
        %v743 = vld [vmem:[%s316 + $0xb48] sm:$0xff]
        %v744 = vld [vmem:[%s316 + $0xb50] sm:$0xff]
        %v745 = vld [vmem:[%s316 + $0xb58] sm:$0xff]
        %v746 = vld [vmem:[%s316 + $0xb60] sm:$0xff]
        %v747 = vld [vmem:[%s316 + $0xb68] sm:$0xff]
        %v748 = vld [vmem:[%s316 + $0xb70] sm:$0xff]
        %v749 = vld [vmem:[%s316 + $0xb78] sm:$0xff]
        %v750 = vld [vmem:[%s316 + $0xb80] sm:$0xff]
        %v751 = vld [vmem:[%s316 + $0xb88] sm:$0xff]
        %v752 = vld [vmem:[%s316 + $0xb90] sm:$0xff]
        %v753 = vld [vmem:[%s316 + $0xb98] sm:$0xff]
        %v754 = vld [vmem:[%s316 + $0xba0] sm:$0xff]
        %v755 = vld [vmem:[%s316 + $0xba8] sm:$0xff]
        %v756 = vld [vmem:[%s316 + $0xbb0] sm:$0xff]
        %v757 = vld [vmem:[%s316 + $0xbb8] sm:$0xff]
        %v758 = vld [vmem:[%s316 + $0xbc0] sm:$0xff]
        %v759 = vld [vmem:[%s316 + $0xbc8] sm:$0xff]
        %v760 = vld [vmem:[%s316 + $0xbd0] sm:$0xff]
        %v761 = vld [vmem:[%s316 + $0xbd8] sm:$0xff]
        %v762 = vld [vmem:[%s316 + $0xbe0] sm:$0xff]
        %v763 = vld [vmem:[%s316 + $0xbe8] sm:$0xff]
        %v764 = vld [vmem:[%s316 + $0xbf0] sm:$0xff]
        %v765 = vld [vmem:[%s316 + $0xbf8] sm:$0xff]
        %v766 = vld [vmem:[%s316 + $0xc00] sm:$0xff]
        %v767 = vld [vmem:[%s316 + $0xc08] sm:$0xff]
        %v768 = vld [vmem:[%s316 + $0xc10] sm:$0xff]
        %v769 = vld [vmem:[%s316 + $0xc18] sm:$0xff]
        %v770 = vld [vmem:[%s316 + $0xc20] sm:$0xff]
        %v771 = vld [vmem:[%s316 + $0xc28] sm:$0xff]
        %v772 = vld [vmem:[%s316 + $0xc30] sm:$0xff]
        %v773 = vld [vmem:[%s316 + $0xc38] sm:$0xff]
        %v774 = vld [vmem:[%s316 + $0xc40] sm:$0xff]
        %v775 = vld [vmem:[%s316 + $0xc48] sm:$0xff]
        %v776 = vld [vmem:[%s316 + $0xc50] sm:$0xff]
        %v777 = vld [vmem:[%s316 + $0xc58] sm:$0xff]
        %v778 = vld [vmem:[%s316 + $0xc60] sm:$0xff]
        %v779 = vld [vmem:[%s316 + $0xc68] sm:$0xff]
        %v780 = vld [vmem:[%s316 + $0xc70] sm:$0xff]
        %v781 = vld [vmem:[%s316 + $0xc78] sm:$0xff]
        %v782 = vld [vmem:[%s316 + $0xc80] sm:$0xff]
        %v783 = vld [vmem:[%s316 + $0xc88] sm:$0xff]
        %v784 = vld [vmem:[%s316 + $0xc90] sm:$0xff]
        %v785 = vld [vmem:[%s316 + $0xc98] sm:$0xff]
        %v786 = vld [vmem:[%s316 + $0xca0] sm:$0xff]
        %v787 = vld [vmem:[%s316 + $0xca8] sm:$0xff]
        %v788 = vld [vmem:[%s316 + $0xcb0] sm:$0xff]
        %v789 = vld [vmem:[%s316 + $0xcb8] sm:$0xff]
        %v790 = vld [vmem:[%s316 + $0xcc0] sm:$0xff]
        %v791 = vld [vmem:[%s316 + $0xcc8] sm:$0xff]
        %v792 = vld [vmem:[%s316 + $0xcd0] sm:$0xff]
        %v793 = vld [vmem:[%s316 + $0xcd8] sm:$0xff]
        %v794 = vld [vmem:[%s316 + $0xce0] sm:$0xff]
        %v795 = vld [vmem:[%s316 + $0xce8] sm:$0xff]
        %v796 = vld [vmem:[%s316 + $0xcf0] sm:$0xff]
        %v797 = vld [vmem:[%s316 + $0xcf8] sm:$0xff]
        %v798 = vld [vmem:[%s316 + $0xd00] sm:$0xff]
        %v799 = vld [vmem:[%s316 + $0xd08] sm:$0xff]
        %v800 = vld [vmem:[%s316 + $0xd10] sm:$0xff]
        %v801 = vld [vmem:[%s316 + $0xd18] sm:$0xff]
        %v802 = vld [vmem:[%s316 + $0xd20] sm:$0xff]
        %v803 = vld [vmem:[%s316 + $0xd28] sm:$0xff]
        %v804 = vld [vmem:[%s316 + $0xd30] sm:$0xff]
        %v805 = vld [vmem:[%s316 + $0xd38] sm:$0xff]
        %v806 = vld [vmem:[%s316 + $0xd40] sm:$0xff]
        %v807 = vld [vmem:[%s316 + $0xd48] sm:$0xff]
        %v808 = vld [vmem:[%s316 + $0xd50] sm:$0xff]
        %v809 = vld [vmem:[%s316 + $0xd58] sm:$0xff]
        %v810 = vld [vmem:[%s316 + $0xd60] sm:$0xff]
        %v811 = vld [vmem:[%s316 + $0xd68] sm:$0xff]
        %v812 = vld [vmem:[%s316 + $0xd70] sm:$0xff]
        %v813 = vld [vmem:[%s316 + $0xd78] sm:$0xff]
        %v814 = vld [vmem:[%s316 + $0xd80] sm:$0xff]
        %v815 = vld [vmem:[%s316 + $0xd88] sm:$0xff]
        %v816 = vld [vmem:[%s316 + $0xd90] sm:$0xff]
        %v817 = vld [vmem:[%s316 + $0xd98] sm:$0xff]
        %v818 = vld [vmem:[%s316 + $0xda0] sm:$0xff]
        %v819 = vld [vmem:[%s316 + $0xda8] sm:$0xff]
        %v820 = vld [vmem:[%s316 + $0xdb0] sm:$0xff]
        %v821 = vld [vmem:[%s316 + $0xdb8] sm:$0xff]
        %v822 = vld [vmem:[%s316 + $0xdc0] sm:$0xff]
        %v823 = vld [vmem:[%s316 + $0xdc8] sm:$0xff]
        %v824 = vld [vmem:[%s316 + $0xdd0] sm:$0xff]
        %v825 = vld [vmem:[%s316 + $0xdd8] sm:$0xff]
        %v826 = vld [vmem:[%s316 + $0xde0] sm:$0xff]
        %v827 = vld [vmem:[%s316 + $0xde8] sm:$0xff]
        %v828 = vld [vmem:[%s316 + $0xdf0] sm:$0xff]
        %v829 = vld [vmem:[%s316 + $0xdf8] sm:$0xff]
        %v831 = vcombine.high %v381, %v381
        %v833 = vunpack.c.l.s4 1966171168
        %v834 = vunpack.c.0.s8 %v833
        %v835 = vlaneseq
        %v836 = vshrl.u32 %v835, 7
        %v837 = vsub.s32 %v834, %v836
        %v838 = vrot.slane %v381, %v837
        %v840 = vunpack.c.l.s4 1966171168
        %v841 = vunpack.c.0.s8 %v840
        %v842 = vlaneseq
        %v843 = vshrl.u32 %v842, 7
        %v844 = vsub.s32 %v841, %v843
        %v845 = vrot.slane %v831, %v844
        %v846 = vcombine.high %v838, %v838
        %v847 = vcombine.high %v845, %v845
        %v849 = vunpack.c.l.s4 1966171168
        %v850 = vunpack.c.0.s8 %v849
        %v851 = vlaneseq
        %v852 = vshrl.u32 %v851, 7
        %v853 = vsub.s32 %v850, %v852
        %v854 = vrot.slane %v838, %v853
        %v856 = vunpack.c.l.s4 1966171168
        %v857 = vunpack.c.0.s8 %v856
        %v858 = vlaneseq
        %v859 = vshrl.u32 %v858, 7
        %v860 = vsub.s32 %v857, %v859
        %v861 = vrot.slane %v845, %v860
        %v863 = vunpack.c.l.s4 1966171168
        %v864 = vunpack.c.0.s8 %v863
        %v865 = vlaneseq
        %v866 = vshrl.u32 %v865, 7
        %v867 = vsub.s32 %v864, %v866
        %v868 = vrot.slane %v846, %v867
        %v870 = vunpack.c.l.s4 1966171168
        %v871 = vunpack.c.0.s8 %v870
        %v872 = vlaneseq
        %v873 = vshrl.u32 %v872, 7
        %v874 = vsub.s32 %v871, %v873
        %v875 = vrot.slane %v847, %v874
        %v876 = vcombine.high %v854, %v854
        %v877 = vcombine.high %v861, %v861
        %v878 = vcombine.high %v868, %v868
        %v1334 = vunpack.c.l.b16 %v382
        %v1335 = vunpack.c.h.b16 %v382
        %v1336 = vunpack.c.l.b16 %v383
        %v1337 = vunpack.c.h.b16 %v383
        %v1338 = vunpack.c.l.b16 %v384
        %v1339 = vunpack.c.h.b16 %v384
        %v1340 = vunpack.c.l.b16 %v385
        %v1341 = vunpack.c.h.b16 %v385
        %v1342 = vunpack.c.l.b16 %v386
        %v1343 = vunpack.c.h.b16 %v386
        %v1344 = vunpack.c.l.b16 %v387
        %v1345 = vunpack.c.h.b16 %v387
        %v1346 = vunpack.c.l.b16 %v388
        %v1347 = vunpack.c.h.b16 %v388
        %v1348 = vunpack.c.l.b16 %v389
        %v1349 = vunpack.c.h.b16 %v389
        %v1350 = vunpack.c.l.b16 %v390
        %v1351 = vunpack.c.h.b16 %v390
        %v1352 = vunpack.c.l.b16 %v391
        %v1353 = vunpack.c.h.b16 %v391
        %v1354 = vunpack.c.l.b16 %v392
        %v1355 = vunpack.c.h.b16 %v392
        %v1356 = vunpack.c.l.b16 %v393
        %v1357 = vunpack.c.h.b16 %v393
        %v1358 = vunpack.c.l.b16 %v394
        %v1359 = vunpack.c.h.b16 %v394
        %v1360 = vunpack.c.l.b16 %v395
        %v1361 = vunpack.c.h.b16 %v395
        %v1362 = vunpack.c.l.b16 %v396
        %v1363 = vunpack.c.h.b16 %v396
        %v1364 = vunpack.c.l.b16 %v397
        %v1365 = vunpack.c.h.b16 %v397
        %v1366 = vunpack.c.l.b16 %v398
        %v1367 = vunpack.c.h.b16 %v398
        %v1368 = vunpack.c.l.b16 %v399
        %v1369 = vunpack.c.h.b16 %v399
        %v1370 = vunpack.c.l.b16 %v400
        %v1371 = vunpack.c.h.b16 %v400
        %v1372 = vunpack.c.l.b16 %v401
        %v1373 = vunpack.c.h.b16 %v401
        %v1374 = vunpack.c.l.b16 %v402
        %v1375 = vunpack.c.h.b16 %v402
        %v1376 = vunpack.c.l.b16 %v403
        %v1377 = vunpack.c.h.b16 %v403
        %v1378 = vunpack.c.l.b16 %v404
        %v1379 = vunpack.c.h.b16 %v404
        %v1380 = vunpack.c.l.b16 %v405
        %v1381 = vunpack.c.h.b16 %v405
        %v1382 = vunpack.c.l.b16 %v406
        %v1383 = vunpack.c.h.b16 %v406
        %v1384 = vunpack.c.l.b16 %v407
        %v1385 = vunpack.c.h.b16 %v407
        %v1386 = vunpack.c.l.b16 %v408
        %v1387 = vunpack.c.h.b16 %v408
        %v1388 = vunpack.c.l.b16 %v409
        %v1389 = vunpack.c.h.b16 %v409
        %v1390 = vunpack.c.l.b16 %v410
        %v1391 = vunpack.c.h.b16 %v410
        %v1392 = vunpack.c.l.b16 %v411
        %v1393 = vunpack.c.h.b16 %v411
        %v1394 = vunpack.c.l.b16 %v412
        %v1395 = vunpack.c.h.b16 %v412
        %v1396 = vunpack.c.l.b16 %v413
        %v1397 = vunpack.c.h.b16 %v413
        %v1398 = vunpack.c.l.b16 %v414
        %v1399 = vunpack.c.h.b16 %v414
        %v1400 = vunpack.c.l.b16 %v415
        %v1401 = vunpack.c.h.b16 %v415
        %v1402 = vunpack.c.l.b16 %v416
        %v1403 = vunpack.c.h.b16 %v416
        %v1404 = vunpack.c.l.b16 %v417
        %v1405 = vunpack.c.h.b16 %v417
        %v1406 = vunpack.c.l.b16 %v418
        %v1407 = vunpack.c.h.b16 %v418
        %v1408 = vunpack.c.l.b16 %v419
        %v1409 = vunpack.c.h.b16 %v419
        %v1410 = vunpack.c.l.b16 %v420
        %v1411 = vunpack.c.h.b16 %v420
        %v1412 = vunpack.c.l.b16 %v421
        %v1413 = vunpack.c.h.b16 %v421
        %v1414 = vunpack.c.l.b16 %v422
        %v1415 = vunpack.c.h.b16 %v422
        %v1416 = vunpack.c.l.b16 %v423
        %v1417 = vunpack.c.h.b16 %v423
        %v1418 = vunpack.c.l.b16 %v424
        %v1419 = vunpack.c.h.b16 %v424
        %v1420 = vunpack.c.l.b16 %v425
        %v1421 = vunpack.c.h.b16 %v425
        %v1422 = vunpack.c.l.b16 %v426
        %v1423 = vunpack.c.h.b16 %v426
        %v1424 = vunpack.c.l.b16 %v427
        %v1425 = vunpack.c.h.b16 %v427
        %v1426 = vunpack.c.l.b16 %v428
        %v1427 = vunpack.c.h.b16 %v428
        %v1428 = vunpack.c.l.b16 %v429
        %v1429 = vunpack.c.h.b16 %v429
        %v1430 = vunpack.c.l.b16 %v430
        %v1431 = vunpack.c.h.b16 %v430
        %v1432 = vunpack.c.l.b16 %v431
        %v1433 = vunpack.c.h.b16 %v431
        %v1434 = vunpack.c.l.b16 %v432
        %v1435 = vunpack.c.h.b16 %v432
        %v1436 = vunpack.c.l.b16 %v433
        %v1437 = vunpack.c.h.b16 %v433
        %v1438 = vunpack.c.l.b16 %v434
        %v1439 = vunpack.c.h.b16 %v434
        %v1440 = vunpack.c.l.b16 %v435
        %v1441 = vunpack.c.h.b16 %v435
        %v1442 = vunpack.c.l.b16 %v436
        %v1443 = vunpack.c.h.b16 %v436
        %v1444 = vunpack.c.l.b16 %v437
        %v1445 = vunpack.c.h.b16 %v437
        %v1446 = vunpack.c.l.b16 %v438
        %v1447 = vunpack.c.h.b16 %v438
        %v1448 = vunpack.c.l.b16 %v439
        %v1449 = vunpack.c.h.b16 %v439
        %v1450 = vunpack.c.l.b16 %v440
        %v1451 = vunpack.c.h.b16 %v440
        %v1452 = vunpack.c.l.b16 %v441
        %v1453 = vunpack.c.h.b16 %v441
        %v1454 = vunpack.c.l.b16 %v442
        %v1455 = vunpack.c.h.b16 %v442
        %v1456 = vunpack.c.l.b16 %v443
        %v1457 = vunpack.c.h.b16 %v443
        %v1458 = vunpack.c.l.b16 %v444
        %v1459 = vunpack.c.h.b16 %v444
        %v1460 = vunpack.c.l.b16 %v445
        %v1461 = vunpack.c.h.b16 %v445
        %v1462 = vunpack.c.l.b16 %v446
        %v1463 = vunpack.c.h.b16 %v446
        %v1464 = vunpack.c.l.b16 %v447
        %v1465 = vunpack.c.h.b16 %v447
        %v1466 = vunpack.c.l.b16 %v448
        %v1467 = vunpack.c.h.b16 %v448
        %v1468 = vunpack.c.l.b16 %v449
        %v1469 = vunpack.c.h.b16 %v449
        %v1470 = vunpack.c.l.b16 %v450
        %v1471 = vunpack.c.h.b16 %v450
        %v1472 = vunpack.c.l.b16 %v451
        %v1473 = vunpack.c.h.b16 %v451
        %v1474 = vunpack.c.l.b16 %v452
        %v1475 = vunpack.c.h.b16 %v452
        %v1476 = vunpack.c.l.b16 %v453
        %v1477 = vunpack.c.h.b16 %v453
        %v1478 = vunpack.c.l.b16 %v454
        %v1479 = vunpack.c.h.b16 %v454
        %v1480 = vunpack.c.l.b16 %v455
        %v1481 = vunpack.c.h.b16 %v455
        %v1482 = vunpack.c.l.b16 %v456
        %v1483 = vunpack.c.h.b16 %v456
        %v1484 = vunpack.c.l.b16 %v457
        %v1485 = vunpack.c.h.b16 %v457
        %v1486 = vunpack.c.l.b16 %v458
        %v1487 = vunpack.c.h.b16 %v458
        %v1488 = vunpack.c.l.b16 %v459
        %v1489 = vunpack.c.h.b16 %v459
        %v1490 = vunpack.c.l.b16 %v460
        %v1491 = vunpack.c.h.b16 %v460
        %v1492 = vunpack.c.l.b16 %v461
        %v1493 = vunpack.c.h.b16 %v461
        %v1494 = vunpack.c.l.b16 %v462
        %v1495 = vunpack.c.h.b16 %v462
        %v1496 = vunpack.c.l.b16 %v463
        %v1497 = vunpack.c.h.b16 %v463
        %v1498 = vunpack.c.l.b16 %v464
        %v1499 = vunpack.c.h.b16 %v464
        %v1500 = vunpack.c.l.b16 %v465
        %v1501 = vunpack.c.h.b16 %v465
        %v1502 = vunpack.c.l.b16 %v466
        %v1503 = vunpack.c.h.b16 %v466
        %v1504 = vunpack.c.l.b16 %v467
        %v1505 = vunpack.c.h.b16 %v467
        %v1506 = vunpack.c.l.b16 %v468
        %v1507 = vunpack.c.h.b16 %v468
        %v1508 = vunpack.c.l.b16 %v469
        %v1509 = vunpack.c.h.b16 %v469
        %v1510 = vunpack.c.l.b16 %v470
        %v1511 = vunpack.c.h.b16 %v470
        %v1512 = vunpack.c.l.b16 %v471
        %v1513 = vunpack.c.h.b16 %v471
        %v1514 = vunpack.c.l.b16 %v472
        %v1515 = vunpack.c.h.b16 %v472
        %v1516 = vunpack.c.l.b16 %v473
        %v1517 = vunpack.c.h.b16 %v473
        %v1518 = vunpack.c.l.b16 %v474
        %v1519 = vunpack.c.h.b16 %v474
        %v1520 = vunpack.c.l.b16 %v475
        %v1521 = vunpack.c.h.b16 %v475
        %v1522 = vunpack.c.l.b16 %v476
        %v1523 = vunpack.c.h.b16 %v476
        %v1524 = vunpack.c.l.b16 %v477
        %v1525 = vunpack.c.h.b16 %v477
        %v1526 = vunpack.c.l.b16 %v478
        %v1527 = vunpack.c.h.b16 %v478
        %v1528 = vunpack.c.l.b16 %v479
        %v1529 = vunpack.c.h.b16 %v479
        %v1530 = vunpack.c.l.b16 %v480
        %v1531 = vunpack.c.h.b16 %v480
        %v1532 = vunpack.c.l.b16 %v481
        %v1533 = vunpack.c.h.b16 %v481
        %v1534 = vunpack.c.l.b16 %v482
        %v1535 = vunpack.c.h.b16 %v482
        %v1536 = vunpack.c.l.b16 %v483
        %v1537 = vunpack.c.h.b16 %v483
        %v1538 = vunpack.c.l.b16 %v484
        %v1539 = vunpack.c.h.b16 %v484
        %v1540 = vunpack.c.l.b16 %v485
        %v1541 = vunpack.c.h.b16 %v485
        %v1542 = vunpack.c.l.b16 %v486
        %v1543 = vunpack.c.h.b16 %v486
        %v1544 = vunpack.c.l.b16 %v487
        %v1545 = vunpack.c.h.b16 %v487
        %v1546 = vunpack.c.l.b16 %v488
        %v1547 = vunpack.c.h.b16 %v488
        %v1548 = vunpack.c.l.b16 %v489
        %v1549 = vunpack.c.h.b16 %v489
        %v1550 = vunpack.c.l.b16 %v490
        %v1551 = vunpack.c.h.b16 %v490
        %v1552 = vunpack.c.l.b16 %v491
        %v1553 = vunpack.c.h.b16 %v491
        %v1554 = vunpack.c.l.b16 %v492
        %v1555 = vunpack.c.h.b16 %v492
        %v1556 = vunpack.c.l.b16 %v493
        %v1557 = vunpack.c.h.b16 %v493
        %v1558 = vunpack.c.l.b16 %v494
        %v1559 = vunpack.c.h.b16 %v494
        %v1560 = vunpack.c.l.b16 %v495
        %v1561 = vunpack.c.h.b16 %v495
        %v1562 = vunpack.c.l.b16 %v496
        %v1563 = vunpack.c.h.b16 %v496
        %v1564 = vunpack.c.l.b16 %v497
        %v1565 = vunpack.c.h.b16 %v497
        %v1566 = vunpack.c.l.b16 %v498
        %v1567 = vunpack.c.h.b16 %v498
        %v1568 = vunpack.c.l.b16 %v499
        %v1569 = vunpack.c.h.b16 %v499
        %v1570 = vunpack.c.l.b16 %v500
        %v1571 = vunpack.c.h.b16 %v500
        %v1572 = vunpack.c.l.b16 %v501
        %v1573 = vunpack.c.h.b16 %v501
        %v1574 = vunpack.c.l.b16 %v502
        %v1575 = vunpack.c.h.b16 %v502
        %v1576 = vunpack.c.l.b16 %v503
        %v1577 = vunpack.c.h.b16 %v503
        %v1578 = vunpack.c.l.b16 %v504
        %v1579 = vunpack.c.h.b16 %v504
        %v1580 = vunpack.c.l.b16 %v505
        %v1581 = vunpack.c.h.b16 %v505
        %v1582 = vunpack.c.l.b16 %v506
        %v1583 = vunpack.c.h.b16 %v506
        %v1584 = vunpack.c.l.b16 %v507
        %v1585 = vunpack.c.h.b16 %v507
        %v1586 = vunpack.c.l.b16 %v508
        %v1587 = vunpack.c.h.b16 %v508
        %v1588 = vunpack.c.l.b16 %v509
        %v1589 = vunpack.c.h.b16 %v509
        %v1590 = vunpack.c.l.b16 %v510
        %v1591 = vunpack.c.h.b16 %v510
        %v1592 = vunpack.c.l.b16 %v511
        %v1593 = vunpack.c.h.b16 %v511
        %v1594 = vunpack.c.l.b16 %v512
        %v1595 = vunpack.c.h.b16 %v512
        %v1596 = vunpack.c.l.b16 %v513
        %v1597 = vunpack.c.h.b16 %v513
        %v1598 = vunpack.c.l.b16 %v514
        %v1599 = vunpack.c.h.b16 %v514
        %v1600 = vunpack.c.l.b16 %v515
        %v1601 = vunpack.c.h.b16 %v515
        %v1602 = vunpack.c.l.b16 %v516
        %v1603 = vunpack.c.h.b16 %v516
        %v1604 = vunpack.c.l.b16 %v517
        %v1605 = vunpack.c.h.b16 %v517
        %v1606 = vunpack.c.l.b16 %v518
        %v1607 = vunpack.c.h.b16 %v518
        %v1608 = vunpack.c.l.b16 %v519
        %v1609 = vunpack.c.h.b16 %v519
        %v1610 = vunpack.c.l.b16 %v520
        %v1611 = vunpack.c.h.b16 %v520
        %v1612 = vunpack.c.l.b16 %v521
        %v1613 = vunpack.c.h.b16 %v521
        %v1614 = vunpack.c.l.b16 %v522
        %v1615 = vunpack.c.h.b16 %v522
        %v1616 = vunpack.c.l.b16 %v523
        %v1617 = vunpack.c.h.b16 %v523
        %v1618 = vunpack.c.l.b16 %v524
        %v1619 = vunpack.c.h.b16 %v524
        %v1620 = vunpack.c.l.b16 %v525
        %v1621 = vunpack.c.h.b16 %v525
        %v1622 = vunpack.c.l.b16 %v526
        %v1623 = vunpack.c.h.b16 %v526
        %v1624 = vunpack.c.l.b16 %v527
        %v1625 = vunpack.c.h.b16 %v527
        %v1626 = vunpack.c.l.b16 %v528
        %v1627 = vunpack.c.h.b16 %v528
        %v1628 = vunpack.c.l.b16 %v529
        %v1629 = vunpack.c.h.b16 %v529
        %v1630 = vunpack.c.l.b16 %v530
        %v1631 = vunpack.c.h.b16 %v530
        %v1632 = vunpack.c.l.b16 %v531
        %v1633 = vunpack.c.h.b16 %v531
        %v1634 = vunpack.c.l.b16 %v532
        %v1635 = vunpack.c.h.b16 %v532
        %v1636 = vunpack.c.l.b16 %v533
        %v1637 = vunpack.c.h.b16 %v533
        %v1638 = vunpack.c.l.b16 %v534
        %v1639 = vunpack.c.h.b16 %v534
        %v1640 = vunpack.c.l.b16 %v535
        %v1641 = vunpack.c.h.b16 %v535
        %v1642 = vunpack.c.l.b16 %v536
        %v1643 = vunpack.c.h.b16 %v536
        %v1644 = vunpack.c.l.b16 %v537
        %v1645 = vunpack.c.h.b16 %v537
        %v1646 = vunpack.c.l.b16 %v538
        %v1647 = vunpack.c.h.b16 %v538
        %v1648 = vunpack.c.l.b16 %v539
        %v1649 = vunpack.c.h.b16 %v539
        %v1650 = vunpack.c.l.b16 %v540
        %v1651 = vunpack.c.h.b16 %v540
        %v1652 = vunpack.c.l.b16 %v541
        %v1653 = vunpack.c.h.b16 %v541
        %v1654 = vunpack.c.l.b16 %v542
        %v1655 = vunpack.c.h.b16 %v542
        %v1656 = vunpack.c.l.b16 %v543
        %v1657 = vunpack.c.h.b16 %v543
        %v1658 = vunpack.c.l.b16 %v544
        %v1659 = vunpack.c.h.b16 %v544
        %v1660 = vunpack.c.l.b16 %v545
        %v1661 = vunpack.c.h.b16 %v545
        %v1662 = vunpack.c.l.b16 %v546
        %v1663 = vunpack.c.h.b16 %v546
        %v1664 = vunpack.c.l.b16 %v547
        %v1665 = vunpack.c.h.b16 %v547
        %v1666 = vunpack.c.l.b16 %v548
        %v1667 = vunpack.c.h.b16 %v548
        %v1668 = vunpack.c.l.b16 %v549
        %v1669 = vunpack.c.h.b16 %v549
        %v1670 = vunpack.c.l.b16 %v550
        %v1671 = vunpack.c.h.b16 %v550
        %v1672 = vunpack.c.l.b16 %v551
        %v1673 = vunpack.c.h.b16 %v551
        %v1674 = vunpack.c.l.b16 %v552
        %v1675 = vunpack.c.h.b16 %v552
        %v1676 = vunpack.c.l.b16 %v553
        %v1677 = vunpack.c.h.b16 %v553
        %v1678 = vunpack.c.l.b16 %v554
        %v1679 = vunpack.c.h.b16 %v554
        %v1680 = vunpack.c.l.b16 %v555
        %v1681 = vunpack.c.h.b16 %v555
        %v1682 = vunpack.c.l.b16 %v556
        %v1683 = vunpack.c.h.b16 %v556
        %v1684 = vunpack.c.l.b16 %v557
        %v1685 = vunpack.c.h.b16 %v557
        %v1686 = vunpack.c.l.b16 %v558
        %v1687 = vunpack.c.h.b16 %v558
        %v1688 = vunpack.c.l.b16 %v559
        %v1689 = vunpack.c.h.b16 %v559
        %v1690 = vunpack.c.l.b16 %v560
        %v1691 = vunpack.c.h.b16 %v560
        %v1692 = vunpack.c.l.b16 %v561
        %v1693 = vunpack.c.h.b16 %v561
        %v1694 = vunpack.c.l.b16 %v562
        %v1695 = vunpack.c.h.b16 %v562
        %v1696 = vunpack.c.l.b16 %v563
        %v1697 = vunpack.c.h.b16 %v563
        %v1698 = vunpack.c.l.b16 %v564
        %v1699 = vunpack.c.h.b16 %v564
        %v1700 = vunpack.c.l.b16 %v565
        %v1701 = vunpack.c.h.b16 %v565
        %v1702 = vunpack.c.l.b16 %v566
        %v1703 = vunpack.c.h.b16 %v566
        %v1704 = vunpack.c.l.b16 %v567
        %v1705 = vunpack.c.h.b16 %v567
        %v1706 = vunpack.c.l.b16 %v568
        %v1707 = vunpack.c.h.b16 %v568
        %v1708 = vunpack.c.l.b16 %v569
        %v1709 = vunpack.c.h.b16 %v569
        %v1710 = vunpack.c.l.b16 %v570
        %v1711 = vunpack.c.h.b16 %v570
        %v1712 = vunpack.c.l.b16 %v571
        %v1713 = vunpack.c.h.b16 %v571
        %v1714 = vunpack.c.l.b16 %v572
        %v1715 = vunpack.c.h.b16 %v572
        %v1716 = vunpack.c.l.b16 %v573
        %v1717 = vunpack.c.h.b16 %v573
        %v1718 = vunpack.c.l.b16 %v574
        %v1719 = vunpack.c.h.b16 %v574
        %v1720 = vunpack.c.l.b16 %v575
        %v1721 = vunpack.c.h.b16 %v575
        %v1722 = vunpack.c.l.b16 %v576
        %v1723 = vunpack.c.h.b16 %v576
        %v1724 = vunpack.c.l.b16 %v577
        %v1725 = vunpack.c.h.b16 %v577
        %v1726 = vunpack.c.l.b16 %v578
        %v1727 = vunpack.c.h.b16 %v578
        %v1728 = vunpack.c.l.b16 %v579
        %v1729 = vunpack.c.h.b16 %v579
        %v1730 = vunpack.c.l.b16 %v580
        %v1731 = vunpack.c.h.b16 %v580
        %v1732 = vunpack.c.l.b16 %v581
        %v1733 = vunpack.c.h.b16 %v581
        %v1734 = vunpack.c.l.b16 %v582
        %v1735 = vunpack.c.h.b16 %v582
        %v1736 = vunpack.c.l.b16 %v583
        %v1737 = vunpack.c.h.b16 %v583
        %v1738 = vunpack.c.l.b16 %v584
        %v1739 = vunpack.c.h.b16 %v584
        %v1740 = vunpack.c.l.b16 %v585
        %v1741 = vunpack.c.h.b16 %v585
        %v1742 = vunpack.c.l.b16 %v586
        %v1743 = vunpack.c.h.b16 %v586
        %v1744 = vunpack.c.l.b16 %v587
        %v1745 = vunpack.c.h.b16 %v587
        %v1746 = vunpack.c.l.b16 %v588
        %v1747 = vunpack.c.h.b16 %v588
        %v1748 = vunpack.c.l.b16 %v589
        %v1749 = vunpack.c.h.b16 %v589
        %v1750 = vunpack.c.l.b16 %v590
        %v1751 = vunpack.c.h.b16 %v590
        %v1752 = vunpack.c.l.b16 %v591
        %v1753 = vunpack.c.h.b16 %v591
        %v1754 = vunpack.c.l.b16 %v592
        %v1755 = vunpack.c.h.b16 %v592
        %v1756 = vunpack.c.l.b16 %v593
        %v1757 = vunpack.c.h.b16 %v593
        %v1758 = vunpack.c.l.b16 %v594
        %v1759 = vunpack.c.h.b16 %v594
        %v1760 = vunpack.c.l.b16 %v595
        %v1761 = vunpack.c.h.b16 %v595
        %v1762 = vunpack.c.l.b16 %v596
        %v1763 = vunpack.c.h.b16 %v596
        %v1764 = vunpack.c.l.b16 %v597
        %v1765 = vunpack.c.h.b16 %v597
        %v1766 = vunpack.c.l.b16 %v598
        %v1767 = vunpack.c.h.b16 %v598
        %v1768 = vunpack.c.l.b16 %v599
        %v1769 = vunpack.c.h.b16 %v599
        %v1770 = vunpack.c.l.b16 %v600
        %v1771 = vunpack.c.h.b16 %v600
        %v1772 = vunpack.c.l.b16 %v601
        %v1773 = vunpack.c.h.b16 %v601
        %v1774 = vunpack.c.l.b16 %v602
        %v1775 = vunpack.c.h.b16 %v602
        %v1776 = vunpack.c.l.b16 %v603
        %v1777 = vunpack.c.h.b16 %v603
        %v1778 = vunpack.c.l.b16 %v604
        %v1779 = vunpack.c.h.b16 %v604
        %v1780 = vunpack.c.l.b16 %v605
        %v1781 = vunpack.c.h.b16 %v605
        %v1782 = vunpack.c.l.b16 %v606
        %v1783 = vunpack.c.h.b16 %v606
        %v1784 = vunpack.c.l.b16 %v607
        %v1785 = vunpack.c.h.b16 %v607
        %v1786 = vunpack.c.l.b16 %v608
        %v1787 = vunpack.c.h.b16 %v608
        %v1788 = vunpack.c.l.b16 %v609
        %v1789 = vunpack.c.h.b16 %v609
        %v1790 = vunpack.c.l.b16 %v610
        %v1791 = vunpack.c.h.b16 %v610
        %v1792 = vunpack.c.l.b16 %v611
        %v1793 = vunpack.c.h.b16 %v611
        %v1794 = vunpack.c.l.b16 %v612
        %v1795 = vunpack.c.h.b16 %v612
        %v1796 = vunpack.c.l.b16 %v613
        %v1797 = vunpack.c.h.b16 %v613
        %v1798 = vunpack.c.l.b16 %v614
        %v1799 = vunpack.c.h.b16 %v614
        %v1800 = vunpack.c.l.b16 %v615
        %v1801 = vunpack.c.h.b16 %v615
        %v1802 = vunpack.c.l.b16 %v616
        %v1803 = vunpack.c.h.b16 %v616
        %v1804 = vunpack.c.l.b16 %v617
        %v1805 = vunpack.c.h.b16 %v617
        %v1806 = vunpack.c.l.b16 %v618
        %v1807 = vunpack.c.h.b16 %v618
        %v1808 = vunpack.c.l.b16 %v619
        %v1809 = vunpack.c.h.b16 %v619
        %v1810 = vunpack.c.l.b16 %v620
        %v1811 = vunpack.c.h.b16 %v620
        %v1812 = vunpack.c.l.b16 %v621
        %v1813 = vunpack.c.h.b16 %v621
        %v1814 = vunpack.c.l.b16 %v622
        %v1815 = vunpack.c.h.b16 %v622
        %v1816 = vunpack.c.l.b16 %v623
        %v1817 = vunpack.c.h.b16 %v623
        %v1818 = vunpack.c.l.b16 %v624
        %v1819 = vunpack.c.h.b16 %v624
        %v1820 = vunpack.c.l.b16 %v625
        %v1821 = vunpack.c.h.b16 %v625
        %v1822 = vunpack.c.l.b16 %v626
        %v1823 = vunpack.c.h.b16 %v626
        %v1824 = vunpack.c.l.b16 %v627
        %v1825 = vunpack.c.h.b16 %v627
        %v1826 = vunpack.c.l.b16 %v628
        %v1827 = vunpack.c.h.b16 %v628
        %v1828 = vunpack.c.l.b16 %v629
        %v1829 = vunpack.c.h.b16 %v629
        %v1830 = vunpack.c.l.b16 %v630
        %v1831 = vunpack.c.h.b16 %v630
        %v1832 = vunpack.c.l.b16 %v631
        %v1833 = vunpack.c.h.b16 %v631
        %v1834 = vunpack.c.l.b16 %v632
        %v1835 = vunpack.c.h.b16 %v632
        %v1836 = vunpack.c.l.b16 %v633
        %v1837 = vunpack.c.h.b16 %v633
        %v1838 = vunpack.c.l.b16 %v634
        %v1839 = vunpack.c.h.b16 %v634
        %v1840 = vunpack.c.l.b16 %v635
        %v1841 = vunpack.c.h.b16 %v635
        %v1842 = vunpack.c.l.b16 %v636
        %v1843 = vunpack.c.h.b16 %v636
        %v1844 = vunpack.c.l.b16 %v637
        %v1845 = vunpack.c.h.b16 %v637
        %v1846 = vunpack.c.l.b16 %v638
        %v1847 = vunpack.c.h.b16 %v638
        %v1848 = vunpack.c.l.b16 %v639
        %v1849 = vunpack.c.h.b16 %v639
        %v1850 = vunpack.c.l.b16 %v640
        %v1851 = vunpack.c.h.b16 %v640
        %v1852 = vunpack.c.l.b16 %v641
        %v1853 = vunpack.c.h.b16 %v641
        %v1854 = vunpack.c.l.b16 %v642
        %v1855 = vunpack.c.h.b16 %v642
        %v1856 = vunpack.c.l.b16 %v643
        %v1857 = vunpack.c.h.b16 %v643
        %v1858 = vunpack.c.l.b16 %v644
        %v1859 = vunpack.c.h.b16 %v644
        %v1860 = vunpack.c.l.b16 %v645
        %v1861 = vunpack.c.h.b16 %v645
        %v1862 = vunpack.c.l.b16 %v646
        %v1863 = vunpack.c.h.b16 %v646
        %v1864 = vunpack.c.l.b16 %v647
        %v1865 = vunpack.c.h.b16 %v647
        %v1866 = vunpack.c.l.b16 %v648
        %v1867 = vunpack.c.h.b16 %v648
        %v1868 = vunpack.c.l.b16 %v649
        %v1869 = vunpack.c.h.b16 %v649
        %v1870 = vunpack.c.l.b16 %v650
        %v1871 = vunpack.c.h.b16 %v650
        %v1872 = vunpack.c.l.b16 %v651
        %v1873 = vunpack.c.h.b16 %v651
        %v1874 = vunpack.c.l.b16 %v652
        %v1875 = vunpack.c.h.b16 %v652
        %v1876 = vunpack.c.l.b16 %v653
        %v1877 = vunpack.c.h.b16 %v653
        %v1878 = vunpack.c.l.b16 %v654
        %v1879 = vunpack.c.h.b16 %v654
        %v1880 = vunpack.c.l.b16 %v655
        %v1881 = vunpack.c.h.b16 %v655
        %v1882 = vunpack.c.l.b16 %v656
        %v1883 = vunpack.c.h.b16 %v656
        %v1884 = vunpack.c.l.b16 %v657
        %v1885 = vunpack.c.h.b16 %v657
        %v1886 = vunpack.c.l.b16 %v658
        %v1887 = vunpack.c.h.b16 %v658
        %v1888 = vunpack.c.l.b16 %v659
        %v1889 = vunpack.c.h.b16 %v659
        %v1890 = vunpack.c.l.b16 %v660
        %v1891 = vunpack.c.h.b16 %v660
        %v1892 = vunpack.c.l.b16 %v661
        %v1893 = vunpack.c.h.b16 %v661
        %v1894 = vunpack.c.l.b16 %v662
        %v1895 = vunpack.c.h.b16 %v662
        %v1896 = vunpack.c.l.b16 %v663
        %v1897 = vunpack.c.h.b16 %v663
        %v1898 = vunpack.c.l.b16 %v664
        %v1899 = vunpack.c.h.b16 %v664
        %v1900 = vunpack.c.l.b16 %v665
        %v1901 = vunpack.c.h.b16 %v665
        %v1902 = vunpack.c.l.b16 %v666
        %v1903 = vunpack.c.h.b16 %v666
        %v1904 = vunpack.c.l.b16 %v667
        %v1905 = vunpack.c.h.b16 %v667
        %v1906 = vunpack.c.l.b16 %v668
        %v1907 = vunpack.c.h.b16 %v668
        %v1908 = vunpack.c.l.b16 %v669
        %v1909 = vunpack.c.h.b16 %v669
        %v1910 = vunpack.c.l.b16 %v670
        %v1911 = vunpack.c.h.b16 %v670
        %v1912 = vunpack.c.l.b16 %v671
        %v1913 = vunpack.c.h.b16 %v671
        %v1914 = vunpack.c.l.b16 %v672
        %v1915 = vunpack.c.h.b16 %v672
        %v1916 = vunpack.c.l.b16 %v673
        %v1917 = vunpack.c.h.b16 %v673
        %v1918 = vunpack.c.l.b16 %v674
        %v1919 = vunpack.c.h.b16 %v674
        %v1920 = vunpack.c.l.b16 %v675
        %v1921 = vunpack.c.h.b16 %v675
        %v1922 = vunpack.c.l.b16 %v676
        %v1923 = vunpack.c.h.b16 %v676
        %v1924 = vunpack.c.l.b16 %v677
        %v1925 = vunpack.c.h.b16 %v677
        %v1926 = vunpack.c.l.b16 %v678
        %v1927 = vunpack.c.h.b16 %v678
        %v1928 = vunpack.c.l.b16 %v679
        %v1929 = vunpack.c.h.b16 %v679
        %v1930 = vunpack.c.l.b16 %v680
        %v1931 = vunpack.c.h.b16 %v680
        %v1932 = vunpack.c.l.b16 %v681
        %v1933 = vunpack.c.h.b16 %v681
        %v1934 = vunpack.c.l.b16 %v682
        %v1935 = vunpack.c.h.b16 %v682
        %v1936 = vunpack.c.l.b16 %v683
        %v1937 = vunpack.c.h.b16 %v683
        %v1938 = vunpack.c.l.b16 %v684
        %v1939 = vunpack.c.h.b16 %v684
        %v1940 = vunpack.c.l.b16 %v685
        %v1941 = vunpack.c.h.b16 %v685
        %v1942 = vunpack.c.l.b16 %v686
        %v1943 = vunpack.c.h.b16 %v686
        %v1944 = vunpack.c.l.b16 %v687
        %v1945 = vunpack.c.h.b16 %v687
        %v1946 = vunpack.c.l.b16 %v688
        %v1947 = vunpack.c.h.b16 %v688
        %v1948 = vunpack.c.l.b16 %v689
        %v1949 = vunpack.c.h.b16 %v689
        %v1950 = vunpack.c.l.b16 %v690
        %v1951 = vunpack.c.h.b16 %v690
        %v1952 = vunpack.c.l.b16 %v691
        %v1953 = vunpack.c.h.b16 %v691
        %v1954 = vunpack.c.l.b16 %v692
        %v1955 = vunpack.c.h.b16 %v692
        %v1956 = vunpack.c.l.b16 %v693
        %v1957 = vunpack.c.h.b16 %v693
        %v1958 = vunpack.c.l.b16 %v694
        %v1959 = vunpack.c.h.b16 %v694
        %v1960 = vunpack.c.l.b16 %v695
        %v1961 = vunpack.c.h.b16 %v695
        %v1962 = vunpack.c.l.b16 %v696
        %v1963 = vunpack.c.h.b16 %v696
        %v1964 = vunpack.c.l.b16 %v697
        %v1965 = vunpack.c.h.b16 %v697
        %v1966 = vunpack.c.l.b16 %v698
        %v1967 = vunpack.c.h.b16 %v698
        %v1968 = vunpack.c.l.b16 %v699
        %v1969 = vunpack.c.h.b16 %v699
        %v1970 = vunpack.c.l.b16 %v700
        %v1971 = vunpack.c.h.b16 %v700
        %v1972 = vunpack.c.l.b16 %v701
        %v1973 = vunpack.c.h.b16 %v701
        %v1974 = vunpack.c.l.b16 %v702
        %v1975 = vunpack.c.h.b16 %v702
        %v1976 = vunpack.c.l.b16 %v703
        %v1977 = vunpack.c.h.b16 %v703
        %v1978 = vunpack.c.l.b16 %v704
        %v1979 = vunpack.c.h.b16 %v704
        %v1980 = vunpack.c.l.b16 %v705
        %v1981 = vunpack.c.h.b16 %v705
        %v1982 = vunpack.c.l.b16 %v706
        %v1983 = vunpack.c.h.b16 %v706
        %v1984 = vunpack.c.l.b16 %v707
        %v1985 = vunpack.c.h.b16 %v707
        %v1986 = vunpack.c.l.b16 %v708
        %v1987 = vunpack.c.h.b16 %v708
        %v1988 = vunpack.c.l.b16 %v709
        %v1989 = vunpack.c.h.b16 %v709
        %v1990 = vunpack.c.l.b16 %v710
        %v1991 = vunpack.c.h.b16 %v710
        %v1992 = vunpack.c.l.b16 %v711
        %v1993 = vunpack.c.h.b16 %v711
        %v1994 = vunpack.c.l.b16 %v712
        %v1995 = vunpack.c.h.b16 %v712
        %v1996 = vunpack.c.l.b16 %v713
        %v1997 = vunpack.c.h.b16 %v713
        %v1998 = vunpack.c.l.b16 %v714
        %v1999 = vunpack.c.h.b16 %v714
        %v2000 = vunpack.c.l.b16 %v715
        %v2001 = vunpack.c.h.b16 %v715
        %v2002 = vunpack.c.l.b16 %v716
        %v2003 = vunpack.c.h.b16 %v716
        %v2004 = vunpack.c.l.b16 %v717
        %v2005 = vunpack.c.h.b16 %v717
        %v2006 = vunpack.c.l.b16 %v718
        %v2007 = vunpack.c.h.b16 %v718
        %v2008 = vunpack.c.l.b16 %v719
        %v2009 = vunpack.c.h.b16 %v719
        %v2010 = vunpack.c.l.b16 %v720
        %v2011 = vunpack.c.h.b16 %v720
        %v2012 = vunpack.c.l.b16 %v721
        %v2013 = vunpack.c.h.b16 %v721
        %v2014 = vunpack.c.l.b16 %v722
        %v2015 = vunpack.c.h.b16 %v722
        %v2016 = vunpack.c.l.b16 %v723
        %v2017 = vunpack.c.h.b16 %v723
        %v2018 = vunpack.c.l.b16 %v724
        %v2019 = vunpack.c.h.b16 %v724
        %v2020 = vunpack.c.l.b16 %v725
        %v2021 = vunpack.c.h.b16 %v725
        %v2022 = vunpack.c.l.b16 %v726
        %v2023 = vunpack.c.h.b16 %v726
        %v2024 = vunpack.c.l.b16 %v727
        %v2025 = vunpack.c.h.b16 %v727
        %v2026 = vunpack.c.l.b16 %v728
        %v2027 = vunpack.c.h.b16 %v728
        %v2028 = vunpack.c.l.b16 %v729
        %v2029 = vunpack.c.h.b16 %v729
        %v2030 = vunpack.c.l.b16 %v730
        %v2031 = vunpack.c.h.b16 %v730
        %v2032 = vunpack.c.l.b16 %v731
        %v2033 = vunpack.c.h.b16 %v731
        %v2034 = vunpack.c.l.b16 %v732
        %v2035 = vunpack.c.h.b16 %v732
        %v2036 = vunpack.c.l.b16 %v733
        %v2037 = vunpack.c.h.b16 %v733
        %v2038 = vunpack.c.l.b16 %v734
        %v2039 = vunpack.c.h.b16 %v734
        %v2040 = vunpack.c.l.b16 %v735
        %v2041 = vunpack.c.h.b16 %v735
        %v2042 = vunpack.c.l.b16 %v736
        %v2043 = vunpack.c.h.b16 %v736
        %v2044 = vunpack.c.l.b16 %v737
        %v2045 = vunpack.c.h.b16 %v737
        %v2046 = vunpack.c.l.b16 %v738
        %v2047 = vunpack.c.h.b16 %v738
        %v2048 = vunpack.c.l.b16 %v739
        %v2049 = vunpack.c.h.b16 %v739
        %v2050 = vunpack.c.l.b16 %v740
        %v2051 = vunpack.c.h.b16 %v740
        %v2052 = vunpack.c.l.b16 %v741
        %v2053 = vunpack.c.h.b16 %v741
        %v2054 = vunpack.c.l.b16 %v742
        %v2055 = vunpack.c.h.b16 %v742
        %v2056 = vunpack.c.l.b16 %v743
        %v2057 = vunpack.c.h.b16 %v743
        %v2058 = vunpack.c.l.b16 %v744
        %v2059 = vunpack.c.h.b16 %v744
        %v2060 = vunpack.c.l.b16 %v745
        %v2061 = vunpack.c.h.b16 %v745
        %v2062 = vunpack.c.l.b16 %v746
        %v2063 = vunpack.c.h.b16 %v746
        %v2064 = vunpack.c.l.b16 %v747
        %v2065 = vunpack.c.h.b16 %v747
        %v2066 = vunpack.c.l.b16 %v748
        %v2067 = vunpack.c.h.b16 %v748
        %v2068 = vunpack.c.l.b16 %v749
        %v2069 = vunpack.c.h.b16 %v749
        %v2070 = vunpack.c.l.b16 %v750
        %v2071 = vunpack.c.h.b16 %v750
        %v2072 = vunpack.c.l.b16 %v751
        %v2073 = vunpack.c.h.b16 %v751
        %v2074 = vunpack.c.l.b16 %v752
        %v2075 = vunpack.c.h.b16 %v752
        %v2076 = vunpack.c.l.b16 %v753
        %v2077 = vunpack.c.h.b16 %v753
        %v2078 = vunpack.c.l.b16 %v754
        %v2079 = vunpack.c.h.b16 %v754
        %v2080 = vunpack.c.l.b16 %v755
        %v2081 = vunpack.c.h.b16 %v755
        %v2082 = vunpack.c.l.b16 %v756
        %v2083 = vunpack.c.h.b16 %v756
        %v2084 = vunpack.c.l.b16 %v757
        %v2085 = vunpack.c.h.b16 %v757
        %v2086 = vunpack.c.l.b16 %v758
        %v2087 = vunpack.c.h.b16 %v758
        %v2088 = vunpack.c.l.b16 %v759
        %v2089 = vunpack.c.h.b16 %v759
        %v2090 = vunpack.c.l.b16 %v760
        %v2091 = vunpack.c.h.b16 %v760
        %v2092 = vunpack.c.l.b16 %v761
        %v2093 = vunpack.c.h.b16 %v761
        %v2094 = vunpack.c.l.b16 %v762
        %v2095 = vunpack.c.h.b16 %v762
        %v2096 = vunpack.c.l.b16 %v763
        %v2097 = vunpack.c.h.b16 %v763
        %v2098 = vunpack.c.l.b16 %v764
        %v2099 = vunpack.c.h.b16 %v764
        %v2100 = vunpack.c.l.b16 %v765
        %v2101 = vunpack.c.h.b16 %v765
        %v2102 = vunpack.c.l.b16 %v766
        %v2103 = vunpack.c.h.b16 %v766
        %v2104 = vunpack.c.l.b16 %v767
        %v2105 = vunpack.c.h.b16 %v767
        %v2106 = vunpack.c.l.b16 %v768
        %v2107 = vunpack.c.h.b16 %v768
        %v2108 = vunpack.c.l.b16 %v769
        %v2109 = vunpack.c.h.b16 %v769
        %v2110 = vunpack.c.l.b16 %v770
        %v2111 = vunpack.c.h.b16 %v770
        %v2112 = vunpack.c.l.b16 %v771
        %v2113 = vunpack.c.h.b16 %v771
        %v2114 = vunpack.c.l.b16 %v772
        %v2115 = vunpack.c.h.b16 %v772
        %v2116 = vunpack.c.l.b16 %v773
        %v2117 = vunpack.c.h.b16 %v773
        %v2118 = vunpack.c.l.b16 %v774
        %v2119 = vunpack.c.h.b16 %v774
        %v2120 = vunpack.c.l.b16 %v775
        %v2121 = vunpack.c.h.b16 %v775
        %v2122 = vunpack.c.l.b16 %v776
        %v2123 = vunpack.c.h.b16 %v776
        %v2124 = vunpack.c.l.b16 %v777
        %v2125 = vunpack.c.h.b16 %v777
        %v2126 = vunpack.c.l.b16 %v778
        %v2127 = vunpack.c.h.b16 %v778
        %v2128 = vunpack.c.l.b16 %v779
        %v2129 = vunpack.c.h.b16 %v779
        %v2130 = vunpack.c.l.b16 %v780
        %v2131 = vunpack.c.h.b16 %v780
        %v2132 = vunpack.c.l.b16 %v781
        %v2133 = vunpack.c.h.b16 %v781
        %v2134 = vunpack.c.l.b16 %v782
        %v2135 = vunpack.c.h.b16 %v782
        %v2136 = vunpack.c.l.b16 %v783
        %v2137 = vunpack.c.h.b16 %v783
        %v2138 = vunpack.c.l.b16 %v784
        %v2139 = vunpack.c.h.b16 %v784
        %v2140 = vunpack.c.l.b16 %v785
        %v2141 = vunpack.c.h.b16 %v785
        %v2142 = vunpack.c.l.b16 %v786
        %v2143 = vunpack.c.h.b16 %v786
        %v2144 = vunpack.c.l.b16 %v787
        %v2145 = vunpack.c.h.b16 %v787
        %v2146 = vunpack.c.l.b16 %v788
        %v2147 = vunpack.c.h.b16 %v788
        %v2148 = vunpack.c.l.b16 %v789
        %v2149 = vunpack.c.h.b16 %v789
        %v2150 = vunpack.c.l.b16 %v790
        %v2151 = vunpack.c.h.b16 %v790
        %v2152 = vunpack.c.l.b16 %v791
        %v2153 = vunpack.c.h.b16 %v791
        %v2154 = vunpack.c.l.b16 %v792
        %v2155 = vunpack.c.h.b16 %v792
        %v2156 = vunpack.c.l.b16 %v793
        %v2157 = vunpack.c.h.b16 %v793
        %v2158 = vunpack.c.l.b16 %v794
        %v2159 = vunpack.c.h.b16 %v794
        %v2160 = vunpack.c.l.b16 %v795
        %v2161 = vunpack.c.h.b16 %v795
        %v2162 = vunpack.c.l.b16 %v796
        %v2163 = vunpack.c.h.b16 %v796
        %v2164 = vunpack.c.l.b16 %v797
        %v2165 = vunpack.c.h.b16 %v797
        %v2166 = vunpack.c.l.b16 %v798
        %v2167 = vunpack.c.h.b16 %v798
        %v2168 = vunpack.c.l.b16 %v799
        %v2169 = vunpack.c.h.b16 %v799
        %v2170 = vunpack.c.l.b16 %v800
        %v2171 = vunpack.c.h.b16 %v800
        %v2172 = vunpack.c.l.b16 %v801
        %v2173 = vunpack.c.h.b16 %v801
        %v2174 = vunpack.c.l.b16 %v802
        %v2175 = vunpack.c.h.b16 %v802
        %v2176 = vunpack.c.l.b16 %v803
        %v2177 = vunpack.c.h.b16 %v803
        %v2178 = vunpack.c.l.b16 %v804
        %v2179 = vunpack.c.h.b16 %v804
        %v2180 = vunpack.c.l.b16 %v805
        %v2181 = vunpack.c.h.b16 %v805
        %v2182 = vunpack.c.l.b16 %v806
        %v2183 = vunpack.c.h.b16 %v806
        %v2184 = vunpack.c.l.b16 %v807
        %v2185 = vunpack.c.h.b16 %v807
        %v2186 = vunpack.c.l.b16 %v808
        %v2187 = vunpack.c.h.b16 %v808
        %v2188 = vunpack.c.l.b16 %v809
        %v2189 = vunpack.c.h.b16 %v809
        %v2190 = vunpack.c.l.b16 %v810
        %v2191 = vunpack.c.h.b16 %v810
        %v2192 = vunpack.c.l.b16 %v811
        %v2193 = vunpack.c.h.b16 %v811
        %v2194 = vunpack.c.l.b16 %v812
        %v2195 = vunpack.c.h.b16 %v812
        %v2196 = vunpack.c.l.b16 %v813
        %v2197 = vunpack.c.h.b16 %v813
        %v2198 = vunpack.c.l.b16 %v814
        %v2199 = vunpack.c.h.b16 %v814
        %v2200 = vunpack.c.l.b16 %v815
        %v2201 = vunpack.c.h.b16 %v815
        %v2202 = vunpack.c.l.b16 %v816
        %v2203 = vunpack.c.h.b16 %v816
        %v2204 = vunpack.c.l.b16 %v817
        %v2205 = vunpack.c.h.b16 %v817
        %v2206 = vunpack.c.l.b16 %v818
        %v2207 = vunpack.c.h.b16 %v818
        %v2208 = vunpack.c.l.b16 %v819
        %v2209 = vunpack.c.h.b16 %v819
        %v2210 = vunpack.c.l.b16 %v820
        %v2211 = vunpack.c.h.b16 %v820
        %v2212 = vunpack.c.l.b16 %v821
        %v2213 = vunpack.c.h.b16 %v821
        %v2214 = vunpack.c.l.b16 %v822
        %v2215 = vunpack.c.h.b16 %v822
        %v2216 = vunpack.c.l.b16 %v823
        %v2217 = vunpack.c.h.b16 %v823
        %v2218 = vunpack.c.l.b16 %v824
        %v2219 = vunpack.c.h.b16 %v824
        %v2220 = vunpack.c.l.b16 %v825
        %v2221 = vunpack.c.h.b16 %v825
        %v2222 = vunpack.c.l.b16 %v826
        %v2223 = vunpack.c.h.b16 %v826
        %v2224 = vunpack.c.l.b16 %v827
        %v2225 = vunpack.c.h.b16 %v827
        %v2226 = vunpack.c.l.b16 %v828
        %v2227 = vunpack.c.h.b16 %v828
        %v2228 = vunpack.c.l.b16 %v829
        %v2229 = vunpack.c.h.b16 %v829
        %v2230 = vpack.c.b16 %v1342, %v1334
        %v2231 = vpack.c.b16 %v1343, %v1335
        %v2232 = vpack.c.b16 %v1344, %v1336
        %v2233 = vpack.c.b16 %v1345, %v1337
        %v2234 = vpack.c.b16 %v1346, %v1338
        %v2235 = vpack.c.b16 %v1347, %v1339
        %v2236 = vpack.c.b16 %v1348, %v1340
        %v2237 = vpack.c.b16 %v1349, %v1341
        %v2238 = vpack.c.b16 %v1358, %v1350
        %v2239 = vpack.c.b16 %v1359, %v1351
        %v2240 = vpack.c.b16 %v1360, %v1352
        %v2241 = vpack.c.b16 %v1361, %v1353
        %v2242 = vpack.c.b16 %v1362, %v1354
        %v2243 = vpack.c.b16 %v1363, %v1355
        %v2244 = vpack.c.b16 %v1364, %v1356
        %v2245 = vpack.c.b16 %v1365, %v1357
        %v2246 = vpack.c.b16 %v1374, %v1366
        %v2247 = vpack.c.b16 %v1375, %v1367
        %v2248 = vpack.c.b16 %v1376, %v1368
        %v2249 = vpack.c.b16 %v1377, %v1369
        %v2250 = vpack.c.b16 %v1378, %v1370
        %v2251 = vpack.c.b16 %v1379, %v1371
        %v2252 = vpack.c.b16 %v1380, %v1372
        %v2253 = vpack.c.b16 %v1381, %v1373
        %v2254 = vpack.c.b16 %v1390, %v1382
        %v2255 = vpack.c.b16 %v1391, %v1383
        %v2256 = vpack.c.b16 %v1392, %v1384
        %v2257 = vpack.c.b16 %v1393, %v1385
        %v2258 = vpack.c.b16 %v1394, %v1386
        %v2259 = vpack.c.b16 %v1395, %v1387
        %v2260 = vpack.c.b16 %v1396, %v1388
        %v2261 = vpack.c.b16 %v1397, %v1389
        %v2262 = vpack.c.b16 %v1406, %v1398
        %v2263 = vpack.c.b16 %v1407, %v1399
        %v2264 = vpack.c.b16 %v1408, %v1400
        %v2265 = vpack.c.b16 %v1409, %v1401
        %v2266 = vpack.c.b16 %v1410, %v1402
        %v2267 = vpack.c.b16 %v1411, %v1403
        %v2268 = vpack.c.b16 %v1412, %v1404
        %v2269 = vpack.c.b16 %v1413, %v1405
        %v2270 = vpack.c.b16 %v1422, %v1414
        %v2271 = vpack.c.b16 %v1423, %v1415
        %v2272 = vpack.c.b16 %v1424, %v1416
        %v2273 = vpack.c.b16 %v1425, %v1417
        %v2274 = vpack.c.b16 %v1426, %v1418
        %v2275 = vpack.c.b16 %v1427, %v1419
        %v2276 = vpack.c.b16 %v1428, %v1420
        %v2277 = vpack.c.b16 %v1429, %v1421
        %v2278 = vpack.c.b16 %v1438, %v1430
        %v2279 = vpack.c.b16 %v1439, %v1431
        %v2280 = vpack.c.b16 %v1440, %v1432
        %v2281 = vpack.c.b16 %v1441, %v1433
        %v2282 = vpack.c.b16 %v1442, %v1434
        %v2283 = vpack.c.b16 %v1443, %v1435
        %v2284 = vpack.c.b16 %v1444, %v1436
        %v2285 = vpack.c.b16 %v1445, %v1437
        %v2286 = vpack.c.b16 %v1454, %v1446
        %v2287 = vpack.c.b16 %v1455, %v1447
        %v2288 = vpack.c.b16 %v1456, %v1448
        %v2289 = vpack.c.b16 %v1457, %v1449
        %v2290 = vpack.c.b16 %v1458, %v1450
        %v2291 = vpack.c.b16 %v1459, %v1451
        %v2292 = vpack.c.b16 %v1460, %v1452
        %v2293 = vpack.c.b16 %v1461, %v1453
        %v2294 = vpack.c.b16 %v1470, %v1462
        %v2295 = vpack.c.b16 %v1471, %v1463
        %v2296 = vpack.c.b16 %v1472, %v1464
        %v2297 = vpack.c.b16 %v1473, %v1465
        %v2298 = vpack.c.b16 %v1474, %v1466
        %v2299 = vpack.c.b16 %v1475, %v1467
        %v2300 = vpack.c.b16 %v1476, %v1468
        %v2301 = vpack.c.b16 %v1477, %v1469
        %v2302 = vpack.c.b16 %v1486, %v1478
        %v2303 = vpack.c.b16 %v1487, %v1479
        %v2304 = vpack.c.b16 %v1488, %v1480
        %v2305 = vpack.c.b16 %v1489, %v1481
        %v2306 = vpack.c.b16 %v1490, %v1482
        %v2307 = vpack.c.b16 %v1491, %v1483
        %v2308 = vpack.c.b16 %v1492, %v1484
        %v2309 = vpack.c.b16 %v1493, %v1485
        %v2310 = vpack.c.b16 %v1502, %v1494
        %v2311 = vpack.c.b16 %v1503, %v1495
        %v2312 = vpack.c.b16 %v1504, %v1496
        %v2313 = vpack.c.b16 %v1505, %v1497
        %v2314 = vpack.c.b16 %v1506, %v1498
        %v2315 = vpack.c.b16 %v1507, %v1499
        %v2316 = vpack.c.b16 %v1508, %v1500
        %v2317 = vpack.c.b16 %v1509, %v1501
        %v2318 = vpack.c.b16 %v1518, %v1510
        %v2319 = vpack.c.b16 %v1519, %v1511
        %v2320 = vpack.c.b16 %v1520, %v1512
        %v2321 = vpack.c.b16 %v1521, %v1513
        %v2322 = vpack.c.b16 %v1522, %v1514
        %v2323 = vpack.c.b16 %v1523, %v1515
        %v2324 = vpack.c.b16 %v1524, %v1516
        %v2325 = vpack.c.b16 %v1525, %v1517
        %v2326 = vpack.c.b16 %v1534, %v1526
        %v2327 = vpack.c.b16 %v1535, %v1527
        %v2328 = vpack.c.b16 %v1536, %v1528
        %v2329 = vpack.c.b16 %v1537, %v1529
        %v2330 = vpack.c.b16 %v1538, %v1530
        %v2331 = vpack.c.b16 %v1539, %v1531
        %v2332 = vpack.c.b16 %v1540, %v1532
        %v2333 = vpack.c.b16 %v1541, %v1533
        %v2334 = vpack.c.b16 %v1550, %v1542
        %v2335 = vpack.c.b16 %v1551, %v1543
        %v2336 = vpack.c.b16 %v1552, %v1544
        %v2337 = vpack.c.b16 %v1553, %v1545
        %v2338 = vpack.c.b16 %v1554, %v1546
        %v2339 = vpack.c.b16 %v1555, %v1547
        %v2340 = vpack.c.b16 %v1556, %v1548
        %v2341 = vpack.c.b16 %v1557, %v1549
        %v2342 = vpack.c.b16 %v1566, %v1558
        %v2343 = vpack.c.b16 %v1567, %v1559
        %v2344 = vpack.c.b16 %v1568, %v1560
        %v2345 = vpack.c.b16 %v1569, %v1561
        %v2346 = vpack.c.b16 %v1570, %v1562
        %v2347 = vpack.c.b16 %v1571, %v1563
        %v2348 = vpack.c.b16 %v1572, %v1564
        %v2349 = vpack.c.b16 %v1573, %v1565
        %v2350 = vpack.c.b16 %v1582, %v1574
        %v2351 = vpack.c.b16 %v1583, %v1575
        %v2352 = vpack.c.b16 %v1584, %v1576
        %v2353 = vpack.c.b16 %v1585, %v1577
        %v2354 = vpack.c.b16 %v1586, %v1578
        %v2355 = vpack.c.b16 %v1587, %v1579
        %v2356 = vpack.c.b16 %v1588, %v1580
        %v2357 = vpack.c.b16 %v1589, %v1581
        %v2358 = vpack.c.b16 %v1598, %v1590
        %v2359 = vpack.c.b16 %v1599, %v1591
        %v2360 = vpack.c.b16 %v1600, %v1592
        %v2361 = vpack.c.b16 %v1601, %v1593
        %v2362 = vpack.c.b16 %v1602, %v1594
        %v2363 = vpack.c.b16 %v1603, %v1595
        %v2364 = vpack.c.b16 %v1604, %v1596
        %v2365 = vpack.c.b16 %v1605, %v1597
        %v2366 = vpack.c.b16 %v1614, %v1606
        %v2367 = vpack.c.b16 %v1615, %v1607
        %v2368 = vpack.c.b16 %v1616, %v1608
        %v2369 = vpack.c.b16 %v1617, %v1609
        %v2370 = vpack.c.b16 %v1618, %v1610
        %v2371 = vpack.c.b16 %v1619, %v1611
        %v2372 = vpack.c.b16 %v1620, %v1612
        %v2373 = vpack.c.b16 %v1621, %v1613
        %v2374 = vpack.c.b16 %v1630, %v1622
        %v2375 = vpack.c.b16 %v1631, %v1623
        %v2376 = vpack.c.b16 %v1632, %v1624
        %v2377 = vpack.c.b16 %v1633, %v1625
        %v2378 = vpack.c.b16 %v1634, %v1626
        %v2379 = vpack.c.b16 %v1635, %v1627
        %v2380 = vpack.c.b16 %v1636, %v1628
        %v2381 = vpack.c.b16 %v1637, %v1629
        %v2382 = vpack.c.b16 %v1646, %v1638
        %v2383 = vpack.c.b16 %v1647, %v1639
        %v2384 = vpack.c.b16 %v1648, %v1640
        %v2385 = vpack.c.b16 %v1649, %v1641
        %v2386 = vpack.c.b16 %v1650, %v1642
        %v2387 = vpack.c.b16 %v1651, %v1643
        %v2388 = vpack.c.b16 %v1652, %v1644
        %v2389 = vpack.c.b16 %v1653, %v1645
        %v2390 = vpack.c.b16 %v1662, %v1654
        %v2391 = vpack.c.b16 %v1663, %v1655
        %v2392 = vpack.c.b16 %v1664, %v1656
        %v2393 = vpack.c.b16 %v1665, %v1657
        %v2394 = vpack.c.b16 %v1666, %v1658
        %v2395 = vpack.c.b16 %v1667, %v1659
        %v2396 = vpack.c.b16 %v1668, %v1660
        %v2397 = vpack.c.b16 %v1669, %v1661
        %v2398 = vpack.c.b16 %v1678, %v1670
        %v2399 = vpack.c.b16 %v1679, %v1671
        %v2400 = vpack.c.b16 %v1680, %v1672
        %v2401 = vpack.c.b16 %v1681, %v1673
        %v2402 = vpack.c.b16 %v1682, %v1674
        %v2403 = vpack.c.b16 %v1683, %v1675
        %v2404 = vpack.c.b16 %v1684, %v1676
        %v2405 = vpack.c.b16 %v1685, %v1677
        %v2406 = vpack.c.b16 %v1694, %v1686
        %v2407 = vpack.c.b16 %v1695, %v1687
        %v2408 = vpack.c.b16 %v1696, %v1688
        %v2409 = vpack.c.b16 %v1697, %v1689
        %v2410 = vpack.c.b16 %v1698, %v1690
        %v2411 = vpack.c.b16 %v1699, %v1691
        %v2412 = vpack.c.b16 %v1700, %v1692
        %v2413 = vpack.c.b16 %v1701, %v1693
        %v2414 = vpack.c.b16 %v1710, %v1702
        %v2415 = vpack.c.b16 %v1711, %v1703
        %v2416 = vpack.c.b16 %v1712, %v1704
        %v2417 = vpack.c.b16 %v1713, %v1705
        %v2418 = vpack.c.b16 %v1714, %v1706
        %v2419 = vpack.c.b16 %v1715, %v1707
        %v2420 = vpack.c.b16 %v1716, %v1708
        %v2421 = vpack.c.b16 %v1717, %v1709
        %v2422 = vpack.c.b16 %v1726, %v1718
        %v2423 = vpack.c.b16 %v1727, %v1719
        %v2424 = vpack.c.b16 %v1728, %v1720
        %v2425 = vpack.c.b16 %v1729, %v1721
        %v2426 = vpack.c.b16 %v1730, %v1722
        %v2427 = vpack.c.b16 %v1731, %v1723
        %v2428 = vpack.c.b16 %v1732, %v1724
        %v2429 = vpack.c.b16 %v1733, %v1725
        %v2430 = vpack.c.b16 %v1742, %v1734
        %v2431 = vpack.c.b16 %v1743, %v1735
        %v2432 = vpack.c.b16 %v1744, %v1736
        %v2433 = vpack.c.b16 %v1745, %v1737
        %v2434 = vpack.c.b16 %v1746, %v1738
        %v2435 = vpack.c.b16 %v1747, %v1739
        %v2436 = vpack.c.b16 %v1748, %v1740
        %v2437 = vpack.c.b16 %v1749, %v1741
        %v2438 = vpack.c.b16 %v1758, %v1750
        %v2439 = vpack.c.b16 %v1759, %v1751
        %v2440 = vpack.c.b16 %v1760, %v1752
        %v2441 = vpack.c.b16 %v1761, %v1753
        %v2442 = vpack.c.b16 %v1762, %v1754
        %v2443 = vpack.c.b16 %v1763, %v1755
        %v2444 = vpack.c.b16 %v1764, %v1756
        %v2445 = vpack.c.b16 %v1765, %v1757
        %v2446 = vpack.c.b16 %v1774, %v1766
        %v2447 = vpack.c.b16 %v1775, %v1767
        %v2448 = vpack.c.b16 %v1776, %v1768
        %v2449 = vpack.c.b16 %v1777, %v1769
        %v2450 = vpack.c.b16 %v1778, %v1770
        %v2451 = vpack.c.b16 %v1779, %v1771
        %v2452 = vpack.c.b16 %v1780, %v1772
        %v2453 = vpack.c.b16 %v1781, %v1773
        %v2454 = vpack.c.b16 %v1790, %v1782
        %v2455 = vpack.c.b16 %v1791, %v1783
        %v2456 = vpack.c.b16 %v1792, %v1784
        %v2457 = vpack.c.b16 %v1793, %v1785
        %v2458 = vpack.c.b16 %v1794, %v1786
        %v2459 = vpack.c.b16 %v1795, %v1787
        %v2460 = vpack.c.b16 %v1796, %v1788
        %v2461 = vpack.c.b16 %v1797, %v1789
        %v2462 = vpack.c.b16 %v1806, %v1798
        %v2463 = vpack.c.b16 %v1807, %v1799
        %v2464 = vpack.c.b16 %v1808, %v1800
        %v2465 = vpack.c.b16 %v1809, %v1801
        %v2466 = vpack.c.b16 %v1810, %v1802
        %v2467 = vpack.c.b16 %v1811, %v1803
        %v2468 = vpack.c.b16 %v1812, %v1804
        %v2469 = vpack.c.b16 %v1813, %v1805
        %v2470 = vpack.c.b16 %v1822, %v1814
        %v2471 = vpack.c.b16 %v1823, %v1815
        %v2472 = vpack.c.b16 %v1824, %v1816
        %v2473 = vpack.c.b16 %v1825, %v1817
        %v2474 = vpack.c.b16 %v1826, %v1818
        %v2475 = vpack.c.b16 %v1827, %v1819
        %v2476 = vpack.c.b16 %v1828, %v1820
        %v2477 = vpack.c.b16 %v1829, %v1821
        %v2478 = vpack.c.b16 %v1838, %v1830
        %v2479 = vpack.c.b16 %v1839, %v1831
        %v2480 = vpack.c.b16 %v1840, %v1832
        %v2481 = vpack.c.b16 %v1841, %v1833
        %v2482 = vpack.c.b16 %v1842, %v1834
        %v2483 = vpack.c.b16 %v1843, %v1835
        %v2484 = vpack.c.b16 %v1844, %v1836
        %v2485 = vpack.c.b16 %v1845, %v1837
        %v2486 = vpack.c.b16 %v1854, %v1846
        %v2487 = vpack.c.b16 %v1855, %v1847
        %v2488 = vpack.c.b16 %v1856, %v1848
        %v2489 = vpack.c.b16 %v1857, %v1849
        %v2490 = vpack.c.b16 %v1858, %v1850
        %v2491 = vpack.c.b16 %v1859, %v1851
        %v2492 = vpack.c.b16 %v1860, %v1852
        %v2493 = vpack.c.b16 %v1861, %v1853
        %v2494 = vpack.c.b16 %v1870, %v1862
        %v2495 = vpack.c.b16 %v1871, %v1863
        %v2496 = vpack.c.b16 %v1872, %v1864
        %v2497 = vpack.c.b16 %v1873, %v1865
        %v2498 = vpack.c.b16 %v1874, %v1866
        %v2499 = vpack.c.b16 %v1875, %v1867
        %v2500 = vpack.c.b16 %v1876, %v1868
        %v2501 = vpack.c.b16 %v1877, %v1869
        %v2502 = vpack.c.b16 %v1886, %v1878
        %v2503 = vpack.c.b16 %v1887, %v1879
        %v2504 = vpack.c.b16 %v1888, %v1880
        %v2505 = vpack.c.b16 %v1889, %v1881
        %v2506 = vpack.c.b16 %v1890, %v1882
        %v2507 = vpack.c.b16 %v1891, %v1883
        %v2508 = vpack.c.b16 %v1892, %v1884
        %v2509 = vpack.c.b16 %v1893, %v1885
        %v2510 = vpack.c.b16 %v1902, %v1894
        %v2511 = vpack.c.b16 %v1903, %v1895
        %v2512 = vpack.c.b16 %v1904, %v1896
        %v2513 = vpack.c.b16 %v1905, %v1897
        %v2514 = vpack.c.b16 %v1906, %v1898
        %v2515 = vpack.c.b16 %v1907, %v1899
        %v2516 = vpack.c.b16 %v1908, %v1900
        %v2517 = vpack.c.b16 %v1909, %v1901
        %v2518 = vpack.c.b16 %v1918, %v1910
        %v2519 = vpack.c.b16 %v1919, %v1911
        %v2520 = vpack.c.b16 %v1920, %v1912
        %v2521 = vpack.c.b16 %v1921, %v1913
        %v2522 = vpack.c.b16 %v1922, %v1914
        %v2523 = vpack.c.b16 %v1923, %v1915
        %v2524 = vpack.c.b16 %v1924, %v1916
        %v2525 = vpack.c.b16 %v1925, %v1917
        %v2526 = vpack.c.b16 %v1934, %v1926
        %v2527 = vpack.c.b16 %v1935, %v1927
        %v2528 = vpack.c.b16 %v1936, %v1928
        %v2529 = vpack.c.b16 %v1937, %v1929
        %v2530 = vpack.c.b16 %v1938, %v1930
        %v2531 = vpack.c.b16 %v1939, %v1931
        %v2532 = vpack.c.b16 %v1940, %v1932
        %v2533 = vpack.c.b16 %v1941, %v1933
        %v2534 = vpack.c.b16 %v1950, %v1942
        %v2535 = vpack.c.b16 %v1951, %v1943
        %v2536 = vpack.c.b16 %v1952, %v1944
        %v2537 = vpack.c.b16 %v1953, %v1945
        %v2538 = vpack.c.b16 %v1954, %v1946
        %v2539 = vpack.c.b16 %v1955, %v1947
        %v2540 = vpack.c.b16 %v1956, %v1948
        %v2541 = vpack.c.b16 %v1957, %v1949
        %v2542 = vpack.c.b16 %v1966, %v1958
        %v2543 = vpack.c.b16 %v1967, %v1959
        %v2544 = vpack.c.b16 %v1968, %v1960
        %v2545 = vpack.c.b16 %v1969, %v1961
        %v2546 = vpack.c.b16 %v1970, %v1962
        %v2547 = vpack.c.b16 %v1971, %v1963
        %v2548 = vpack.c.b16 %v1972, %v1964
        %v2549 = vpack.c.b16 %v1973, %v1965
        %v2550 = vpack.c.b16 %v1982, %v1974
        %v2551 = vpack.c.b16 %v1983, %v1975
        %v2552 = vpack.c.b16 %v1984, %v1976
        %v2553 = vpack.c.b16 %v1985, %v1977
        %v2554 = vpack.c.b16 %v1986, %v1978
        %v2555 = vpack.c.b16 %v1987, %v1979
        %v2556 = vpack.c.b16 %v1988, %v1980
        %v2557 = vpack.c.b16 %v1989, %v1981
        %v2558 = vpack.c.b16 %v1998, %v1990
        %v2559 = vpack.c.b16 %v1999, %v1991
        %v2560 = vpack.c.b16 %v2000, %v1992
        %v2561 = vpack.c.b16 %v2001, %v1993
        %v2562 = vpack.c.b16 %v2002, %v1994
        %v2563 = vpack.c.b16 %v2003, %v1995
        %v2564 = vpack.c.b16 %v2004, %v1996
        %v2565 = vpack.c.b16 %v2005, %v1997
        %v2566 = vpack.c.b16 %v2014, %v2006
        %v2567 = vpack.c.b16 %v2015, %v2007
        %v2568 = vpack.c.b16 %v2016, %v2008
        %v2569 = vpack.c.b16 %v2017, %v2009
        %v2570 = vpack.c.b16 %v2018, %v2010
        %v2571 = vpack.c.b16 %v2019, %v2011
        %v2572 = vpack.c.b16 %v2020, %v2012
        %v2573 = vpack.c.b16 %v2021, %v2013
        %v2574 = vpack.c.b16 %v2030, %v2022
        %v2575 = vpack.c.b16 %v2031, %v2023
        %v2576 = vpack.c.b16 %v2032, %v2024
        %v2577 = vpack.c.b16 %v2033, %v2025
        %v2578 = vpack.c.b16 %v2034, %v2026
        %v2579 = vpack.c.b16 %v2035, %v2027
        %v2580 = vpack.c.b16 %v2036, %v2028
        %v2581 = vpack.c.b16 %v2037, %v2029
        %v2582 = vpack.c.b16 %v2046, %v2038
        %v2583 = vpack.c.b16 %v2047, %v2039
        %v2584 = vpack.c.b16 %v2048, %v2040
        %v2585 = vpack.c.b16 %v2049, %v2041
        %v2586 = vpack.c.b16 %v2050, %v2042
        %v2587 = vpack.c.b16 %v2051, %v2043
        %v2588 = vpack.c.b16 %v2052, %v2044
        %v2589 = vpack.c.b16 %v2053, %v2045
        %v2590 = vpack.c.b16 %v2062, %v2054
        %v2591 = vpack.c.b16 %v2063, %v2055
        %v2592 = vpack.c.b16 %v2064, %v2056
        %v2593 = vpack.c.b16 %v2065, %v2057
        %v2594 = vpack.c.b16 %v2066, %v2058
        %v2595 = vpack.c.b16 %v2067, %v2059
        %v2596 = vpack.c.b16 %v2068, %v2060
        %v2597 = vpack.c.b16 %v2069, %v2061
        %v2598 = vpack.c.b16 %v2078, %v2070
        %v2599 = vpack.c.b16 %v2079, %v2071
        %v2600 = vpack.c.b16 %v2080, %v2072
        %v2601 = vpack.c.b16 %v2081, %v2073
        %v2602 = vpack.c.b16 %v2082, %v2074
        %v2603 = vpack.c.b16 %v2083, %v2075
        %v2604 = vpack.c.b16 %v2084, %v2076
        %v2605 = vpack.c.b16 %v2085, %v2077
        %v2606 = vpack.c.b16 %v2094, %v2086
        %v2607 = vpack.c.b16 %v2095, %v2087
        %v2608 = vpack.c.b16 %v2096, %v2088
        %v2609 = vpack.c.b16 %v2097, %v2089
        %v2610 = vpack.c.b16 %v2098, %v2090
        %v2611 = vpack.c.b16 %v2099, %v2091
        %v2612 = vpack.c.b16 %v2100, %v2092
        %v2613 = vpack.c.b16 %v2101, %v2093
        %v2614 = vpack.c.b16 %v2110, %v2102
        %v2615 = vpack.c.b16 %v2111, %v2103
        %v2616 = vpack.c.b16 %v2112, %v2104
        %v2617 = vpack.c.b16 %v2113, %v2105
        %v2618 = vpack.c.b16 %v2114, %v2106
        %v2619 = vpack.c.b16 %v2115, %v2107
        %v2620 = vpack.c.b16 %v2116, %v2108
        %v2621 = vpack.c.b16 %v2117, %v2109
        %v2622 = vpack.c.b16 %v2126, %v2118
        %v2623 = vpack.c.b16 %v2127, %v2119
        %v2624 = vpack.c.b16 %v2128, %v2120
        %v2625 = vpack.c.b16 %v2129, %v2121
        %v2626 = vpack.c.b16 %v2130, %v2122
        %v2627 = vpack.c.b16 %v2131, %v2123
        %v2628 = vpack.c.b16 %v2132, %v2124
        %v2629 = vpack.c.b16 %v2133, %v2125
        %v2630 = vpack.c.b16 %v2142, %v2134
        %v2631 = vpack.c.b16 %v2143, %v2135
        %v2632 = vpack.c.b16 %v2144, %v2136
        %v2633 = vpack.c.b16 %v2145, %v2137
        %v2634 = vpack.c.b16 %v2146, %v2138
        %v2635 = vpack.c.b16 %v2147, %v2139
        %v2636 = vpack.c.b16 %v2148, %v2140
        %v2637 = vpack.c.b16 %v2149, %v2141
        %v2638 = vpack.c.b16 %v2158, %v2150
        %v2639 = vpack.c.b16 %v2159, %v2151
        %v2640 = vpack.c.b16 %v2160, %v2152
        %v2641 = vpack.c.b16 %v2161, %v2153
        %v2642 = vpack.c.b16 %v2162, %v2154
        %v2643 = vpack.c.b16 %v2163, %v2155
        %v2644 = vpack.c.b16 %v2164, %v2156
        %v2645 = vpack.c.b16 %v2165, %v2157
        %v2646 = vpack.c.b16 %v2174, %v2166
        %v2647 = vpack.c.b16 %v2175, %v2167
        %v2648 = vpack.c.b16 %v2176, %v2168
        %v2649 = vpack.c.b16 %v2177, %v2169
        %v2650 = vpack.c.b16 %v2178, %v2170
        %v2651 = vpack.c.b16 %v2179, %v2171
        %v2652 = vpack.c.b16 %v2180, %v2172
        %v2653 = vpack.c.b16 %v2181, %v2173
        %v2654 = vpack.c.b16 %v2190, %v2182
        %v2655 = vpack.c.b16 %v2191, %v2183
        %v2656 = vpack.c.b16 %v2192, %v2184
        %v2657 = vpack.c.b16 %v2193, %v2185
        %v2658 = vpack.c.b16 %v2194, %v2186
        %v2659 = vpack.c.b16 %v2195, %v2187
        %v2660 = vpack.c.b16 %v2196, %v2188
        %v2661 = vpack.c.b16 %v2197, %v2189
        %v2662 = vpack.c.b16 %v2206, %v2198
        %v2663 = vpack.c.b16 %v2207, %v2199
        %v2664 = vpack.c.b16 %v2208, %v2200
        %v2665 = vpack.c.b16 %v2209, %v2201
        %v2666 = vpack.c.b16 %v2210, %v2202
        %v2667 = vpack.c.b16 %v2211, %v2203
        %v2668 = vpack.c.b16 %v2212, %v2204
        %v2669 = vpack.c.b16 %v2213, %v2205
        %v2670 = vpack.c.b16 %v2222, %v2214
        %v2671 = vpack.c.b16 %v2223, %v2215
        %v2672 = vpack.c.b16 %v2224, %v2216
        %v2673 = vpack.c.b16 %v2225, %v2217
        %v2674 = vpack.c.b16 %v2226, %v2218
        %v2675 = vpack.c.b16 %v2227, %v2219
        %v2676 = vpack.c.b16 %v2228, %v2220
        %v2677 = vpack.c.b16 %v2229, %v2221
        %3126 = vmatprep.subr.bf16.mxu0 %v2287
        %3127 = vmatpush1.bf16.msra.mxu0 %v2286
        %3128 = vmatprep.subr.bf16.mxu0 %v2279
        %3129 = vmatpush1.bf16.msra.mxu0 %v2278
        %3130 = vmatprep.subr.bf16.mxu0 %v2271
        %3131 = vmatpush1.bf16.msra.mxu0 %v2270
        %3132 = vmatprep.subr.bf16.mxu0 %v2263
        %3133 = vmatpush1.bf16.msra.mxu0 %v2262
        %3134 = vmatprep.subr.bf16.mxu0 %v2255
        %3135 = vmatpush1.bf16.msra.mxu0 %v2254
        %3136 = vmatprep.subr.bf16.mxu0 %v2247
        %3137 = vmatpush1.bf16.msra.mxu0 %v2246
        %3138 = vmatprep.subr.bf16.mxu0 %v2239
        %3139 = vmatpush1.bf16.msra.mxu0 %v2238
        %3140 = vmatprep.subr.bf16.mxu0 %v2231
        %3141 = vmatpush1.bf16.msra.mxu0 %v2230
        %3142 = vmatprep.subr.bf16.mxu0 %v2351
        %3143 = vmatpush2.bf16.msra.mxu0 %v2350
        %3144 = vmatprep.subr.bf16.mxu0 %v2343
        %3145 = vmatpush2.bf16.msra.mxu0 %v2342
        %3146 = vmatprep.subr.bf16.mxu0 %v2335
        %3147 = vmatpush2.bf16.msra.mxu0 %v2334
        %3148 = vmatprep.subr.bf16.mxu0 %v2327
        %3149 = vmatpush2.bf16.msra.mxu0 %v2326
        %3150 = vmatprep.subr.bf16.mxu0 %v2319
        %3151 = vmatpush2.bf16.msra.mxu0 %v2318
        %3152 = vmatprep.subr.bf16.mxu0 %v2311
        %3153 = vmatpush2.bf16.msra.mxu0 %v2310
        %3154 = vmatprep.subr.bf16.mxu0 %v2303
        %3155 = vmatpush2.bf16.msra.mxu0 %v2302
        %3156 = vmatprep.subr.bf16.mxu0 %v2295
        %3157 = vmatpush2.bf16.msra.mxu0 %v2294
        %3158 = vmatprep.mubr.bf16.mxu0 %v868
        %3159 = vmatmul.mubr.bf16.gmra.mxu0 %v854
        %v3160 = vpop.f32.mrf.mxu0
        %v3161 = vadd.f32 0.0, %v3160
        %v3162 = vpop.f32.mrf.mxu0
        %v3163 = vadd.f32 0.0, %v3162
        %v3164 = vpop.f32.mrf.mxu0
        %v3165 = vpop.f32.mrf.mxu0
        %3166 = vdwg.mxu0
        %3167 = vmatprep.subr.bf16.mxu0 %v2415
        %3168 = vmatpush1.bf16.msra.mxu0 %v2414
        %3169 = vmatprep.subr.bf16.mxu0 %v2407
        %3170 = vmatpush1.bf16.msra.mxu0 %v2406
        %3171 = vmatprep.subr.bf16.mxu0 %v2399
        %3172 = vmatpush1.bf16.msra.mxu0 %v2398
        %3173 = vmatprep.subr.bf16.mxu0 %v2391
        %3174 = vmatpush1.bf16.msra.mxu0 %v2390
        %3175 = vmatprep.subr.bf16.mxu0 %v2383
        %3176 = vmatpush1.bf16.msra.mxu0 %v2382
        %3177 = vmatprep.subr.bf16.mxu0 %v2375
        %3178 = vmatpush1.bf16.msra.mxu0 %v2374
        %3179 = vmatprep.subr.bf16.mxu0 %v2367
        %3180 = vmatpush1.bf16.msra.mxu0 %v2366
        %3181 = vmatprep.subr.bf16.mxu0 %v2359
        %3182 = vmatpush1.bf16.msra.mxu0 %v2358
        %3183 = vmatprep.subr.bf16.mxu0 %v2479
        %3184 = vmatpush2.bf16.msra.mxu0 %v2478
        %3185 = vmatprep.subr.bf16.mxu0 %v2471
        %3186 = vmatpush2.bf16.msra.mxu0 %v2470
        %3187 = vmatprep.subr.bf16.mxu0 %v2463
        %3188 = vmatpush2.bf16.msra.mxu0 %v2462
        %3189 = vmatprep.subr.bf16.mxu0 %v2455
        %3190 = vmatpush2.bf16.msra.mxu0 %v2454
        %3191 = vmatprep.subr.bf16.mxu0 %v2447
        %3192 = vmatpush2.bf16.msra.mxu0 %v2446
        %3193 = vmatprep.subr.bf16.mxu0 %v2439
        %3194 = vmatpush2.bf16.msra.mxu0 %v2438
        %3195 = vmatprep.subr.bf16.mxu0 %v2431
        %3196 = vmatpush2.bf16.msra.mxu0 %v2430
        %3197 = vmatprep.subr.bf16.mxu0 %v2423
        %3198 = vmatpush2.bf16.msra.mxu0 %v2422
        %3199 = vmatprep.mubr.bf16.mxu0 %v878
        %3200 = vmatmul.mubr.bf16.gmra.mxu0 %v876
        %v3201 = vpop.f32.mrf.mxu0
        %v3202 = vadd.f32 %v3161, %v3201
        %v3203 = vpop.f32.mrf.mxu0
        %v3204 = vadd.f32 %v3163, %v3203
        %v3205 = vpop.f32.mrf.mxu0
        %v3206 = vpop.f32.mrf.mxu0
        %3207 = vdwg.mxu0
        %3208 = vmatprep.subr.bf16.mxu0 %v2543
        %3209 = vmatpush1.bf16.msra.mxu0 %v2542
        %3210 = vmatprep.subr.bf16.mxu0 %v2535
        %3211 = vmatpush1.bf16.msra.mxu0 %v2534
        %3212 = vmatprep.subr.bf16.mxu0 %v2527
        %3213 = vmatpush1.bf16.msra.mxu0 %v2526
        %3214 = vmatprep.subr.bf16.mxu0 %v2519
        %3215 = vmatpush1.bf16.msra.mxu0 %v2518
        %3216 = vmatprep.subr.bf16.mxu0 %v2511
        %3217 = vmatpush1.bf16.msra.mxu0 %v2510
        %3218 = vmatprep.subr.bf16.mxu0 %v2503
        %3219 = vmatpush1.bf16.msra.mxu0 %v2502
        %3220 = vmatprep.subr.bf16.mxu0 %v2495
        %3221 = vmatpush1.bf16.msra.mxu0 %v2494
        %3222 = vmatprep.subr.bf16.mxu0 %v2487
        %3223 = vmatpush1.bf16.msra.mxu0 %v2486
        %3224 = vmatprep.subr.bf16.mxu0 %v2607
        %3225 = vmatpush2.bf16.msra.mxu0 %v2606
        %3226 = vmatprep.subr.bf16.mxu0 %v2599
        %3227 = vmatpush2.bf16.msra.mxu0 %v2598
        %3228 = vmatprep.subr.bf16.mxu0 %v2591
        %3229 = vmatpush2.bf16.msra.mxu0 %v2590
        %3230 = vmatprep.subr.bf16.mxu0 %v2583
        %3231 = vmatpush2.bf16.msra.mxu0 %v2582
        %3232 = vmatprep.subr.bf16.mxu0 %v2575
        %3233 = vmatpush2.bf16.msra.mxu0 %v2574
        %3234 = vmatprep.subr.bf16.mxu0 %v2567
        %3235 = vmatpush2.bf16.msra.mxu0 %v2566
        %3236 = vmatprep.subr.bf16.mxu0 %v2559
        %3237 = vmatpush2.bf16.msra.mxu0 %v2558
        %3238 = vmatprep.subr.bf16.mxu0 %v2551
        %3239 = vmatpush2.bf16.msra.mxu0 %v2550
        %3240 = vmatprep.mubr.bf16.mxu0 %v875
        %3241 = vmatmul.mubr.bf16.gmra.mxu0 %v861
        %v3242 = vpop.f32.mrf.mxu0
        %v3243 = vadd.f32 %v3202, %v3242
        %v3244 = vpop.f32.mrf.mxu0
        %v3245 = vadd.f32 %v3204, %v3244
        %v3246 = vpop.f32.mrf.mxu0
        %v3247 = vpop.f32.mrf.mxu0
        %3248 = vdwg.mxu0
        %3249 = vmatprep.subr.bf16.mxu0 %v2671
        %3250 = vmatpush1.bf16.msra.mxu0 %v2670
        %3251 = vmatprep.subr.bf16.mxu0 %v2663
        %3252 = vmatpush1.bf16.msra.mxu0 %v2662
        %3253 = vmatprep.subr.bf16.mxu0 %v2655
        %3254 = vmatpush1.bf16.msra.mxu0 %v2654
        %3255 = vmatprep.subr.bf16.mxu0 %v2647
        %3256 = vmatpush1.bf16.msra.mxu0 %v2646
        %3257 = vmatprep.subr.bf16.mxu0 %v2639
        %3258 = vmatpush1.bf16.msra.mxu0 %v2638
        %3259 = vmatprep.subr.bf16.mxu0 %v2631
        %3260 = vmatpush1.bf16.msra.mxu0 %v2630
        %3261 = vmatprep.subr.bf16.mxu0 %v2623
        %3262 = vmatpush1.bf16.msra.mxu0 %v2622
        %3263 = vmatprep.subr.bf16.mxu0 %v2615
        %3264 = vmatpush1.bf16.msra.mxu0 %v2614
        %3265 = vmatprep.subr.bf16.mxu0 0
        %3266 = vmatpush2.bf16.msra.mxu0 0
        %3267 = vmatprep.subr.bf16.mxu0 0
        %3268 = vmatpush2.bf16.msra.mxu0 0
        %3269 = vmatprep.subr.bf16.mxu0 0
        %3270 = vmatpush2.bf16.msra.mxu0 0
        %3271 = vmatprep.subr.bf16.mxu0 0
        %3272 = vmatpush2.bf16.msra.mxu0 0
        %3273 = vmatprep.subr.bf16.mxu0 0
        %3274 = vmatpush2.bf16.msra.mxu0 0
        %3275 = vmatprep.subr.bf16.mxu0 0
        %3276 = vmatpush2.bf16.msra.mxu0 0
        %3277 = vmatprep.subr.bf16.mxu0 0
        %3278 = vmatpush2.bf16.msra.mxu0 0
        %3279 = vmatprep.subr.bf16.mxu0 0
        %3280 = vmatpush2.bf16.msra.mxu0 0
        %3281 = vmatprep.mubr.bf16.mxu0 0
        %3282 = vmatmul.mubr.bf16.gmra.mxu0 %v877
        %v3283 = vpop.f32.mrf.mxu0
        %v3284 = vadd.f32 %v3243, %v3283
        %v3285 = vpop.f32.mrf.mxu0
        %v3286 = vadd.f32 %v3245, %v3285
        %v3287 = vpop.f32.mrf.mxu0
        %v3288 = vpop.f32.mrf.mxu0
        %3289 = vdwg.mxu0
        %3290 = vmatprep.subr.bf16.mxu0 %v2289
        %3291 = vmatpush1.bf16.msra.mxu0 %v2288
        %3292 = vmatprep.subr.bf16.mxu0 %v2281
        %3293 = vmatpush1.bf16.msra.mxu0 %v2280
        %3294 = vmatprep.subr.bf16.mxu0 %v2273
        %3295 = vmatpush1.bf16.msra.mxu0 %v2272
        %3296 = vmatprep.subr.bf16.mxu0 %v2265
        %3297 = vmatpush1.bf16.msra.mxu0 %v2264
        %3298 = vmatprep.subr.bf16.mxu0 %v2257
        %3299 = vmatpush1.bf16.msra.mxu0 %v2256
        %3300 = vmatprep.subr.bf16.mxu0 %v2249
        %3301 = vmatpush1.bf16.msra.mxu0 %v2248
        %3302 = vmatprep.subr.bf16.mxu0 %v2241
        %3303 = vmatpush1.bf16.msra.mxu0 %v2240
        %3304 = vmatprep.subr.bf16.mxu0 %v2233
        %3305 = vmatpush1.bf16.msra.mxu0 %v2232
        %3306 = vmatprep.subr.bf16.mxu0 %v2353
        %3307 = vmatpush2.bf16.msra.mxu0 %v2352
        %3308 = vmatprep.subr.bf16.mxu0 %v2345
        %3309 = vmatpush2.bf16.msra.mxu0 %v2344
        %3310 = vmatprep.subr.bf16.mxu0 %v2337
        %3311 = vmatpush2.bf16.msra.mxu0 %v2336
        %3312 = vmatprep.subr.bf16.mxu0 %v2329
        %3313 = vmatpush2.bf16.msra.mxu0 %v2328
        %3314 = vmatprep.subr.bf16.mxu0 %v2321
        %3315 = vmatpush2.bf16.msra.mxu0 %v2320
        %3316 = vmatprep.subr.bf16.mxu0 %v2313
        %3317 = vmatpush2.bf16.msra.mxu0 %v2312
        %3318 = vmatprep.subr.bf16.mxu0 %v2305
        %3319 = vmatpush2.bf16.msra.mxu0 %v2304
        %3320 = vmatprep.subr.bf16.mxu0 %v2297
        %3321 = vmatpush2.bf16.msra.mxu0 %v2296
        %3322 = vmatprep.mubr.bf16.mxu0 %v868
        %3323 = vmatmul.mubr.bf16.gmra.mxu0 %v854
        %v3324 = vpop.f32.mrf.mxu0
        %v3325 = vadd.f32 0.0, %v3324
        %v3326 = vpop.f32.mrf.mxu0
        %v3327 = vadd.f32 0.0, %v3326
        %v3328 = vpop.f32.mrf.mxu0
        %v3329 = vpop.f32.mrf.mxu0
        %3330 = vdwg.mxu0
        %3331 = vmatprep.subr.bf16.mxu0 %v2417
        %3332 = vmatpush1.bf16.msra.mxu0 %v2416
        %3333 = vmatprep.subr.bf16.mxu0 %v2409
        %3334 = vmatpush1.bf16.msra.mxu0 %v2408
        %3335 = vmatprep.subr.bf16.mxu0 %v2401
        %3336 = vmatpush1.bf16.msra.mxu0 %v2400
        %3337 = vmatprep.subr.bf16.mxu0 %v2393
        %3338 = vmatpush1.bf16.msra.mxu0 %v2392
        %3339 = vmatprep.subr.bf16.mxu0 %v2385
        %3340 = vmatpush1.bf16.msra.mxu0 %v2384
        %3341 = vmatprep.subr.bf16.mxu0 %v2377
        %3342 = vmatpush1.bf16.msra.mxu0 %v2376
        %3343 = vmatprep.subr.bf16.mxu0 %v2369
        %3344 = vmatpush1.bf16.msra.mxu0 %v2368
        %3345 = vmatprep.subr.bf16.mxu0 %v2361
        %3346 = vmatpush1.bf16.msra.mxu0 %v2360
        %3347 = vmatprep.subr.bf16.mxu0 %v2481
        %3348 = vmatpush2.bf16.msra.mxu0 %v2480
        %3349 = vmatprep.subr.bf16.mxu0 %v2473
        %3350 = vmatpush2.bf16.msra.mxu0 %v2472
        %3351 = vmatprep.subr.bf16.mxu0 %v2465
        %3352 = vmatpush2.bf16.msra.mxu0 %v2464
        %3353 = vmatprep.subr.bf16.mxu0 %v2457
        %3354 = vmatpush2.bf16.msra.mxu0 %v2456
        %3355 = vmatprep.subr.bf16.mxu0 %v2449
        %3356 = vmatpush2.bf16.msra.mxu0 %v2448
        %3357 = vmatprep.subr.bf16.mxu0 %v2441
        %3358 = vmatpush2.bf16.msra.mxu0 %v2440
        %3359 = vmatprep.subr.bf16.mxu0 %v2433
        %3360 = vmatpush2.bf16.msra.mxu0 %v2432
        %3361 = vmatprep.subr.bf16.mxu0 %v2425
        %3362 = vmatpush2.bf16.msra.mxu0 %v2424
        %3363 = vmatprep.mubr.bf16.mxu0 %v878
        %3364 = vmatmul.mubr.bf16.gmra.mxu0 %v876
        %v3365 = vpop.f32.mrf.mxu0
        %v3366 = vadd.f32 %v3325, %v3365
        %v3367 = vpop.f32.mrf.mxu0
        %v3368 = vadd.f32 %v3327, %v3367
        %v3369 = vpop.f32.mrf.mxu0
        %v3370 = vpop.f32.mrf.mxu0
        %3371 = vdwg.mxu0
        %3372 = vmatprep.subr.bf16.mxu0 %v2545
        %3373 = vmatpush1.bf16.msra.mxu0 %v2544
        %3374 = vmatprep.subr.bf16.mxu0 %v2537
        %3375 = vmatpush1.bf16.msra.mxu0 %v2536
        %3376 = vmatprep.subr.bf16.mxu0 %v2529
        %3377 = vmatpush1.bf16.msra.mxu0 %v2528
        %3378 = vmatprep.subr.bf16.mxu0 %v2521
        %3379 = vmatpush1.bf16.msra.mxu0 %v2520
        %3380 = vmatprep.subr.bf16.mxu0 %v2513
        %3381 = vmatpush1.bf16.msra.mxu0 %v2512
        %3382 = vmatprep.subr.bf16.mxu0 %v2505
        %3383 = vmatpush1.bf16.msra.mxu0 %v2504
        %3384 = vmatprep.subr.bf16.mxu0 %v2497
        %3385 = vmatpush1.bf16.msra.mxu0 %v2496
        %3386 = vmatprep.subr.bf16.mxu0 %v2489
        %3387 = vmatpush1.bf16.msra.mxu0 %v2488
        %3388 = vmatprep.subr.bf16.mxu0 %v2609
        %3389 = vmatpush2.bf16.msra.mxu0 %v2608
        %3390 = vmatprep.subr.bf16.mxu0 %v2601
        %3391 = vmatpush2.bf16.msra.mxu0 %v2600
        %3392 = vmatprep.subr.bf16.mxu0 %v2593
        %3393 = vmatpush2.bf16.msra.mxu0 %v2592
        %3394 = vmatprep.subr.bf16.mxu0 %v2585
        %3395 = vmatpush2.bf16.msra.mxu0 %v2584
        %3396 = vmatprep.subr.bf16.mxu0 %v2577
        %3397 = vmatpush2.bf16.msra.mxu0 %v2576
        %3398 = vmatprep.subr.bf16.mxu0 %v2569
        %3399 = vmatpush2.bf16.msra.mxu0 %v2568
        %3400 = vmatprep.subr.bf16.mxu0 %v2561
        %3401 = vmatpush2.bf16.msra.mxu0 %v2560
        %3402 = vmatprep.subr.bf16.mxu0 %v2553
        %3403 = vmatpush2.bf16.msra.mxu0 %v2552
        %3404 = vmatprep.mubr.bf16.mxu0 %v875
        %3405 = vmatmul.mubr.bf16.gmra.mxu0 %v861
        %v3406 = vpop.f32.mrf.mxu0
        %v3407 = vadd.f32 %v3366, %v3406
        %v3408 = vpop.f32.mrf.mxu0
        %v3409 = vadd.f32 %v3368, %v3408
        %v3410 = vpop.f32.mrf.mxu0
        %v3411 = vpop.f32.mrf.mxu0
        %3412 = vdwg.mxu0
        %3413 = vmatprep.subr.bf16.mxu0 %v2673
        %3414 = vmatpush1.bf16.msra.mxu0 %v2672
        %3415 = vmatprep.subr.bf16.mxu0 %v2665
        %3416 = vmatpush1.bf16.msra.mxu0 %v2664
        %3417 = vmatprep.subr.bf16.mxu0 %v2657
        %3418 = vmatpush1.bf16.msra.mxu0 %v2656
        %3419 = vmatprep.subr.bf16.mxu0 %v2649
        %3420 = vmatpush1.bf16.msra.mxu0 %v2648
        %3421 = vmatprep.subr.bf16.mxu0 %v2641
        %3422 = vmatpush1.bf16.msra.mxu0 %v2640
        %3423 = vmatprep.subr.bf16.mxu0 %v2633
        %3424 = vmatpush1.bf16.msra.mxu0 %v2632
        %3425 = vmatprep.subr.bf16.mxu0 %v2625
        %3426 = vmatpush1.bf16.msra.mxu0 %v2624
        %3427 = vmatprep.subr.bf16.mxu0 %v2617
        %3428 = vmatpush1.bf16.msra.mxu0 %v2616
        %3429 = vmatprep.subr.bf16.mxu0 0
        %3430 = vmatpush2.bf16.msra.mxu0 0
        %3431 = vmatprep.subr.bf16.mxu0 0
        %3432 = vmatpush2.bf16.msra.mxu0 0
        %3433 = vmatprep.subr.bf16.mxu0 0
        %3434 = vmatpush2.bf16.msra.mxu0 0
        %3435 = vmatprep.subr.bf16.mxu0 0
        %3436 = vmatpush2.bf16.msra.mxu0 0
        %3437 = vmatprep.subr.bf16.mxu0 0
        %3438 = vmatpush2.bf16.msra.mxu0 0
        %3439 = vmatprep.subr.bf16.mxu0 0
        %3440 = vmatpush2.bf16.msra.mxu0 0
        %3441 = vmatprep.subr.bf16.mxu0 0
        %3442 = vmatpush2.bf16.msra.mxu0 0
        %3443 = vmatprep.subr.bf16.mxu0 0
        %3444 = vmatpush2.bf16.msra.mxu0 0
        %3445 = vmatprep.mubr.bf16.mxu0 0
        %3446 = vmatmul.mubr.bf16.gmra.mxu0 %v877
        %v3447 = vpop.f32.mrf.mxu0
        %v3448 = vadd.f32 %v3407, %v3447
        %v3449 = vpop.f32.mrf.mxu0
        %v3450 = vadd.f32 %v3409, %v3449
        %v3451 = vpop.f32.mrf.mxu0
        %v3452 = vpop.f32.mrf.mxu0
        %3453 = vdwg.mxu0
        %3454 = vmatprep.subr.bf16.mxu0 %v2291
        %3455 = vmatpush1.bf16.msra.mxu0 %v2290
        %3456 = vmatprep.subr.bf16.mxu0 %v2283
        %3457 = vmatpush1.bf16.msra.mxu0 %v2282
        %3458 = vmatprep.subr.bf16.mxu0 %v2275
        %3459 = vmatpush1.bf16.msra.mxu0 %v2274
        %3460 = vmatprep.subr.bf16.mxu0 %v2267
        %3461 = vmatpush1.bf16.msra.mxu0 %v2266
        %3462 = vmatprep.subr.bf16.mxu0 %v2259
        %3463 = vmatpush1.bf16.msra.mxu0 %v2258
        %3464 = vmatprep.subr.bf16.mxu0 %v2251
        %3465 = vmatpush1.bf16.msra.mxu0 %v2250
        %3466 = vmatprep.subr.bf16.mxu0 %v2243
        %3467 = vmatpush1.bf16.msra.mxu0 %v2242
        %3468 = vmatprep.subr.bf16.mxu0 %v2235
        %3469 = vmatpush1.bf16.msra.mxu0 %v2234
        %3470 = vmatprep.subr.bf16.mxu0 %v2355
        %3471 = vmatpush2.bf16.msra.mxu0 %v2354
        %3472 = vmatprep.subr.bf16.mxu0 %v2347
        %3473 = vmatpush2.bf16.msra.mxu0 %v2346
        %3474 = vmatprep.subr.bf16.mxu0 %v2339
        %3475 = vmatpush2.bf16.msra.mxu0 %v2338
        %3476 = vmatprep.subr.bf16.mxu0 %v2331
        %3477 = vmatpush2.bf16.msra.mxu0 %v2330
        %3478 = vmatprep.subr.bf16.mxu0 %v2323
        %3479 = vmatpush2.bf16.msra.mxu0 %v2322
        %3480 = vmatprep.subr.bf16.mxu0 %v2315
        %3481 = vmatpush2.bf16.msra.mxu0 %v2314
        %3482 = vmatprep.subr.bf16.mxu0 %v2307
        %3483 = vmatpush2.bf16.msra.mxu0 %v2306
        %3484 = vmatprep.subr.bf16.mxu0 %v2299
        %3485 = vmatpush2.bf16.msra.mxu0 %v2298
        %3486 = vmatprep.mubr.bf16.mxu0 %v868
        %3487 = vmatmul.mubr.bf16.gmra.mxu0 %v854
        %v3488 = vpop.f32.mrf.mxu0
        %v3489 = vadd.f32 0.0, %v3488
        %v3490 = vpop.f32.mrf.mxu0
        %v3491 = vadd.f32 0.0, %v3490
        %v3492 = vpop.f32.mrf.mxu0
        %v3493 = vpop.f32.mrf.mxu0
        %3494 = vdwg.mxu0
        %3495 = vmatprep.subr.bf16.mxu0 %v2419
        %3496 = vmatpush1.bf16.msra.mxu0 %v2418
        %3497 = vmatprep.subr.bf16.mxu0 %v2411
        %3498 = vmatpush1.bf16.msra.mxu0 %v2410
        %3499 = vmatprep.subr.bf16.mxu0 %v2403
        %3500 = vmatpush1.bf16.msra.mxu0 %v2402
        %3501 = vmatprep.subr.bf16.mxu0 %v2395
        %3502 = vmatpush1.bf16.msra.mxu0 %v2394
        %3503 = vmatprep.subr.bf16.mxu0 %v2387
        %3504 = vmatpush1.bf16.msra.mxu0 %v2386
        %3505 = vmatprep.subr.bf16.mxu0 %v2379
        %3506 = vmatpush1.bf16.msra.mxu0 %v2378
        %3507 = vmatprep.subr.bf16.mxu0 %v2371
        %3508 = vmatpush1.bf16.msra.mxu0 %v2370
        %3509 = vmatprep.subr.bf16.mxu0 %v2363
        %3510 = vmatpush1.bf16.msra.mxu0 %v2362
        %3511 = vmatprep.subr.bf16.mxu0 %v2483
        %3512 = vmatpush2.bf16.msra.mxu0 %v2482
        %3513 = vmatprep.subr.bf16.mxu0 %v2475
        %3514 = vmatpush2.bf16.msra.mxu0 %v2474
        %3515 = vmatprep.subr.bf16.mxu0 %v2467
        %3516 = vmatpush2.bf16.msra.mxu0 %v2466
        %3517 = vmatprep.subr.bf16.mxu0 %v2459
        %3518 = vmatpush2.bf16.msra.mxu0 %v2458
        %3519 = vmatprep.subr.bf16.mxu0 %v2451
        %3520 = vmatpush2.bf16.msra.mxu0 %v2450
        %3521 = vmatprep.subr.bf16.mxu0 %v2443
        %3522 = vmatpush2.bf16.msra.mxu0 %v2442
        %3523 = vmatprep.subr.bf16.mxu0 %v2435
        %3524 = vmatpush2.bf16.msra.mxu0 %v2434
        %3525 = vmatprep.subr.bf16.mxu0 %v2427
        %3526 = vmatpush2.bf16.msra.mxu0 %v2426
        %3527 = vmatprep.mubr.bf16.mxu0 %v878
        %3528 = vmatmul.mubr.bf16.gmra.mxu0 %v876
        %v3529 = vpop.f32.mrf.mxu0
        %v3530 = vadd.f32 %v3489, %v3529
        %v3531 = vpop.f32.mrf.mxu0
        %v3532 = vadd.f32 %v3491, %v3531
        %v3533 = vpop.f32.mrf.mxu0
        %v3534 = vpop.f32.mrf.mxu0
        %3535 = vdwg.mxu0
        %3536 = vmatprep.subr.bf16.mxu0 %v2547
        %3537 = vmatpush1.bf16.msra.mxu0 %v2546
        %3538 = vmatprep.subr.bf16.mxu0 %v2539
        %3539 = vmatpush1.bf16.msra.mxu0 %v2538
        %3540 = vmatprep.subr.bf16.mxu0 %v2531
        %3541 = vmatpush1.bf16.msra.mxu0 %v2530
        %3542 = vmatprep.subr.bf16.mxu0 %v2523
        %3543 = vmatpush1.bf16.msra.mxu0 %v2522
        %3544 = vmatprep.subr.bf16.mxu0 %v2515
        %3545 = vmatpush1.bf16.msra.mxu0 %v2514
        %3546 = vmatprep.subr.bf16.mxu0 %v2507
        %3547 = vmatpush1.bf16.msra.mxu0 %v2506
        %3548 = vmatprep.subr.bf16.mxu0 %v2499
        %3549 = vmatpush1.bf16.msra.mxu0 %v2498
        %3550 = vmatprep.subr.bf16.mxu0 %v2491
        %3551 = vmatpush1.bf16.msra.mxu0 %v2490
        %3552 = vmatprep.subr.bf16.mxu0 %v2611
        %3553 = vmatpush2.bf16.msra.mxu0 %v2610
        %3554 = vmatprep.subr.bf16.mxu0 %v2603
        %3555 = vmatpush2.bf16.msra.mxu0 %v2602
        %3556 = vmatprep.subr.bf16.mxu0 %v2595
        %3557 = vmatpush2.bf16.msra.mxu0 %v2594
        %3558 = vmatprep.subr.bf16.mxu0 %v2587
        %3559 = vmatpush2.bf16.msra.mxu0 %v2586
        %3560 = vmatprep.subr.bf16.mxu0 %v2579
        %3561 = vmatpush2.bf16.msra.mxu0 %v2578
        %3562 = vmatprep.subr.bf16.mxu0 %v2571
        %3563 = vmatpush2.bf16.msra.mxu0 %v2570
        %3564 = vmatprep.subr.bf16.mxu0 %v2563
        %3565 = vmatpush2.bf16.msra.mxu0 %v2562
        %3566 = vmatprep.subr.bf16.mxu0 %v2555
        %3567 = vmatpush2.bf16.msra.mxu0 %v2554
        %3568 = vmatprep.mubr.bf16.mxu0 %v875
        %3569 = vmatmul.mubr.bf16.gmra.mxu0 %v861
        %v3570 = vpop.f32.mrf.mxu0
        %v3571 = vadd.f32 %v3530, %v3570
        %v3572 = vpop.f32.mrf.mxu0
        %v3573 = vadd.f32 %v3532, %v3572
        %v3574 = vpop.f32.mrf.mxu0
        %v3575 = vpop.f32.mrf.mxu0
        %3576 = vdwg.mxu0
        %3577 = vmatprep.subr.bf16.mxu0 %v2675
        %3578 = vmatpush1.bf16.msra.mxu0 %v2674
        %3579 = vmatprep.subr.bf16.mxu0 %v2667
        %3580 = vmatpush1.bf16.msra.mxu0 %v2666
        %3581 = vmatprep.subr.bf16.mxu0 %v2659
        %3582 = vmatpush1.bf16.msra.mxu0 %v2658
        %3583 = vmatprep.subr.bf16.mxu0 %v2651
        %3584 = vmatpush1.bf16.msra.mxu0 %v2650
        %3585 = vmatprep.subr.bf16.mxu0 %v2643
        %3586 = vmatpush1.bf16.msra.mxu0 %v2642
        %3587 = vmatprep.subr.bf16.mxu0 %v2635
        %3588 = vmatpush1.bf16.msra.mxu0 %v2634
        %3589 = vmatprep.subr.bf16.mxu0 %v2627
        %3590 = vmatpush1.bf16.msra.mxu0 %v2626
        %3591 = vmatprep.subr.bf16.mxu0 %v2619
        %3592 = vmatpush1.bf16.msra.mxu0 %v2618
        %3593 = vmatprep.subr.bf16.mxu0 0
        %3594 = vmatpush2.bf16.msra.mxu0 0
        %3595 = vmatprep.subr.bf16.mxu0 0
        %3596 = vmatpush2.bf16.msra.mxu0 0
        %3597 = vmatprep.subr.bf16.mxu0 0
        %3598 = vmatpush2.bf16.msra.mxu0 0
        %3599 = vmatprep.subr.bf16.mxu0 0
        %3600 = vmatpush2.bf16.msra.mxu0 0
        %3601 = vmatprep.subr.bf16.mxu0 0
        %3602 = vmatpush2.bf16.msra.mxu0 0
        %3603 = vmatprep.subr.bf16.mxu0 0
        %3604 = vmatpush2.bf16.msra.mxu0 0
        %3605 = vmatprep.subr.bf16.mxu0 0
        %3606 = vmatpush2.bf16.msra.mxu0 0
        %3607 = vmatprep.subr.bf16.mxu0 0
        %3608 = vmatpush2.bf16.msra.mxu0 0
        %3609 = vmatprep.mubr.bf16.mxu0 0
        %3610 = vmatmul.mubr.bf16.gmra.mxu0 %v877
        %v3611 = vpop.f32.mrf.mxu0
        %v3612 = vadd.f32 %v3571, %v3611
        %v3613 = vpop.f32.mrf.mxu0
        %v3614 = vadd.f32 %v3573, %v3613
        %v3615 = vpop.f32.mrf.mxu0
        %v3616 = vpop.f32.mrf.mxu0
        %3617 = vdwg.mxu0
        %3618 = vmatprep.subr.bf16.mxu0 %v2293
        %3619 = vmatpush1.bf16.msra.mxu0 %v2292
        %3620 = vmatprep.subr.bf16.mxu0 %v2285
        %3621 = vmatpush1.bf16.msra.mxu0 %v2284
        %3622 = vmatprep.subr.bf16.mxu0 %v2277
        %3623 = vmatpush1.bf16.msra.mxu0 %v2276
        %3624 = vmatprep.subr.bf16.mxu0 %v2269
        %3625 = vmatpush1.bf16.msra.mxu0 %v2268
        %3626 = vmatprep.subr.bf16.mxu0 %v2261
        %3627 = vmatpush1.bf16.msra.mxu0 %v2260
        %3628 = vmatprep.subr.bf16.mxu0 %v2253
        %3629 = vmatpush1.bf16.msra.mxu0 %v2252
        %3630 = vmatprep.subr.bf16.mxu0 %v2245
        %3631 = vmatpush1.bf16.msra.mxu0 %v2244
        %3632 = vmatprep.subr.bf16.mxu0 %v2237
        %3633 = vmatpush1.bf16.msra.mxu0 %v2236
        %3634 = vmatprep.subr.bf16.mxu0 %v2357
        %3635 = vmatpush2.bf16.msra.mxu0 %v2356
        %3636 = vmatprep.subr.bf16.mxu0 %v2349
        %3637 = vmatpush2.bf16.msra.mxu0 %v2348
        %3638 = vmatprep.subr.bf16.mxu0 %v2341
        %3639 = vmatpush2.bf16.msra.mxu0 %v2340
        %3640 = vmatprep.subr.bf16.mxu0 %v2333
        %3641 = vmatpush2.bf16.msra.mxu0 %v2332
        %3642 = vmatprep.subr.bf16.mxu0 %v2325
        %3643 = vmatpush2.bf16.msra.mxu0 %v2324
        %3644 = vmatprep.subr.bf16.mxu0 %v2317
        %3645 = vmatpush2.bf16.msra.mxu0 %v2316
        %3646 = vmatprep.subr.bf16.mxu0 %v2309
        %3647 = vmatpush2.bf16.msra.mxu0 %v2308
        %3648 = vmatprep.subr.bf16.mxu0 %v2301
        %3649 = vmatpush2.bf16.msra.mxu0 %v2300
        %3650 = vmatprep.mubr.bf16.mxu0 %v868
        %3651 = vmatmul.mubr.bf16.gmra.mxu0 %v854
        %v3652 = vpop.f32.mrf.mxu0
        %v3653 = vadd.f32 0.0, %v3652
        %v3654 = vpop.f32.mrf.mxu0
        %v3655 = vadd.f32 0.0, %v3654
        %v3656 = vpop.f32.mrf.mxu0
        %v3657 = vpop.f32.mrf.mxu0
        %3658 = vdwg.mxu0
        %3659 = vmatprep.subr.bf16.mxu0 %v2421
        %3660 = vmatpush1.bf16.msra.mxu0 %v2420
        %3661 = vmatprep.subr.bf16.mxu0 %v2413
        %3662 = vmatpush1.bf16.msra.mxu0 %v2412
        %3663 = vmatprep.subr.bf16.mxu0 %v2405
        %3664 = vmatpush1.bf16.msra.mxu0 %v2404
        %3665 = vmatprep.subr.bf16.mxu0 %v2397
        %3666 = vmatpush1.bf16.msra.mxu0 %v2396
        %3667 = vmatprep.subr.bf16.mxu0 %v2389
        %3668 = vmatpush1.bf16.msra.mxu0 %v2388
        %3669 = vmatprep.subr.bf16.mxu0 %v2381
        %3670 = vmatpush1.bf16.msra.mxu0 %v2380
        %3671 = vmatprep.subr.bf16.mxu0 %v2373
        %3672 = vmatpush1.bf16.msra.mxu0 %v2372
        %3673 = vmatprep.subr.bf16.mxu0 %v2365
        %3674 = vmatpush1.bf16.msra.mxu0 %v2364
        %3675 = vmatprep.subr.bf16.mxu0 %v2485
        %3676 = vmatpush2.bf16.msra.mxu0 %v2484
        %3677 = vmatprep.subr.bf16.mxu0 %v2477
        %3678 = vmatpush2.bf16.msra.mxu0 %v2476
        %3679 = vmatprep.subr.bf16.mxu0 %v2469
        %3680 = vmatpush2.bf16.msra.mxu0 %v2468
        %3681 = vmatprep.subr.bf16.mxu0 %v2461
        %3682 = vmatpush2.bf16.msra.mxu0 %v2460
        %3683 = vmatprep.subr.bf16.mxu0 %v2453
        %3684 = vmatpush2.bf16.msra.mxu0 %v2452
        %3685 = vmatprep.subr.bf16.mxu0 %v2445
        %3686 = vmatpush2.bf16.msra.mxu0 %v2444
        %3687 = vmatprep.subr.bf16.mxu0 %v2437
        %3688 = vmatpush2.bf16.msra.mxu0 %v2436
        %3689 = vmatprep.subr.bf16.mxu0 %v2429
        %3690 = vmatpush2.bf16.msra.mxu0 %v2428
        %3691 = vmatprep.mubr.bf16.mxu0 %v878
        %3692 = vmatmul.mubr.bf16.gmra.mxu0 %v876
        %v3693 = vpop.f32.mrf.mxu0
        %v3694 = vadd.f32 %v3653, %v3693
        %v3695 = vpop.f32.mrf.mxu0
        %v3696 = vadd.f32 %v3655, %v3695
        %v3697 = vpop.f32.mrf.mxu0
        %v3698 = vpop.f32.mrf.mxu0
        %3699 = vdwg.mxu0
        %3700 = vmatprep.subr.bf16.mxu0 %v2549
        %3701 = vmatpush1.bf16.msra.mxu0 %v2548
        %3702 = vmatprep.subr.bf16.mxu0 %v2541
        %3703 = vmatpush1.bf16.msra.mxu0 %v2540
        %3704 = vmatprep.subr.bf16.mxu0 %v2533
        %3705 = vmatpush1.bf16.msra.mxu0 %v2532
        %3706 = vmatprep.subr.bf16.mxu0 %v2525
        %3707 = vmatpush1.bf16.msra.mxu0 %v2524
        %3708 = vmatprep.subr.bf16.mxu0 %v2517
        %3709 = vmatpush1.bf16.msra.mxu0 %v2516
        %3710 = vmatprep.subr.bf16.mxu0 %v2509
        %3711 = vmatpush1.bf16.msra.mxu0 %v2508
        %3712 = vmatprep.subr.bf16.mxu0 %v2501
        %3713 = vmatpush1.bf16.msra.mxu0 %v2500
        %3714 = vmatprep.subr.bf16.mxu0 %v2493
        %3715 = vmatpush1.bf16.msra.mxu0 %v2492
        %3716 = vmatprep.subr.bf16.mxu0 %v2613
        %3717 = vmatpush2.bf16.msra.mxu0 %v2612
        %3718 = vmatprep.subr.bf16.mxu0 %v2605
        %3719 = vmatpush2.bf16.msra.mxu0 %v2604
        %3720 = vmatprep.subr.bf16.mxu0 %v2597
        %3721 = vmatpush2.bf16.msra.mxu0 %v2596
        %3722 = vmatprep.subr.bf16.mxu0 %v2589
        %3723 = vmatpush2.bf16.msra.mxu0 %v2588
        %3724 = vmatprep.subr.bf16.mxu0 %v2581
        %3725 = vmatpush2.bf16.msra.mxu0 %v2580
        %3726 = vmatprep.subr.bf16.mxu0 %v2573
        %3727 = vmatpush2.bf16.msra.mxu0 %v2572
        %3728 = vmatprep.subr.bf16.mxu0 %v2565
        %3729 = vmatpush2.bf16.msra.mxu0 %v2564
        %3730 = vmatprep.subr.bf16.mxu0 %v2557
        %3731 = vmatpush2.bf16.msra.mxu0 %v2556
        %3732 = vmatprep.mubr.bf16.mxu0 %v875
        %3733 = vmatmul.mubr.bf16.gmra.mxu0 %v861
        %v3734 = vpop.f32.mrf.mxu0
        %v3735 = vadd.f32 %v3694, %v3734
        %v3736 = vpop.f32.mrf.mxu0
        %v3737 = vadd.f32 %v3696, %v3736
        %v3738 = vpop.f32.mrf.mxu0
        %v3739 = vpop.f32.mrf.mxu0
        %3740 = vdwg.mxu0
        %3741 = vmatprep.subr.bf16.mxu0 %v2677
        %3742 = vmatpush1.bf16.msra.mxu0 %v2676
        %3743 = vmatprep.subr.bf16.mxu0 %v2669
        %3744 = vmatpush1.bf16.msra.mxu0 %v2668
        %3745 = vmatprep.subr.bf16.mxu0 %v2661
        %3746 = vmatpush1.bf16.msra.mxu0 %v2660
        %3747 = vmatprep.subr.bf16.mxu0 %v2653
        %3748 = vmatpush1.bf16.msra.mxu0 %v2652
        %3749 = vmatprep.subr.bf16.mxu0 %v2645
        %3750 = vmatpush1.bf16.msra.mxu0 %v2644
        %3751 = vmatprep.subr.bf16.mxu0 %v2637
        %3752 = vmatpush1.bf16.msra.mxu0 %v2636
        %3753 = vmatprep.subr.bf16.mxu0 %v2629
        %3754 = vmatpush1.bf16.msra.mxu0 %v2628
        %3755 = vmatprep.subr.bf16.mxu0 %v2621
        %3756 = vmatpush1.bf16.msra.mxu0 %v2620
        %3757 = vmatprep.subr.bf16.mxu0 0
        %3758 = vmatpush2.bf16.msra.mxu0 0
        %3759 = vmatprep.subr.bf16.mxu0 0
        %3760 = vmatpush2.bf16.msra.mxu0 0
        %3761 = vmatprep.subr.bf16.mxu0 0
        %3762 = vmatpush2.bf16.msra.mxu0 0
        %3763 = vmatprep.subr.bf16.mxu0 0
        %3764 = vmatpush2.bf16.msra.mxu0 0
        %3765 = vmatprep.subr.bf16.mxu0 0
        %3766 = vmatpush2.bf16.msra.mxu0 0
        %3767 = vmatprep.subr.bf16.mxu0 0
        %3768 = vmatpush2.bf16.msra.mxu0 0
        %3769 = vmatprep.subr.bf16.mxu0 0
        %3770 = vmatpush2.bf16.msra.mxu0 0
        %3771 = vmatprep.subr.bf16.mxu0 0
        %3772 = vmatpush2.bf16.msra.mxu0 0
        %3773 = vmatprep.mubr.bf16.mxu0 0
        %3774 = vmatmul.mubr.bf16.gmra.mxu0 %v877
        %v3775 = vpop.f32.mrf.mxu0
        %v3776 = vadd.f32 %v3735, %v3775
        %v3777 = vpop.f32.mrf.mxu0
        %v3778 = vadd.f32 %v3737, %v3777
        %v3779 = vpop.f32.mrf.mxu0
        %v3780 = vpop.f32.mrf.mxu0
        %3781 = vdwg.mxu0
        %v3790 = vcombine.low %v3284, %v3286
        %v3791 = vcombine.low %v3448, %v3450
        %v3793 = vunpack.c.l.s4 1983009808
        %v3794 = vunpack.c.0.s8 %v3793
        %v3795 = vlaneseq
        %v3796 = vshrl.u32 %v3795, 7
        %v3797 = vsub.s32 %v3794, %v3796
        %v3798 = vrot.slane %v3790, %v3797
        %v3800 = vunpack.c.l.s4 1983009808
        %v3801 = vunpack.c.0.s8 %v3800
        %v3802 = vlaneseq
        %v3803 = vshrl.u32 %v3802, 7
        %v3804 = vsub.s32 %v3801, %v3803
        %v3805 = vrot.slane %v3791, %v3804
        %v3806 = vcombine.low %v3798, %v3805
        %v3807 = vcombine.low %v3612, %v3614
        %v3808 = vcombine.low %v3776, %v3778
        %v3810 = vunpack.c.l.s4 1983009808
        %v3811 = vunpack.c.0.s8 %v3810
        %v3812 = vlaneseq
        %v3813 = vshrl.u32 %v3812, 7
        %v3814 = vsub.s32 %v3811, %v3813
        %v3815 = vrot.slane %v3807, %v3814
        %v3817 = vunpack.c.l.s4 1983009808
        %v3818 = vunpack.c.0.s8 %v3817
        %v3819 = vlaneseq
        %v3820 = vshrl.u32 %v3819, 7
        %v3821 = vsub.s32 %v3818, %v3820
        %v3822 = vrot.slane %v3808, %v3821
        %v3823 = vcombine.low %v3815, %v3822
        %v3826 = vadd.f32 %v379, %v3806
        %v3827 = vadd.f32 %v380, %v3823
        %3828 = vst [vmem:[#allocation2] sm:$0xff] %v3826
        %3829 = vst [vmem:[#allocation2 + $0x8] sm:$0xff] %v3827
        %p3830 = scmp.eq.s32.totalorder %s24, 2
        // Predicated region
        $region77: #{featurespace_classifier_forward.1} parent=47 // pred_check
          %p3831 = pneg %p3830
        $region78: #{featurespace_classifier_forward.1} parent=47 // pred_check_branch
          %3833 = sbr.rel (%p3831) target = $region80
        $region79: #{featurespace_classifier_forward.1} parent=47 // pred_region
          %v3834 = vld [vmem:[#allocation2] sm:$0xff]
          %v3835 = vld [vmem:[#allocation2 + $0x8] sm:$0xff]
          %v3836 = vld [vmem:[#allocation5] sm:$0xff]
          %v3838 = vlaneseq
          %v3839 = vshrl.u32 %v3838, 7
          %v3840 = vsub.s32 0, %v3839
          %v3841 = vrot.slane %v3836, %v3840
          %v3842 = vlaneseq
          %v3843 = vshrl.u32 %v3842, 7
          %v3844 = vsub.s32 1, %v3843
          %v3845 = vrot.slane %v3836, %v3844
          %v3846 = vlaneseq
          %v3847 = vshrl.u32 %v3846, 7
          %v3848 = vsub.s32 2, %v3847
          %v3849 = vrot.slane %v3836, %v3848
          %v3850 = vlaneseq
          %v3851 = vshrl.u32 %v3850, 7
          %v3852 = vsub.s32 3, %v3851
          %v3853 = vrot.slane %v3836, %v3852
          %v3854 = vlaneseq
          %v3855 = vshrl.u32 %v3854, 7
          %v3856 = vsub.s32 4, %v3855
          %v3857 = vrot.slane %v3836, %v3856
          %v3858 = vlaneseq
          %v3859 = vshrl.u32 %v3858, 7
          %v3860 = vsub.s32 5, %v3859
          %v3861 = vrot.slane %v3836, %v3860
          %v3862 = vlaneseq
          %v3863 = vshrl.u32 %v3862, 7
          %v3864 = vsub.s32 6, %v3863
          %v3865 = vrot.slane %v3836, %v3864
          %v3866 = vlaneseq
          %v3867 = vshrl.u32 %v3866, 7
          %v3868 = vsub.s32 7, %v3867
          %v3869 = vrot.slane %v3836, %v3868
          %v3870 = vcombine.low %v3841, %v3845
          %v3871 = vcombine.low %v3849, %v3853
          %v3873 = vunpack.c.l.s4 1983009808
          %v3874 = vunpack.c.0.s8 %v3873
          %v3875 = vlaneseq
          %v3876 = vshrl.u32 %v3875, 7
          %v3877 = vsub.s32 %v3874, %v3876
          %v3878 = vrot.slane %v3870, %v3877
          %v3880 = vunpack.c.l.s4 1983009808
          %v3881 = vunpack.c.0.s8 %v3880
          %v3882 = vlaneseq
          %v3883 = vshrl.u32 %v3882, 7
          %v3884 = vsub.s32 %v3881, %v3883
          %v3885 = vrot.slane %v3871, %v3884
          %v3886 = vcombine.low %v3878, %v3885
          %v3887 = vcombine.low %v3857, %v3861
          %v3888 = vcombine.low %v3865, %v3869
          %v3890 = vunpack.c.l.s4 1983009808
          %v3891 = vunpack.c.0.s8 %v3890
          %v3892 = vlaneseq
          %v3893 = vshrl.u32 %v3892, 7
          %v3894 = vsub.s32 %v3891, %v3893
          %v3895 = vrot.slane %v3887, %v3894
          %v3897 = vunpack.c.l.s4 1983009808
          %v3898 = vunpack.c.0.s8 %v3897
          %v3899 = vlaneseq
          %v3900 = vshrl.u32 %v3899, 7
          %v3901 = vsub.s32 %v3898, %v3900
          %v3902 = vrot.slane %v3888, %v3901
          %v3903 = vcombine.low %v3895, %v3902
          %v3906 = vadd.f32 %v3834, %v3886
          %v3907 = vadd.f32 %v3835, %v3903
          %v3908 = vmax.f32 %v3906, 0.0
          %v3909 = vmax.f32 %v3907, 0.0
          %v3912 = vcombine.high %v3908, %v3908
          %v3914 = vunpack.c.l.s4 1983009808
          %v3915 = vunpack.c.0.s8 %v3914
          %v3916 = vlaneseq
          %v3917 = vshrl.u32 %v3916, 7
          %v3918 = vsub.s32 %v3915, %v3917
          %v3919 = vrot.slane %v3908, %v3918
          %v3921 = vunpack.c.l.s4 1983009808
          %v3922 = vunpack.c.0.s8 %v3921
          %v3923 = vlaneseq
          %v3924 = vshrl.u32 %v3923, 7
          %v3925 = vsub.s32 %v3922, %v3924
          %v3926 = vrot.slane %v3912, %v3925
          %v3927 = vcombine.high %v3919, %v3919
          %v3928 = vcombine.high %v3926, %v3926
          %v3929 = vcombine.high %v3909, %v3909
          %v3931 = vunpack.c.l.s4 1983009808
          %v3932 = vunpack.c.0.s8 %v3931
          %v3933 = vlaneseq
          %v3934 = vshrl.u32 %v3933, 7
          %v3935 = vsub.s32 %v3932, %v3934
          %v3936 = vrot.slane %v3909, %v3935
          %v3938 = vunpack.c.l.s4 1983009808
          %v3939 = vunpack.c.0.s8 %v3938
          %v3940 = vlaneseq
          %v3941 = vshrl.u32 %v3940, 7
          %v3942 = vsub.s32 %v3939, %v3941
          %v3943 = vrot.slane %v3929, %v3942
          %v3944 = vcombine.high %v3936, %v3936
          %v3945 = vcombine.high %v3943, %v3943
          %v3954 = vpack.c.bf16 %v3919, %v3919
          %v3955 = vpack.c.bf16 %v3927, %v3927
          %v3956 = vpack.c.bf16 %v3926, %v3926
          %v3957 = vpack.c.bf16 %v3928, %v3928
          %v3958 = vpack.c.bf16 %v3936, %v3936
          %v3959 = vpack.c.bf16 %v3944, %v3944
          %v3960 = vpack.c.bf16 %v3943, %v3943
          %v3961 = vpack.c.bf16 %v3945, %v3945
          %v3962 = vld [vmem:[#allocation7] sm:$0xf]
          %v3963 = vld [vmem:[#allocation7 + $0x4] sm:$0xf]
          %v3964 = vld [vmem:[#allocation7 + $0x8] sm:$0xf]
          %v3965 = vld [vmem:[#allocation7 + $0xc] sm:$0xf]
          %v3966 = vld [vmem:[#allocation7 + $0x10] sm:$0xf]
          %v3967 = vld [vmem:[#allocation7 + $0x14] sm:$0xf]
          %v3968 = vld [vmem:[#allocation7 + $0x18] sm:$0xf]
          %v3969 = vld [vmem:[#allocation7 + $0x1c] sm:$0xf]
          %v3970 = vld [vmem:[#allocation7 + $0x20] sm:$0xf]
          %v3971 = vld [vmem:[#allocation7 + $0x24] sm:$0xf]
          %v3972 = vld [vmem:[#allocation7 + $0x28] sm:$0xf]
          %v3973 = vld [vmem:[#allocation7 + $0x2c] sm:$0xf]
          %v3974 = vld [vmem:[#allocation7 + $0x30] sm:$0xf]
          %v3975 = vld [vmem:[#allocation7 + $0x34] sm:$0xf]
          %v3976 = vld [vmem:[#allocation7 + $0x38] sm:$0xf]
          %v3977 = vld [vmem:[#allocation7 + $0x3c] sm:$0xf]
          %v3978 = vld [vmem:[#allocation7 + $0x40] sm:$0xf]
          %v3979 = vld [vmem:[#allocation7 + $0x44] sm:$0xf]
          %v3980 = vld [vmem:[#allocation7 + $0x48] sm:$0xf]
          %v3981 = vld [vmem:[#allocation7 + $0x4c] sm:$0xf]
          %v3982 = vld [vmem:[#allocation7 + $0x50] sm:$0xf]
          %v3983 = vld [vmem:[#allocation7 + $0x54] sm:$0xf]
          %v3984 = vld [vmem:[#allocation7 + $0x58] sm:$0xf]
          %v3985 = vld [vmem:[#allocation7 + $0x5c] sm:$0xf]
          %v3986 = vld [vmem:[#allocation7 + $0x60] sm:$0xf]
          %v3987 = vld [vmem:[#allocation7 + $0x64] sm:$0xf]
          %v3988 = vld [vmem:[#allocation7 + $0x68] sm:$0xf]
          %v3989 = vld [vmem:[#allocation7 + $0x6c] sm:$0xf]
          %v3990 = vld [vmem:[#allocation7 + $0x70] sm:$0xf]
          %v3991 = vld [vmem:[#allocation7 + $0x74] sm:$0xf]
          %v3992 = vld [vmem:[#allocation7 + $0x78] sm:$0xf]
          %v3993 = vld [vmem:[#allocation7 + $0x7c] sm:$0xf]
          %v3994 = vld [vmem:[#allocation7 + $0x80] sm:$0xf]
          %v3995 = vld [vmem:[#allocation7 + $0x84] sm:$0xf]
          %v3996 = vld [vmem:[#allocation7 + $0x88] sm:$0xf]
          %v3997 = vld [vmem:[#allocation7 + $0x8c] sm:$0xf]
          %v3998 = vld [vmem:[#allocation7 + $0x90] sm:$0xf]
          %v3999 = vld [vmem:[#allocation7 + $0x94] sm:$0xf]
          %v4000 = vld [vmem:[#allocation7 + $0x98] sm:$0xf]
          %v4001 = vld [vmem:[#allocation7 + $0x9c] sm:$0xf]
          %v4002 = vld [vmem:[#allocation7 + $0xa0] sm:$0xf]
          %v4003 = vld [vmem:[#allocation7 + $0xa4] sm:$0xf]
          %v4004 = vld [vmem:[#allocation7 + $0xa8] sm:$0xf]
          %v4005 = vld [vmem:[#allocation7 + $0xac] sm:$0xf]
          %v4006 = vld [vmem:[#allocation7 + $0xb0] sm:$0xf]
          %v4007 = vld [vmem:[#allocation7 + $0xb4] sm:$0xf]
          %v4008 = vld [vmem:[#allocation7 + $0xb8] sm:$0xf]
          %v4009 = vld [vmem:[#allocation7 + $0xbc] sm:$0xf]
          %v4010 = vld [vmem:[#allocation7 + $0xc0] sm:$0xf]
          %v4011 = vld [vmem:[#allocation7 + $0xc4] sm:$0xf]
          %v4012 = vld [vmem:[#allocation7 + $0xc8] sm:$0xf]
          %v4013 = vld [vmem:[#allocation7 + $0xcc] sm:$0xf]
          %v4014 = vld [vmem:[#allocation7 + $0xd0] sm:$0xf]
          %v4015 = vld [vmem:[#allocation7 + $0xd4] sm:$0xf]
          %v4016 = vld [vmem:[#allocation7 + $0xd8] sm:$0xf]
          %v4017 = vld [vmem:[#allocation7 + $0xdc] sm:$0xf]
          %v4018 = vld [vmem:[#allocation7 + $0xe0] sm:$0xf]
          %v4019 = vld [vmem:[#allocation7 + $0xe4] sm:$0xf]
          %v4020 = vld [vmem:[#allocation7 + $0xe8] sm:$0xf]
          %v4021 = vld [vmem:[#allocation7 + $0xec] sm:$0xf]
          %v4022 = vld [vmem:[#allocation7 + $0xf0] sm:$0xf]
          %v4023 = vld [vmem:[#allocation7 + $0xf4] sm:$0xf]
          %v4024 = vld [vmem:[#allocation7 + $0xf8] sm:$0xf]
          %v4025 = vld [vmem:[#allocation7 + $0xfc] sm:$0xf]
          %v4026 = vld [vmem:[#allocation7 + $0x100] sm:$0xf]
          %v4027 = vld [vmem:[#allocation7 + $0x104] sm:$0xf]
          %v4028 = vld [vmem:[#allocation7 + $0x108] sm:$0xf]
          %v4029 = vld [vmem:[#allocation7 + $0x10c] sm:$0xf]
          %v4030 = vld [vmem:[#allocation7 + $0x110] sm:$0xf]
          %v4031 = vld [vmem:[#allocation7 + $0x114] sm:$0xf]
          %v4032 = vld [vmem:[#allocation7 + $0x118] sm:$0xf]
          %v4033 = vld [vmem:[#allocation7 + $0x11c] sm:$0xf]
          %v4034 = vld [vmem:[#allocation7 + $0x120] sm:$0xf]
          %v4035 = vld [vmem:[#allocation7 + $0x124] sm:$0xf]
          %v4036 = vld [vmem:[#allocation7 + $0x128] sm:$0xf]
          %v4037 = vld [vmem:[#allocation7 + $0x12c] sm:$0xf]
          %v4038 = vld [vmem:[#allocation7 + $0x130] sm:$0xf]
          %v4039 = vld [vmem:[#allocation7 + $0x134] sm:$0xf]
          %v4040 = vld [vmem:[#allocation7 + $0x138] sm:$0xf]
          %v4041 = vld [vmem:[#allocation7 + $0x13c] sm:$0xf]
          %v4042 = vld [vmem:[#allocation7 + $0x140] sm:$0xf]
          %v4043 = vld [vmem:[#allocation7 + $0x144] sm:$0xf]
          %v4044 = vld [vmem:[#allocation7 + $0x148] sm:$0xf]
          %v4045 = vld [vmem:[#allocation7 + $0x14c] sm:$0xf]
          %v4046 = vld [vmem:[#allocation7 + $0x150] sm:$0xf]
          %v4047 = vld [vmem:[#allocation7 + $0x154] sm:$0xf]
          %v4048 = vld [vmem:[#allocation7 + $0x158] sm:$0xf]
          %v4049 = vld [vmem:[#allocation7 + $0x15c] sm:$0xf]
          %v4050 = vld [vmem:[#allocation7 + $0x160] sm:$0xf]
          %v4051 = vld [vmem:[#allocation7 + $0x164] sm:$0xf]
          %v4052 = vld [vmem:[#allocation7 + $0x168] sm:$0xf]
          %v4053 = vld [vmem:[#allocation7 + $0x16c] sm:$0xf]
          %v4054 = vld [vmem:[#allocation7 + $0x170] sm:$0xf]
          %v4055 = vld [vmem:[#allocation7 + $0x174] sm:$0xf]
          %v4056 = vld [vmem:[#allocation7 + $0x178] sm:$0xf]
          %v4057 = vld [vmem:[#allocation7 + $0x17c] sm:$0xf]
          %v4058 = vld [vmem:[#allocation7 + $0x180] sm:$0xf]
          %v4059 = vld [vmem:[#allocation7 + $0x184] sm:$0xf]
          %v4060 = vld [vmem:[#allocation7 + $0x188] sm:$0xf]
          %v4061 = vld [vmem:[#allocation7 + $0x18c] sm:$0xf]
          %v4062 = vld [vmem:[#allocation7 + $0x190] sm:$0xf]
          %v4063 = vld [vmem:[#allocation7 + $0x194] sm:$0xf]
          %v4064 = vld [vmem:[#allocation7 + $0x198] sm:$0xf]
          %v4065 = vld [vmem:[#allocation7 + $0x19c] sm:$0xf]
          %v4066 = vld [vmem:[#allocation7 + $0x1a0] sm:$0xf]
          %v4067 = vld [vmem:[#allocation7 + $0x1a4] sm:$0xf]
          %v4068 = vld [vmem:[#allocation7 + $0x1a8] sm:$0xf]
          %v4069 = vld [vmem:[#allocation7 + $0x1ac] sm:$0xf]
          %v4070 = vld [vmem:[#allocation7 + $0x1b0] sm:$0xf]
          %v4071 = vld [vmem:[#allocation7 + $0x1b4] sm:$0xf]
          %v4072 = vld [vmem:[#allocation7 + $0x1b8] sm:$0xf]
          %v4073 = vld [vmem:[#allocation7 + $0x1bc] sm:$0xf]
          %v4074 = vld [vmem:[#allocation7 + $0x1c0] sm:$0xf]
          %v4075 = vld [vmem:[#allocation7 + $0x1c4] sm:$0xf]
          %v4076 = vld [vmem:[#allocation7 + $0x1c8] sm:$0xf]
          %v4077 = vld [vmem:[#allocation7 + $0x1cc] sm:$0xf]
          %v4078 = vld [vmem:[#allocation7 + $0x1d0] sm:$0xf]
          %v4079 = vld [vmem:[#allocation7 + $0x1d4] sm:$0xf]
          %v4080 = vld [vmem:[#allocation7 + $0x1d8] sm:$0xf]
          %v4081 = vld [vmem:[#allocation7 + $0x1dc] sm:$0xf]
          %v4082 = vld [vmem:[#allocation7 + $0x1e0] sm:$0xf]
          %v4083 = vld [vmem:[#allocation7 + $0x1e4] sm:$0xf]
          %v4084 = vld [vmem:[#allocation7 + $0x1e8] sm:$0xf]
          %v4085 = vld [vmem:[#allocation7 + $0x1ec] sm:$0xf]
          %v4086 = vld [vmem:[#allocation7 + $0x1f0] sm:$0xf]
          %v4087 = vld [vmem:[#allocation7 + $0x1f4] sm:$0xf]
          %v4088 = vld [vmem:[#allocation7 + $0x1f8] sm:$0xf]
          %v4089 = vld [vmem:[#allocation7 + $0x1fc] sm:$0xf]
          %v4090 = vld [vmem:[#allocation8] sm:$0x1]
          %v4092 = vlaneseq
          %v4093 = vshrl.u32 %v4092, 7
          %v4094 = vsub.s32 0, %v4093
          %v4095 = vrot.slane %v4090, %v4094
          %v4225 = vunpack.c.l.b16 %v3962
          %v4226 = vunpack.c.l.b16 %v3963
          %v4227 = vunpack.c.l.b16 %v3964
          %v4228 = vunpack.c.l.b16 %v3965
          %v4229 = vunpack.c.l.b16 %v3966
          %v4230 = vunpack.c.l.b16 %v3967
          %v4231 = vunpack.c.l.b16 %v3968
          %v4232 = vunpack.c.l.b16 %v3969
          %v4233 = vunpack.c.l.b16 %v3970
          %v4234 = vunpack.c.l.b16 %v3971
          %v4235 = vunpack.c.l.b16 %v3972
          %v4236 = vunpack.c.l.b16 %v3973
          %v4237 = vunpack.c.l.b16 %v3974
          %v4238 = vunpack.c.l.b16 %v3975
          %v4239 = vunpack.c.l.b16 %v3976
          %v4240 = vunpack.c.l.b16 %v3977
          %v4241 = vunpack.c.l.b16 %v3978
          %v4242 = vunpack.c.l.b16 %v3979
          %v4243 = vunpack.c.l.b16 %v3980
          %v4244 = vunpack.c.l.b16 %v3981
          %v4245 = vunpack.c.l.b16 %v3982
          %v4246 = vunpack.c.l.b16 %v3983
          %v4247 = vunpack.c.l.b16 %v3984
          %v4248 = vunpack.c.l.b16 %v3985
          %v4249 = vunpack.c.l.b16 %v3986
          %v4250 = vunpack.c.l.b16 %v3987
          %v4251 = vunpack.c.l.b16 %v3988
          %v4252 = vunpack.c.l.b16 %v3989
          %v4253 = vunpack.c.l.b16 %v3990
          %v4254 = vunpack.c.l.b16 %v3991
          %v4255 = vunpack.c.l.b16 %v3992
          %v4256 = vunpack.c.l.b16 %v3993
          %v4257 = vunpack.c.l.b16 %v3994
          %v4258 = vunpack.c.l.b16 %v3995
          %v4259 = vunpack.c.l.b16 %v3996
          %v4260 = vunpack.c.l.b16 %v3997
          %v4261 = vunpack.c.l.b16 %v3998
          %v4262 = vunpack.c.l.b16 %v3999
          %v4263 = vunpack.c.l.b16 %v4000
          %v4264 = vunpack.c.l.b16 %v4001
          %v4265 = vunpack.c.l.b16 %v4002
          %v4266 = vunpack.c.l.b16 %v4003
          %v4267 = vunpack.c.l.b16 %v4004
          %v4268 = vunpack.c.l.b16 %v4005
          %v4269 = vunpack.c.l.b16 %v4006
          %v4270 = vunpack.c.l.b16 %v4007
          %v4271 = vunpack.c.l.b16 %v4008
          %v4272 = vunpack.c.l.b16 %v4009
          %v4273 = vunpack.c.l.b16 %v4010
          %v4274 = vunpack.c.l.b16 %v4011
          %v4275 = vunpack.c.l.b16 %v4012
          %v4276 = vunpack.c.l.b16 %v4013
          %v4277 = vunpack.c.l.b16 %v4014
          %v4278 = vunpack.c.l.b16 %v4015
          %v4279 = vunpack.c.l.b16 %v4016
          %v4280 = vunpack.c.l.b16 %v4017
          %v4281 = vunpack.c.l.b16 %v4018
          %v4282 = vunpack.c.l.b16 %v4019
          %v4283 = vunpack.c.l.b16 %v4020
          %v4284 = vunpack.c.l.b16 %v4021
          %v4285 = vunpack.c.l.b16 %v4022
          %v4286 = vunpack.c.l.b16 %v4023
          %v4287 = vunpack.c.l.b16 %v4024
          %v4288 = vunpack.c.l.b16 %v4025
          %v4289 = vunpack.c.l.b16 %v4026
          %v4290 = vunpack.c.l.b16 %v4027
          %v4291 = vunpack.c.l.b16 %v4028
          %v4292 = vunpack.c.l.b16 %v4029
          %v4293 = vunpack.c.l.b16 %v4030
          %v4294 = vunpack.c.l.b16 %v4031
          %v4295 = vunpack.c.l.b16 %v4032
          %v4296 = vunpack.c.l.b16 %v4033
          %v4297 = vunpack.c.l.b16 %v4034
          %v4298 = vunpack.c.l.b16 %v4035
          %v4299 = vunpack.c.l.b16 %v4036
          %v4300 = vunpack.c.l.b16 %v4037
          %v4301 = vunpack.c.l.b16 %v4038
          %v4302 = vunpack.c.l.b16 %v4039
          %v4303 = vunpack.c.l.b16 %v4040
          %v4304 = vunpack.c.l.b16 %v4041
          %v4305 = vunpack.c.l.b16 %v4042
          %v4306 = vunpack.c.l.b16 %v4043
          %v4307 = vunpack.c.l.b16 %v4044
          %v4308 = vunpack.c.l.b16 %v4045
          %v4309 = vunpack.c.l.b16 %v4046
          %v4310 = vunpack.c.l.b16 %v4047
          %v4311 = vunpack.c.l.b16 %v4048
          %v4312 = vunpack.c.l.b16 %v4049
          %v4313 = vunpack.c.l.b16 %v4050
          %v4314 = vunpack.c.l.b16 %v4051
          %v4315 = vunpack.c.l.b16 %v4052
          %v4316 = vunpack.c.l.b16 %v4053
          %v4317 = vunpack.c.l.b16 %v4054
          %v4318 = vunpack.c.l.b16 %v4055
          %v4319 = vunpack.c.l.b16 %v4056
          %v4320 = vunpack.c.l.b16 %v4057
          %v4321 = vunpack.c.l.b16 %v4058
          %v4322 = vunpack.c.l.b16 %v4059
          %v4323 = vunpack.c.l.b16 %v4060
          %v4324 = vunpack.c.l.b16 %v4061
          %v4325 = vunpack.c.l.b16 %v4062
          %v4326 = vunpack.c.l.b16 %v4063
          %v4327 = vunpack.c.l.b16 %v4064
          %v4328 = vunpack.c.l.b16 %v4065
          %v4329 = vunpack.c.l.b16 %v4066
          %v4330 = vunpack.c.l.b16 %v4067
          %v4331 = vunpack.c.l.b16 %v4068
          %v4332 = vunpack.c.l.b16 %v4069
          %v4333 = vunpack.c.l.b16 %v4070
          %v4334 = vunpack.c.l.b16 %v4071
          %v4335 = vunpack.c.l.b16 %v4072
          %v4336 = vunpack.c.l.b16 %v4073
          %v4337 = vunpack.c.l.b16 %v4074
          %v4338 = vunpack.c.l.b16 %v4075
          %v4339 = vunpack.c.l.b16 %v4076
          %v4340 = vunpack.c.l.b16 %v4077
          %v4341 = vunpack.c.l.b16 %v4078
          %v4342 = vunpack.c.l.b16 %v4079
          %v4343 = vunpack.c.l.b16 %v4080
          %v4344 = vunpack.c.l.b16 %v4081
          %v4345 = vunpack.c.l.b16 %v4082
          %v4346 = vunpack.c.l.b16 %v4083
          %v4347 = vunpack.c.l.b16 %v4084
          %v4348 = vunpack.c.l.b16 %v4085
          %v4349 = vunpack.c.l.b16 %v4086
          %v4350 = vunpack.c.l.b16 %v4087
          %v4351 = vunpack.c.l.b16 %v4088
          %v4352 = vunpack.c.l.b16 %v4089
          %v4353 = vpack.c.b16 %v4226, %v4225
          %v4354 = vpack.c.b16 %v4228, %v4227
          %v4355 = vpack.c.b16 %v4230, %v4229
          %v4356 = vpack.c.b16 %v4232, %v4231
          %v4357 = vpack.c.b16 %v4234, %v4233
          %v4358 = vpack.c.b16 %v4236, %v4235
          %v4359 = vpack.c.b16 %v4238, %v4237
          %v4360 = vpack.c.b16 %v4240, %v4239
          %v4361 = vpack.c.b16 %v4242, %v4241
          %v4362 = vpack.c.b16 %v4244, %v4243
          %v4363 = vpack.c.b16 %v4246, %v4245
          %v4364 = vpack.c.b16 %v4248, %v4247
          %v4365 = vpack.c.b16 %v4250, %v4249
          %v4366 = vpack.c.b16 %v4252, %v4251
          %v4367 = vpack.c.b16 %v4254, %v4253
          %v4368 = vpack.c.b16 %v4256, %v4255
          %v4369 = vpack.c.b16 %v4258, %v4257
          %v4370 = vpack.c.b16 %v4260, %v4259
          %v4371 = vpack.c.b16 %v4262, %v4261
          %v4372 = vpack.c.b16 %v4264, %v4263
          %v4373 = vpack.c.b16 %v4266, %v4265
          %v4374 = vpack.c.b16 %v4268, %v4267
          %v4375 = vpack.c.b16 %v4270, %v4269
          %v4376 = vpack.c.b16 %v4272, %v4271
          %v4377 = vpack.c.b16 %v4274, %v4273
          %v4378 = vpack.c.b16 %v4276, %v4275
          %v4379 = vpack.c.b16 %v4278, %v4277
          %v4380 = vpack.c.b16 %v4280, %v4279
          %v4381 = vpack.c.b16 %v4282, %v4281
          %v4382 = vpack.c.b16 %v4284, %v4283
          %v4383 = vpack.c.b16 %v4286, %v4285
          %v4384 = vpack.c.b16 %v4288, %v4287
          %v4385 = vpack.c.b16 %v4290, %v4289
          %v4386 = vpack.c.b16 %v4292, %v4291
          %v4387 = vpack.c.b16 %v4294, %v4293
          %v4388 = vpack.c.b16 %v4296, %v4295
          %v4389 = vpack.c.b16 %v4298, %v4297
          %v4390 = vpack.c.b16 %v4300, %v4299
          %v4391 = vpack.c.b16 %v4302, %v4301
          %v4392 = vpack.c.b16 %v4304, %v4303
          %v4393 = vpack.c.b16 %v4306, %v4305
          %v4394 = vpack.c.b16 %v4308, %v4307
          %v4395 = vpack.c.b16 %v4310, %v4309
          %v4396 = vpack.c.b16 %v4312, %v4311
          %v4397 = vpack.c.b16 %v4314, %v4313
          %v4398 = vpack.c.b16 %v4316, %v4315
          %v4399 = vpack.c.b16 %v4318, %v4317
          %v4400 = vpack.c.b16 %v4320, %v4319
          %v4401 = vpack.c.b16 %v4322, %v4321
          %v4402 = vpack.c.b16 %v4324, %v4323
          %v4403 = vpack.c.b16 %v4326, %v4325
          %v4404 = vpack.c.b16 %v4328, %v4327
          %v4405 = vpack.c.b16 %v4330, %v4329
          %v4406 = vpack.c.b16 %v4332, %v4331
          %v4407 = vpack.c.b16 %v4334, %v4333
          %v4408 = vpack.c.b16 %v4336, %v4335
          %v4409 = vpack.c.b16 %v4338, %v4337
          %v4410 = vpack.c.b16 %v4340, %v4339
          %v4411 = vpack.c.b16 %v4342, %v4341
          %v4412 = vpack.c.b16 %v4344, %v4343
          %v4413 = vpack.c.b16 %v4346, %v4345
          %v4414 = vpack.c.b16 %v4348, %v4347
          %v4415 = vpack.c.b16 %v4350, %v4349
          %v4416 = vpack.c.b16 %v4352, %v4351
          %4481 = vmatprep.subr.bf16.mxu0 0
          %4482 = vmatpush1.bf16.msra.mxu0 %v4360
          %4483 = vmatprep.subr.bf16.mxu0 0
          %4484 = vmatpush1.bf16.msra.mxu0 %v4359
          %4485 = vmatprep.subr.bf16.mxu0 0
          %4486 = vmatpush1.bf16.msra.mxu0 %v4358
          %4487 = vmatprep.subr.bf16.mxu0 0
          %4488 = vmatpush1.bf16.msra.mxu0 %v4357
          %4489 = vmatprep.subr.bf16.mxu0 0
          %4490 = vmatpush1.bf16.msra.mxu0 %v4356
          %4491 = vmatprep.subr.bf16.mxu0 0
          %4492 = vmatpush1.bf16.msra.mxu0 %v4355
          %4493 = vmatprep.subr.bf16.mxu0 0
          %4494 = vmatpush1.bf16.msra.mxu0 %v4354
          %4495 = vmatprep.subr.bf16.mxu0 0
          %4496 = vmatpush1.bf16.msra.mxu0 %v4353
          %4497 = vmatprep.subr.bf16.mxu0 0
          %4498 = vmatpush2.bf16.msra.mxu0 %v4368
          %4499 = vmatprep.subr.bf16.mxu0 0
          %4500 = vmatpush2.bf16.msra.mxu0 %v4367
          %4501 = vmatprep.subr.bf16.mxu0 0
          %4502 = vmatpush2.bf16.msra.mxu0 %v4366
          %4503 = vmatprep.subr.bf16.mxu0 0
          %4504 = vmatpush2.bf16.msra.mxu0 %v4365
          %4505 = vmatprep.subr.bf16.mxu0 0
          %4506 = vmatpush2.bf16.msra.mxu0 %v4364
          %4507 = vmatprep.subr.bf16.mxu0 0
          %4508 = vmatpush2.bf16.msra.mxu0 %v4363
          %4509 = vmatprep.subr.bf16.mxu0 0
          %4510 = vmatpush2.bf16.msra.mxu0 %v4362
          %4511 = vmatprep.subr.bf16.mxu0 0
          %4512 = vmatpush2.bf16.msra.mxu0 %v4361
          %4513 = vmatprep.mubr.bf16.mxu0 %v3955
          %4514 = vmatmul.mubr.bf16.gmra.mxu0 %v3954
          %v4515 = vpop.f32.mrf.mxu0
          %v4516 = vadd.f32 %v4095, %v4515
          %v4517 = vpop.f32.mrf.mxu0
          %v4518 = vpop.f32.mrf.mxu0
          %v4519 = vpop.f32.mrf.mxu0
          %4520 = vdwg.mxu0
          %4521 = vmatprep.subr.bf16.mxu0 0
          %4522 = vmatpush1.bf16.msra.mxu0 %v4376
          %4523 = vmatprep.subr.bf16.mxu0 0
          %4524 = vmatpush1.bf16.msra.mxu0 %v4375
          %4525 = vmatprep.subr.bf16.mxu0 0
          %4526 = vmatpush1.bf16.msra.mxu0 %v4374
          %4527 = vmatprep.subr.bf16.mxu0 0
          %4528 = vmatpush1.bf16.msra.mxu0 %v4373
          %4529 = vmatprep.subr.bf16.mxu0 0
          %4530 = vmatpush1.bf16.msra.mxu0 %v4372
          %4531 = vmatprep.subr.bf16.mxu0 0
          %4532 = vmatpush1.bf16.msra.mxu0 %v4371
          %4533 = vmatprep.subr.bf16.mxu0 0
          %4534 = vmatpush1.bf16.msra.mxu0 %v4370
          %4535 = vmatprep.subr.bf16.mxu0 0
          %4536 = vmatpush1.bf16.msra.mxu0 %v4369
          %4537 = vmatprep.subr.bf16.mxu0 0
          %4538 = vmatpush2.bf16.msra.mxu0 %v4384
          %4539 = vmatprep.subr.bf16.mxu0 0
          %4540 = vmatpush2.bf16.msra.mxu0 %v4383
          %4541 = vmatprep.subr.bf16.mxu0 0
          %4542 = vmatpush2.bf16.msra.mxu0 %v4382
          %4543 = vmatprep.subr.bf16.mxu0 0
          %4544 = vmatpush2.bf16.msra.mxu0 %v4381
          %4545 = vmatprep.subr.bf16.mxu0 0
          %4546 = vmatpush2.bf16.msra.mxu0 %v4380
          %4547 = vmatprep.subr.bf16.mxu0 0
          %4548 = vmatpush2.bf16.msra.mxu0 %v4379
          %4549 = vmatprep.subr.bf16.mxu0 0
          %4550 = vmatpush2.bf16.msra.mxu0 %v4378
          %4551 = vmatprep.subr.bf16.mxu0 0
          %4552 = vmatpush2.bf16.msra.mxu0 %v4377
          %4553 = vmatprep.mubr.bf16.mxu0 %v3957
          %4554 = vmatmul.mubr.bf16.gmra.mxu0 %v3956
          %v4555 = vpop.f32.mrf.mxu0
          %v4556 = vadd.f32 %v4516, %v4555
          %v4557 = vpop.f32.mrf.mxu0
          %v4558 = vpop.f32.mrf.mxu0
          %v4559 = vpop.f32.mrf.mxu0
          %4560 = vdwg.mxu0
          %4561 = vmatprep.subr.bf16.mxu0 0
          %4562 = vmatpush1.bf16.msra.mxu0 %v4392
          %4563 = vmatprep.subr.bf16.mxu0 0
          %4564 = vmatpush1.bf16.msra.mxu0 %v4391
          %4565 = vmatprep.subr.bf16.mxu0 0
          %4566 = vmatpush1.bf16.msra.mxu0 %v4390
          %4567 = vmatprep.subr.bf16.mxu0 0
          %4568 = vmatpush1.bf16.msra.mxu0 %v4389
          %4569 = vmatprep.subr.bf16.mxu0 0
          %4570 = vmatpush1.bf16.msra.mxu0 %v4388
          %4571 = vmatprep.subr.bf16.mxu0 0
          %4572 = vmatpush1.bf16.msra.mxu0 %v4387
          %4573 = vmatprep.subr.bf16.mxu0 0
          %4574 = vmatpush1.bf16.msra.mxu0 %v4386
          %4575 = vmatprep.subr.bf16.mxu0 0
          %4576 = vmatpush1.bf16.msra.mxu0 %v4385
          %4577 = vmatprep.subr.bf16.mxu0 0
          %4578 = vmatpush2.bf16.msra.mxu0 %v4400
          %4579 = vmatprep.subr.bf16.mxu0 0
          %4580 = vmatpush2.bf16.msra.mxu0 %v4399
          %4581 = vmatprep.subr.bf16.mxu0 0
          %4582 = vmatpush2.bf16.msra.mxu0 %v4398
          %4583 = vmatprep.subr.bf16.mxu0 0
          %4584 = vmatpush2.bf16.msra.mxu0 %v4397
          %4585 = vmatprep.subr.bf16.mxu0 0
          %4586 = vmatpush2.bf16.msra.mxu0 %v4396
          %4587 = vmatprep.subr.bf16.mxu0 0
          %4588 = vmatpush2.bf16.msra.mxu0 %v4395
          %4589 = vmatprep.subr.bf16.mxu0 0
          %4590 = vmatpush2.bf16.msra.mxu0 %v4394
          %4591 = vmatprep.subr.bf16.mxu0 0
          %4592 = vmatpush2.bf16.msra.mxu0 %v4393
          %4593 = vmatprep.mubr.bf16.mxu0 %v3959
          %4594 = vmatmul.mubr.bf16.gmra.mxu0 %v3958
          %v4595 = vpop.f32.mrf.mxu0
          %v4596 = vadd.f32 %v4556, %v4595
          %v4597 = vpop.f32.mrf.mxu0
          %v4598 = vpop.f32.mrf.mxu0
          %v4599 = vpop.f32.mrf.mxu0
          %4600 = vdwg.mxu0
          %4601 = vmatprep.subr.bf16.mxu0 0
          %4602 = vmatpush1.bf16.msra.mxu0 %v4408
          %4603 = vmatprep.subr.bf16.mxu0 0
          %4604 = vmatpush1.bf16.msra.mxu0 %v4407
          %4605 = vmatprep.subr.bf16.mxu0 0
          %4606 = vmatpush1.bf16.msra.mxu0 %v4406
          %4607 = vmatprep.subr.bf16.mxu0 0
          %4608 = vmatpush1.bf16.msra.mxu0 %v4405
          %4609 = vmatprep.subr.bf16.mxu0 0
          %4610 = vmatpush1.bf16.msra.mxu0 %v4404
          %4611 = vmatprep.subr.bf16.mxu0 0
          %4612 = vmatpush1.bf16.msra.mxu0 %v4403
          %4613 = vmatprep.subr.bf16.mxu0 0
          %4614 = vmatpush1.bf16.msra.mxu0 %v4402
          %4615 = vmatprep.subr.bf16.mxu0 0
          %4616 = vmatpush1.bf16.msra.mxu0 %v4401
          %4617 = vmatprep.subr.bf16.mxu0 0
          %4618 = vmatpush2.bf16.msra.mxu0 %v4416
          %4619 = vmatprep.subr.bf16.mxu0 0
          %4620 = vmatpush2.bf16.msra.mxu0 %v4415
          %4621 = vmatprep.subr.bf16.mxu0 0
          %4622 = vmatpush2.bf16.msra.mxu0 %v4414
          %4623 = vmatprep.subr.bf16.mxu0 0
          %4624 = vmatpush2.bf16.msra.mxu0 %v4413
          %4625 = vmatprep.subr.bf16.mxu0 0
          %4626 = vmatpush2.bf16.msra.mxu0 %v4412
          %4627 = vmatprep.subr.bf16.mxu0 0
          %4628 = vmatpush2.bf16.msra.mxu0 %v4411
          %4629 = vmatprep.subr.bf16.mxu0 0
          %4630 = vmatpush2.bf16.msra.mxu0 %v4410
          %4631 = vmatprep.subr.bf16.mxu0 0
          %4632 = vmatpush2.bf16.msra.mxu0 %v4409
          %4633 = vmatprep.mubr.bf16.mxu0 %v3961
          %4634 = vmatmul.mubr.bf16.gmra.mxu0 %v3960
          %v4635 = vpop.f32.mrf.mxu0
          %v4636 = vadd.f32 %v4596, %v4635
          %v4637 = vpop.f32.mrf.mxu0
          %v4638 = vpop.f32.mrf.mxu0
          %v4639 = vpop.f32.mrf.mxu0
          %4640 = vdwg.mxu0
          %v4641 = vmax.f32 %v4636, 0.0
          %v4642 = vpack.c.bf16 %v4641, %v4641
          %v4643 = vld [vmem:[#allocation10] sm:$0xf]
          %v4644 = vld [vmem:[#allocation10 + $0x4] sm:$0xf]
          %v4645 = vld [vmem:[#allocation10 + $0x8] sm:$0xf]
          %v4646 = vld [vmem:[#allocation10 + $0xc] sm:$0xf]
          %v4647 = vld [vmem:[#allocation10 + $0x10] sm:$0xf]
          %v4648 = vld [vmem:[#allocation10 + $0x14] sm:$0xf]
          %v4649 = vld [vmem:[#allocation10 + $0x18] sm:$0xf]
          %v4650 = vld [vmem:[#allocation10 + $0x1c] sm:$0xf]
          %v4651 = vld [vmem:[#allocation10 + $0x20] sm:$0xf]
          %v4652 = vld [vmem:[#allocation10 + $0x24] sm:$0xf]
          %v4653 = vld [vmem:[#allocation10 + $0x28] sm:$0xf]
          %v4654 = vld [vmem:[#allocation10 + $0x2c] sm:$0xf]
          %v4655 = vld [vmem:[#allocation10 + $0x30] sm:$0xf]
          %v4656 = vld [vmem:[#allocation10 + $0x34] sm:$0xf]
          %v4657 = vld [vmem:[#allocation10 + $0x38] sm:$0xf]
          %v4658 = vld [vmem:[#allocation10 + $0x3c] sm:$0xf]
          %v4659 = vld [vmem:[#allocation11] sm:$0x1]
          %v4661 = vlaneseq
          %v4662 = vshrl.u32 %v4661, 7
          %v4663 = vsub.s32 0, %v4662
          %v4664 = vrot.slane %v4659, %v4663
          %v4682 = vunpack.c.l.b16 %v4643
          %v4683 = vunpack.c.l.b16 %v4644
          %v4684 = vunpack.c.l.b16 %v4645
          %v4685 = vunpack.c.l.b16 %v4646
          %v4686 = vunpack.c.l.b16 %v4647
          %v4687 = vunpack.c.l.b16 %v4648
          %v4688 = vunpack.c.l.b16 %v4649
          %v4689 = vunpack.c.l.b16 %v4650
          %v4690 = vunpack.c.l.b16 %v4651
          %v4691 = vunpack.c.l.b16 %v4652
          %v4692 = vunpack.c.l.b16 %v4653
          %v4693 = vunpack.c.l.b16 %v4654
          %v4694 = vunpack.c.l.b16 %v4655
          %v4695 = vunpack.c.l.b16 %v4656
          %v4696 = vunpack.c.l.b16 %v4657
          %v4697 = vunpack.c.l.b16 %v4658
          %v4698 = vpack.c.b16 %v4683, %v4682
          %v4699 = vpack.c.b16 %v4685, %v4684
          %v4700 = vpack.c.b16 %v4687, %v4686
          %v4701 = vpack.c.b16 %v4689, %v4688
          %v4702 = vpack.c.b16 %v4691, %v4690
          %v4703 = vpack.c.b16 %v4693, %v4692
          %v4704 = vpack.c.b16 %v4695, %v4694
          %v4705 = vpack.c.b16 %v4697, %v4696
          %4714 = vmatprep.subr.bf16.mxu0 0
          %4715 = vmatpush1.bf16.msra.mxu0 %v4705
          %4716 = vmatprep.subr.bf16.mxu0 0
          %4717 = vmatpush1.bf16.msra.mxu0 %v4704
          %4718 = vmatprep.subr.bf16.mxu0 0
          %4719 = vmatpush1.bf16.msra.mxu0 %v4703
          %4720 = vmatprep.subr.bf16.mxu0 0
          %4721 = vmatpush1.bf16.msra.mxu0 %v4702
          %4722 = vmatprep.subr.bf16.mxu0 0
          %4723 = vmatpush1.bf16.msra.mxu0 %v4701
          %4724 = vmatprep.subr.bf16.mxu0 0
          %4725 = vmatpush1.bf16.msra.mxu0 %v4700
          %4726 = vmatprep.subr.bf16.mxu0 0
          %4727 = vmatpush1.bf16.msra.mxu0 %v4699
          %4728 = vmatprep.subr.bf16.mxu0 0
          %4729 = vmatpush1.bf16.msra.mxu0 %v4698
          %4730 = vmatprep.subr.bf16.mxu0 0
          %4731 = vmatpush2.bf16.msra.mxu0 0
          %4732 = vmatprep.subr.bf16.mxu0 0
          %4733 = vmatpush2.bf16.msra.mxu0 0
          %4734 = vmatprep.subr.bf16.mxu0 0
          %4735 = vmatpush2.bf16.msra.mxu0 0
          %4736 = vmatprep.subr.bf16.mxu0 0
          %4737 = vmatpush2.bf16.msra.mxu0 0
          %4738 = vmatprep.subr.bf16.mxu0 0
          %4739 = vmatpush2.bf16.msra.mxu0 0
          %4740 = vmatprep.subr.bf16.mxu0 0
          %4741 = vmatpush2.bf16.msra.mxu0 0
          %4742 = vmatprep.subr.bf16.mxu0 0
          %4743 = vmatpush2.bf16.msra.mxu0 0
          %4744 = vmatprep.subr.bf16.mxu0 0
          %4745 = vmatpush2.bf16.msra.mxu0 0
          %4746 = vmatprep.mubr.bf16.mxu0 0
          %4747 = vmatmul.mubr.bf16.gmra.mxu0 %v4642
          %v4748 = vpop.f32.mrf.mxu0
          %v4749 = vadd.f32 %v4664, %v4748
          %v4750 = vpop.f32.mrf.mxu0
          %v4751 = vpop.f32.mrf.mxu0
          %v4752 = vpop.f32.mrf.mxu0
          %4753 = vdwg.mxu0
          %4754 = vst [vmem:[%s7] sm:$0x3] %v4749
        $region80: #{featurespace_classifier_forward.1} parent=47 // pred_fallthru
          _
        // Predicated region
        $region81: #{featurespace_classifier_forward.1} parent=47 // pred_check
          %p4755 = pneg %p194
        $region82: #{featurespace_classifier_forward.1} parent=47 // pred_check_branch
          %4757 = sbr.rel (%p4755) target = $region84
        $region83: #{featurespace_classifier_forward.1} parent=47 // pred_region
          _
        $region84: #{featurespace_classifier_forward.1} parent=47 // pred_fallthru
          _
        // Predicated region
        $region85: #{featurespace_classifier_forward.1} parent=47 // pred_check
          %p4758 = pneg %p194
        $region86: #{featurespace_classifier_forward.1} parent=47 // pred_check_branch
          %4760 = sbr.rel (%p4758) target = $region88
        $region87: #{featurespace_classifier_forward.1} parent=47 // pred_region
          _
        $region88: #{featurespace_classifier_forward.1} parent=47 // pred_fallthru
          _
      $region48: #{featurespace_classifier_forward.1} parent=5 // pred_fallthru
        _
      %p4761 = scmp.le.s32.totalorder 2, %s19
      // Predicated region
      $region89: #{featurespace_classifier_forward.1} parent=5 // pred_check
        %p4762 = pneg %p4761
      $region90: #{featurespace_classifier_forward.1} parent=5 // pred_check_branch
        %4764 = sbr.rel (%p4762) target = $region92
      $region91: #{featurespace_classifier_forward.1} parent=5 // pred_region
        %s4765 = ssub.s32 %s19, 2
      $region92: #{featurespace_classifier_forward.1} parent=5 // pred_fallthru
        _
    $region6: #{featurespace_classifier_forward.1} parent=1 // loop_footer
      %s23 = sadd.s32 1, %s19
    $region7: #{featurespace_classifier_forward.1} parent=1 // loop_footer_branch
      %18 = sbr.rel target = $region3
    $region8: #{featurespace_classifier_forward.1} parent=1 // loop_exit
      _
    %4766 = vsyncpa [#allocation4], 1
    %s4767 = scalar_lea.sflag [#allocation4], 1
    %4768 = vsyncpa %s4767, 1
    %4769 = vsyncpa [#allocation6], 1
    %4770 = vsyncpa [#allocation9], 1
    %4771 = vsyncpa [#allocation12], 1

</llo_original>
